<compile_context>
chip_gen: v5e
topology: v5e:2x2
jax: 0.10.0
libtpu: 0.0.40
codegen_flags: <defaults>
</compile_context>

<pallas_src>
import math
from functools import partial

import jax
import jax.numpy as jnp
from jax.experimental import pallas as pl
from jax.experimental.pallas import tpu as pltpu


# ------------------------------------------------------------------
# Kernels
# ------------------------------------------------------------------

def _fused_win_cross_kernel(q_ref, kv_ref, wq_ref, wk_ref, wv_ref,
                            wcomb_ref, ones_ref, o_ref, *,
                            n_inner_q, n_inner_k, n_win, scale):
    """Windowed cross attention, fully fused, one batch element per grid step.

    q_ref : (Sq*n_win, C)  q tokens, inner-position-major window order
    kv_ref: (Sk*n_win, C)  kv tokens, inner-position-major window order
    wq/wk/wv_ref: (C, C)   projection weights (transposed, x @ W)
    wcomb_ref: (Sq*C, nh*C) fc weight fused with the output scramble
    ones_ref : (C, C)      block-diagonal ones -> per-head segmented lane sum
    o_ref   : (n_win, nh*C) lane-dense output
    """
    C = q_ref.shape[-1]

    # Token projections (q_map / kv_map split into K and V halves).
    qp = jnp.dot(q_ref[...], wq_ref[...], preferred_element_type=jnp.float32)
    kp = jnp.dot(kv_ref[...], wk_ref[...], preferred_element_type=jnp.float32)
    vp = jnp.dot(kv_ref[...], wv_ref[...], preferred_element_type=jnp.float32)

    ones_bd = ones_ref[...]
    wcomb = wcomb_ref[...]

    # Static, 8-sublane-aligned slices: one (n_win, C) slab per inner position.
    k_s = [kp[j * n_win:(j + 1) * n_win, :] for j in range(n_inner_k)]
    v_s = [vp[j * n_win:(j + 1) * n_win, :] for j in range(n_inner_k)]

    acc = jnp.zeros((n_win, wcomb.shape[-1]), jnp.float32)
    for i in range(n_inner_q):
        q_i = qp[i * n_win:(i + 1) * n_win, :]
        # Per-head scores, replicated across each head's head_dim lanes:
        #   s_j[w, h*hd + d'] = scale * sum_d q_i[w, h*hd+d] * k_j[w, h*hd+d]
        s = [jnp.dot(q_i * k_s[j], ones_bd,
                     preferred_element_type=jnp.float32) * scale
             for j in range(n_inner_k)]
        m = s[0]
        for j in range(1, n_inner_k):
            m = jnp.maximum(m, s[j])
        e = [jnp.exp(s[j] - m) for j in range(n_inner_k)]
        denom = e[0]
        for j in range(1, n_inner_k):
            denom = denom + e[j]
        inv = pl.reciprocal(denom, approx=True)
        o_i = (e[0] * inv) * v_s[0]
        for j in range(1, n_inner_k):
            o_i = o_i + (e[j] * inv) * v_s[j]
        # o_i[w, h*hd+d] == A[w, h, i, d].  Wcomb row-block i applies fc and the
        # literal PyTorch output scramble in one (n_win,C)@(C,nh*C) matmul.
        acc = acc + jnp.dot(o_i, wcomb[i * C:(i + 1) * C, :],
                            preferred_element_type=jnp.float32)
    o_ref[...] = acc.astype(o_ref.dtype)


def _global_cross_kernel(q_ref, kv_ref, wq_ref, wk_ref, wv_ref, wfc_ref, o_ref,
                         *, num_heads, scale):
    """group == 0 fallback: plain multi-head cross attention (one batch/step)."""
    C = q_ref.shape[-1]
    hd = C // num_heads
    qp = jnp.dot(q_ref[...], wq_ref[...], preferred_element_type=jnp.float32)
    kp = jnp.dot(kv_ref[...], wk_ref[...], preferred_element_type=jnp.float32)
    vp = jnp.dot(kv_ref[...], wv_ref[...], preferred_element_type=jnp.float32)
    heads = []
    for h in range(num_heads):
        qh = qp[:, h * hd:(h + 1) * hd]
        kh = kp[:, h * hd:(h + 1) * hd]
        vh = vp[:, h * hd:(h + 1) * hd]
        s = jax.lax.dot_general(qh, kh, (((1,), (1,)), ((), ())),
                                preferred_element_type=jnp.float32) * scale
        s = s - jnp.max(s, axis=-1, keepdims=True)
        p = jnp.exp(s)
        p = p * pl.reciprocal(jnp.sum(p, axis=-1, keepdims=True), approx=True)
        heads.append(jnp.dot(p, vh, preferred_element_type=jnp.float32))
    o = jnp.concatenate(heads, axis=-1)
    o_ref[...] = jnp.dot(o, wfc_ref[...],
                         preferred_element_type=jnp.float32).astype(o_ref.dtype)


# ------------------------------------------------------------------
# Wrapper
# ------------------------------------------------------------------

def window_attention_cross(q_tok, kv_tok, Wq_t, Wkv_t, Wfc_t, *, num_heads, ws):
    """Forward of WindowAttentionCross. Weights are transposed (x @ W_t)."""
    B, Lq, C = q_tok.shape
    Lk = kv_tok.shape[1]
    hd = C // num_heads
    scale = hd ** (-0.5)
    group = 0 if (math.sqrt(Lq) < ws or math.sqrt(Lk) < ws) else ws
    Wk_t, Wv_t = Wkv_t[:, :C], Wkv_t[:, C:]

    if group == 0:
        return pl.pallas_call(
            partial(_global_cross_kernel, num_heads=num_heads, scale=scale),
            out_shape=jax.ShapeDtypeStruct((B, Lq, C), jnp.float32),
            grid=(B,),
            in_specs=[
                pl.BlockSpec((None, Lq, C), lambda b: (b, 0, 0)),
                pl.BlockSpec((None, Lk, C), lambda b: (b, 0, 0)),
                pl.BlockSpec((C, C), lambda b: (0, 0)),
                pl.BlockSpec((C, C), lambda b: (0, 0)),
                pl.BlockSpec((C, C), lambda b: (0, 0)),
                pl.BlockSpec((C, C), lambda b: (0, 0)),
            ],
            out_specs=pl.BlockSpec((None, Lq, C), lambda b: (b, 0, 0)),
            compiler_params=pltpu.CompilerParams(
                dimension_semantics=("parallel",)),
        )(q_tok, kv_tok, Wq_t, Wk_t, Wv_t, Wfc_t)

    hw_q, hw_k = int(math.isqrt(Lq)), int(math.isqrt(Lk))
    qg, kg = hw_q // group, hw_k // group
    Sq, Sk = qg * qg, kg * kg
    n_win = group * group

    if not (Sq * hd == C and group % Sq == 0
            and group % qg == 0 and group % kg == 0):
        # TODO(synk): general windowed configs (q_group**2 != num_heads) need the
        # literal reshape/transpose mirror instead of the fused Wcomb scramble.
        raise NotImplementedError("unsupported windowed configuration")

    # Constant matrices built on the host (trace time), held in VMEM by Pallas.
    ones_bd = jnp.kron(jnp.eye(num_heads, dtype=jnp.float32),
                       jnp.ones((hd, hd), jnp.float32))
    # Wcomb[i*C + hh*hd + d, h*C + c'] = (hh == h) * Wfc_t[i*hd + d, c']
    wcomb = jnp.einsum('Hh,idc->iHdhc',
                       jnp.eye(num_heads, dtype=jnp.float32),
                       Wfc_t.reshape(Sq, hd, C)).reshape(Sq * C, num_heads * C)

    def inner_major(x, sub):
        # token order (gr, ir, gc, ic) -> row = (ir*sub+ic)*group^2 + gr*group+gc
        L = x.shape[1]
        x = x.reshape(B, group, sub, group, sub, C)
        x = x.transpose(0, 2, 4, 1, 3, 5)
        return x.reshape(B, L, C)

    q_perm = inner_major(q_tok, qg)
    kv_perm = inner_major(kv_tok, kg)

    z = pl.pallas_call(
        partial(_fused_win_cross_kernel, n_inner_q=Sq, n_inner_k=Sk,
                n_win=n_win, scale=scale),
        out_shape=jax.ShapeDtypeStruct((B, n_win, num_heads * C), jnp.float32),
        grid=(B,),
        in_specs=[
            pl.BlockSpec((None, Lq, C), lambda b: (b, 0, 0)),
            pl.BlockSpec((None, Lk, C), lambda b: (b, 0, 0)),
            pl.BlockSpec((C, C), lambda b: (0, 0)),
            pl.BlockSpec((C, C), lambda b: (0, 0)),
            pl.BlockSpec((C, C), lambda b: (0, 0)),
            pl.BlockSpec((Sq * C, num_heads * C), lambda b: (0, 0)),
            pl.BlockSpec((C, C), lambda b: (0, 0)),
        ],
        out_specs=pl.BlockSpec((None, n_win, num_heads * C),
                               lambda b: (b, 0, 0)),
        compiler_params=pltpu.CompilerParams(
            dimension_semantics=("parallel",)),
    )(q_perm, kv_perm, Wq_t, Wk_t, Wv_t, wcomb, ones_bd)

    # Undo the literal PyTorch `(attn@v).transpose(1,2)` output scramble:
    # out[b, tt, c'] = z[b, w, h*C + c'] with
    #   w  = W_hi*(Sq*group) + W_mid*Sq + q1*qg + q0
    #   tt = h*group^2 + W_hi*Sq*group + q1*group*qg + W_mid*qg + q0
    z = z.reshape(B, group // Sq, group, qg, qg, num_heads, C)
    z = z.transpose(0, 5, 1, 3, 2, 4, 6)
    return z.reshape(B, Lq, C)


# ------------------------------------------------------------------
# Pure-JAX literal transcription of the PyTorch module (reference check)
# ------------------------------------------------------------------

def reference_forward(q_tok, kv_tok, Wq_t, Wkv_t, Wfc_t, *, num_heads, ws):
    HI = jax.lax.Precision.HIGHEST
    B, Lq, C = q_tok.shape
    Lk = kv_tok.shape[1]
    hd = C // num_heads
    scale = hd ** (-0.5)
    group = 0 if (math.sqrt(Lq) < ws or math.sqrt(Lk) < ws) else ws

    qp = jnp.einsum('blc,cd->bld', q_tok, Wq_t, precision=HI)
    kvp = jnp.einsum('blc,cd->bld', kv_tok, Wkv_t, precision=HI)
    kvp = kvp.reshape(B, Lk, 2, C).transpose(2, 0, 1, 3)
    k, v = kvp[0], kvp[1]

    if group > 0:
        qg = int(math.isqrt(Lq)) // group
        kg = int(math.isqrt(Lk)) // group
        G2 = group * group

        def win(x, sub):
            x = x.reshape(B, group, sub, group, sub, C).transpose(0, 1, 3, 2, 4, 5)
            x = x.reshape(B, G2, sub * sub, num_heads, hd).transpose(0, 1, 3, 2, 4)
            return x

        qw, kw, vw = win(qp, qg), win(k, kg), win(v, kg)
        attn = jnp.einsum('bwhqd,bwhkd->bwhqk', qw, kw, precision=HI) * scale
        attn = jax.nn.softmax(attn, axis=-1)
        o = jnp.einsum('bwhqk,bwhkd->bwhqd', attn, vw, precision=HI)
        o = o.transpose(0, 2, 1, 3, 4)                       # torch .transpose(1, 2)
        o = o.reshape(B, group, group, qg, qg, C)
        o = o.transpose(0, 1, 3, 2, 4, 5).reshape(B, Lq, C)  # torch .transpose(2, 3)
    else:
        qw = qp.reshape(B, Lq, num_heads, hd).transpose(0, 2, 1, 3)
        kw = k.reshape(B, Lk, num_heads, hd).transpose(0, 2, 1, 3)
        vw = v.reshape(B, Lk, num_heads, hd).transpose(0, 2, 1, 3)
        attn = jnp.einsum('bhqd,bhkd->bhqk', qw, kw, precision=HI) * scale
        attn = jax.nn.softmax(attn, axis=-1)
        o = jnp.einsum('bhqk,bhkd->bhqd', attn, vw, precision=HI)
        o = o.transpose(0, 2, 1, 3).reshape(B, Lq, C)
    return jnp.einsum('blc,cd->bld', o, Wfc_t, precision=HI)


# ------------------------------------------------------------------
# main
# ------------------------------------------------------------------

if __name__ == "__main__":
    B, d_model, nhead, ws = 2, 32, 4, 8
    Lq = Lk = 256          # 16x16 token maps -> windowed (group = 8) path

    key = jax.random.PRNGKey(0)
    ks = jax.random.split(key, 5)
    q = jax.random.normal(ks[0], (B, Lq, d_model), jnp.float32)
    kv = jax.random.normal(ks[1], (B, Lk, d_model), jnp.float32)
    Wq = 0.05 * jax.random.normal(ks[2], (d_model, d_model), jnp.float32)
    Wkv = 0.05 * jax.random.normal(ks[3], (2 * d_model, d_model), jnp.float32)
    Wfc = 0.05 * jax.random.normal(ks[4], (d_model, d_model), jnp.float32)

    fwd = jax.jit(partial(window_attention_cross, num_heads=nhead, ws=ws))
    out = fwd(q, kv, Wq.T, Wkv.T, Wfc.T)
    out = jax.block_until_ready(out)

    ref = reference_forward(q, kv, Wq.T, Wkv.T, Wfc.T, num_heads=nhead, ws=ws)
    err = float(jnp.max(jnp.abs(out - ref)))

    assert out.shape == (B, Lq, d_model)
    assert err < 2e-2, f"mismatch vs literal PyTorch reference: max abs err {err}"
    print("KERNEL_OK")
</pallas_src>

<mosaic_0001>
module attributes {stable_mosaic.version = 11 : i64} {
  func.func @_fused_win_cross_kernel(%arg0: i32, %arg1: memref<1x256x32xf32, #tpu.memory_space<vmem>>, %arg2: memref<1x256x32xf32, #tpu.memory_space<vmem>>, %arg3: memref<32x32xf32, #tpu.memory_space<vmem>>, %arg4: memref<32x32xf32, #tpu.memory_space<vmem>>, %arg5: memref<32x32xf32, #tpu.memory_space<vmem>>, %arg6: memref<128x128xf32, #tpu.memory_space<vmem>>, %arg7: memref<32x32xf32, #tpu.memory_space<vmem>>, %arg8: memref<1x64x128xf32, #tpu.memory_space<vmem>>) attributes {dimension_semantics = [#tpu.dimension_semantics<parallel>], iteration_bounds = array<i64: 2>, scalar_prefetch = 0 : i64, scratch_operands = 0 : i64, tpu.core_type = #tpu.core_type<tc>, window_params = [{transform_indices = @transform_0, window_bounds = array<i64: 1, 256, 32>}, {transform_indices = @transform_1, window_bounds = array<i64: 1, 256, 32>}, {pipeline_mode = #tpu.pipeline_mode<synchronous>, transform_indices = @transform_2, window_bounds = array<i64: 32, 32>}, {pipeline_mode = #tpu.pipeline_mode<synchronous>, transform_indices = @transform_3, window_bounds = array<i64: 32, 32>}, {pipeline_mode = #tpu.pipeline_mode<synchronous>, transform_indices = @transform_4, window_bounds = array<i64: 32, 32>}, {pipeline_mode = #tpu.pipeline_mode<synchronous>, transform_indices = @transform_5, window_bounds = array<i64: 128, 128>}, {pipeline_mode = #tpu.pipeline_mode<synchronous>, transform_indices = @transform_6, window_bounds = array<i64: 32, 32>}, {transform_indices = @transform_7, window_bounds = array<i64: 1, 64, 128>}]} {
    %c0 = arith.constant 0 : index
    %c0_0 = arith.constant 0 : index
    %c0_1 = arith.constant 0 : index
    %0 = vector.load %arg1[%c0, %c0_0, %c0_1] : memref<1x256x32xf32, #tpu.memory_space<vmem>>, vector<1x256x32xf32>
    %1 = vector.shape_cast %0 : vector<1x256x32xf32> to vector<256x32xf32>
    %c0_2 = arith.constant 0 : index
    %c0_3 = arith.constant 0 : index
    %2 = vector.load %arg3[%c0_2, %c0_3] : memref<32x32xf32, #tpu.memory_space<vmem>>, vector<32x32xf32>
    %cst = arith.constant dense<0.000000e+00> : vector<256x32xf32>
    %3 = tpu.matmul %1, %2, %cst {dimension_numbers = #tpu.dot_dimension_numbers<[1], [0], [0], [1], [0, 0, 1, 1], [], []>} : vector<256x32xf32>, vector<32x32xf32>, vector<256x32xf32> -> vector<256x32xf32>
    %c0_4 = arith.constant 0 : index
    %c0_5 = arith.constant 0 : index
    %c0_6 = arith.constant 0 : index
    %4 = vector.load %arg2[%c0_4, %c0_5, %c0_6] : memref<1x256x32xf32, #tpu.memory_space<vmem>>, vector<1x256x32xf32>
    %5 = vector.shape_cast %4 : vector<1x256x32xf32> to vector<256x32xf32>
    %c0_7 = arith.constant 0 : index
    %c0_8 = arith.constant 0 : index
    %6 = vector.load %arg4[%c0_7, %c0_8] : memref<32x32xf32, #tpu.memory_space<vmem>>, vector<32x32xf32>
    %cst_9 = arith.constant dense<0.000000e+00> : vector<256x32xf32>
    %7 = tpu.matmul %5, %6, %cst_9 {dimension_numbers = #tpu.dot_dimension_numbers<[1], [0], [0], [1], [0, 0, 1, 1], [], []>} : vector<256x32xf32>, vector<32x32xf32>, vector<256x32xf32> -> vector<256x32xf32>
    %c0_10 = arith.constant 0 : index
    %c0_11 = arith.constant 0 : index
    %c0_12 = arith.constant 0 : index
    %8 = vector.load %arg2[%c0_10, %c0_11, %c0_12] : memref<1x256x32xf32, #tpu.memory_space<vmem>>, vector<1x256x32xf32>
    %9 = vector.shape_cast %8 : vector<1x256x32xf32> to vector<256x32xf32>
    %c0_13 = arith.constant 0 : index
    %c0_14 = arith.constant 0 : index
    %10 = vector.load %arg5[%c0_13, %c0_14] : memref<32x32xf32, #tpu.memory_space<vmem>>, vector<32x32xf32>
    %cst_15 = arith.constant dense<0.000000e+00> : vector<256x32xf32>
    %11 = tpu.matmul %9, %10, %cst_15 {dimension_numbers = #tpu.dot_dimension_numbers<[1], [0], [0], [1], [0, 0, 1, 1], [], []>} : vector<256x32xf32>, vector<32x32xf32>, vector<256x32xf32> -> vector<256x32xf32>
    %c0_16 = arith.constant 0 : index
    %c0_17 = arith.constant 0 : index
    %12 = vector.load %arg7[%c0_16, %c0_17] : memref<32x32xf32, #tpu.memory_space<vmem>>, vector<32x32xf32>
    %c0_18 = arith.constant 0 : index
    %c0_19 = arith.constant 0 : index
    %13 = vector.load %arg6[%c0_18, %c0_19] : memref<128x128xf32, #tpu.memory_space<vmem>>, vector<128x128xf32>
    %14 = vector.extract_strided_slice %7 {offsets = [0, 0], sizes = [64, 32], strides = [1, 1]} : vector<256x32xf32> to vector<64x32xf32>
    %15 = vector.extract_strided_slice %7 {offsets = [64, 0], sizes = [64, 32], strides = [1, 1]} : vector<256x32xf32> to vector<64x32xf32>
    %16 = vector.extract_strided_slice %7 {offsets = [128, 0], sizes = [64, 32], strides = [1, 1]} : vector<256x32xf32> to vector<64x32xf32>
    %17 = vector.extract_strided_slice %7 {offsets = [192, 0], sizes = [64, 32], strides = [1, 1]} : vector<256x32xf32> to vector<64x32xf32>
    %18 = vector.extract_strided_slice %11 {offsets = [0, 0], sizes = [64, 32], strides = [1, 1]} : vector<256x32xf32> to vector<64x32xf32>
    %19 = vector.extract_strided_slice %11 {offsets = [64, 0], sizes = [64, 32], strides = [1, 1]} : vector<256x32xf32> to vector<64x32xf32>
    %20 = vector.extract_strided_slice %11 {offsets = [128, 0], sizes = [64, 32], strides = [1, 1]} : vector<256x32xf32> to vector<64x32xf32>
    %21 = vector.extract_strided_slice %11 {offsets = [192, 0], sizes = [64, 32], strides = [1, 1]} : vector<256x32xf32> to vector<64x32xf32>
    %cst_20 = arith.constant 0.000000e+00 : f32
    %22 = vector.broadcast %cst_20 : f32 to vector<64x128xf32>
    %23 = vector.extract_strided_slice %3 {offsets = [0, 0], sizes = [64, 32], strides = [1, 1]} : vector<256x32xf32> to vector<64x32xf32>
    %24 = arith.mulf %23, %14 : vector<64x32xf32>
    %cst_21 = arith.constant dense<0.000000e+00> : vector<64x32xf32>
    %25 = tpu.matmul %24, %12, %cst_21 {dimension_numbers = #tpu.dot_dimension_numbers<[1], [0], [0], [1], [0, 0, 1, 1], [], []>} : vector<64x32xf32>, vector<32x32xf32>, vector<64x32xf32> -> vector<64x32xf32>
    %cst_22 = arith.constant 0.353553385 : f32
    %26 = vector.broadcast %cst_22 : f32 to vector<64x32xf32>
    %27 = arith.mulf %25, %26 : vector<64x32xf32>
    %28 = arith.mulf %23, %15 : vector<64x32xf32>
    %cst_23 = arith.constant dense<0.000000e+00> : vector<64x32xf32>
    %29 = tpu.matmul %28, %12, %cst_23 {dimension_numbers = #tpu.dot_dimension_numbers<[1], [0], [0], [1], [0, 0, 1, 1], [], []>} : vector<64x32xf32>, vector<32x32xf32>, vector<64x32xf32> -> vector<64x32xf32>
    %cst_24 = arith.constant 0.353553385 : f32
    %30 = vector.broadcast %cst_24 : f32 to vector<64x32xf32>
    %31 = arith.mulf %29, %30 : vector<64x32xf32>
    %32 = arith.mulf %23, %16 : vector<64x32xf32>
    %cst_25 = arith.constant dense<0.000000e+00> : vector<64x32xf32>
    %33 = tpu.matmul %32, %12, %cst_25 {dimension_numbers = #tpu.dot_dimension_numbers<[1], [0], [0], [1], [0, 0, 1, 1], [], []>} : vector<64x32xf32>, vector<32x32xf32>, vector<64x32xf32> -> vector<64x32xf32>
    %cst_26 = arith.constant 0.353553385 : f32
    %34 = vector.broadcast %cst_26 : f32 to vector<64x32xf32>
    %35 = arith.mulf %33, %34 : vector<64x32xf32>
    %36 = arith.mulf %23, %17 : vector<64x32xf32>
    %cst_27 = arith.constant dense<0.000000e+00> : vector<64x32xf32>
    %37 = tpu.matmul %36, %12, %cst_27 {dimension_numbers = #tpu.dot_dimension_numbers<[1], [0], [0], [1], [0, 0, 1, 1], [], []>} : vector<64x32xf32>, vector<32x32xf32>, vector<64x32xf32> -> vector<64x32xf32>
    %cst_28 = arith.constant 0.353553385 : f32
    %38 = vector.broadcast %cst_28 : f32 to vector<64x32xf32>
    %39 = arith.mulf %37, %38 : vector<64x32xf32>
    %40 = arith.maximumf %27, %31 : vector<64x32xf32>
    %41 = arith.maximumf %40, %35 : vector<64x32xf32>
    %42 = arith.maximumf %41, %39 : vector<64x32xf32>
    %43 = arith.subf %27, %42 : vector<64x32xf32>
    %44 = math.exp %43 : vector<64x32xf32>
    %45 = arith.subf %31, %42 : vector<64x32xf32>
    %46 = math.exp %45 : vector<64x32xf32>
    %47 = arith.subf %35, %42 : vector<64x32xf32>
    %48 = math.exp %47 : vector<64x32xf32>
    %49 = arith.subf %39, %42 : vector<64x32xf32>
    %50 = math.exp %49 : vector<64x32xf32>
    %51 = arith.addf %44, %46 : vector<64x32xf32>
    %52 = arith.addf %51, %48 : vector<64x32xf32>
    %53 = arith.addf %52, %50 : vector<64x32xf32>
    %54 = tpu.reciprocal %53 {approx = true} : vector<64x32xf32> -> vector<64x32xf32>
    %55 = arith.mulf %44, %54 : vector<64x32xf32>
    %56 = arith.mulf %55, %18 : vector<64x32xf32>
    %57 = arith.mulf %46, %54 : vector<64x32xf32>
    %58 = arith.mulf %57, %19 : vector<64x32xf32>
    %59 = arith.addf %56, %58 : vector<64x32xf32>
    %60 = arith.mulf %48, %54 : vector<64x32xf32>
    %61 = arith.mulf %60, %20 : vector<64x32xf32>
    %62 = arith.addf %59, %61 : vector<64x32xf32>
    %63 = arith.mulf %50, %54 : vector<64x32xf32>
    %64 = arith.mulf %63, %21 : vector<64x32xf32>
    %65 = arith.addf %62, %64 : vector<64x32xf32>
    %66 = vector.extract_strided_slice %13 {offsets = [0, 0], sizes = [32, 128], strides = [1, 1]} : vector<128x128xf32> to vector<32x128xf32>
    %cst_29 = arith.constant dense<0.000000e+00> : vector<64x128xf32>
    %67 = tpu.matmul %65, %66, %cst_29 {dimension_numbers = #tpu.dot_dimension_numbers<[1], [0], [0], [1], [0, 0, 1, 1], [], []>} : vector<64x32xf32>, vector<32x128xf32>, vector<64x128xf32> -> vector<64x128xf32>
    %68 = arith.addf %22, %67 : vector<64x128xf32>
    %69 = vector.extract_strided_slice %3 {offsets = [64, 0], sizes = [64, 32], strides = [1, 1]} : vector<256x32xf32> to vector<64x32xf32>
    %70 = arith.mulf %69, %14 : vector<64x32xf32>
    %cst_30 = arith.constant dense<0.000000e+00> : vector<64x32xf32>
    %71 = tpu.matmul %70, %12, %cst_30 {dimension_numbers = #tpu.dot_dimension_numbers<[1], [0], [0], [1], [0, 0, 1, 1], [], []>} : vector<64x32xf32>, vector<32x32xf32>, vector<64x32xf32> -> vector<64x32xf32>
    %cst_31 = arith.constant 0.353553385 : f32
    %72 = vector.broadcast %cst_31 : f32 to vector<64x32xf32>
    %73 = arith.mulf %71, %72 : vector<64x32xf32>
    %74 = arith.mulf %69, %15 : vector<64x32xf32>
    %cst_32 = arith.constant dense<0.000000e+00> : vector<64x32xf32>
    %75 = tpu.matmul %74, %12, %cst_32 {dimension_numbers = #tpu.dot_dimension_numbers<[1], [0], [0], [1], [0, 0, 1, 1], [], []>} : vector<64x32xf32>, vector<32x32xf32>, vector<64x32xf32> -> vector<64x32xf32>
    %cst_33 = arith.constant 0.353553385 : f32
    %76 = vector.broadcast %cst_33 : f32 to vector<64x32xf32>
    %77 = arith.mulf %75, %76 : vector<64x32xf32>
    %78 = arith.mulf %69, %16 : vector<64x32xf32>
    %cst_34 = arith.constant dense<0.000000e+00> : vector<64x32xf32>
    %79 = tpu.matmul %78, %12, %cst_34 {dimension_numbers = #tpu.dot_dimension_numbers<[1], [0], [0], [1], [0, 0, 1, 1], [], []>} : vector<64x32xf32>, vector<32x32xf32>, vector<64x32xf32> -> vector<64x32xf32>
    %cst_35 = arith.constant 0.353553385 : f32
    %80 = vector.broadcast %cst_35 : f32 to vector<64x32xf32>
    %81 = arith.mulf %79, %80 : vector<64x32xf32>
    %82 = arith.mulf %69, %17 : vector<64x32xf32>
    %cst_36 = arith.constant dense<0.000000e+00> : vector<64x32xf32>
    %83 = tpu.matmul %82, %12, %cst_36 {dimension_numbers = #tpu.dot_dimension_numbers<[1], [0], [0], [1], [0, 0, 1, 1], [], []>} : vector<64x32xf32>, vector<32x32xf32>, vector<64x32xf32> -> vector<64x32xf32>
    %cst_37 = arith.constant 0.353553385 : f32
    %84 = vector.broadcast %cst_37 : f32 to vector<64x32xf32>
    %85 = arith.mulf %83, %84 : vector<64x32xf32>
    %86 = arith.maximumf %73, %77 : vector<64x32xf32>
    %87 = arith.maximumf %86, %81 : vector<64x32xf32>
    %88 = arith.maximumf %87, %85 : vector<64x32xf32>
    %89 = arith.subf %73, %88 : vector<64x32xf32>
    %90 = math.exp %89 : vector<64x32xf32>
    %91 = arith.subf %77, %88 : vector<64x32xf32>
    %92 = math.exp %91 : vector<64x32xf32>
    %93 = arith.subf %81, %88 : vector<64x32xf32>
    %94 = math.exp %93 : vector<64x32xf32>
    %95 = arith.subf %85, %88 : vector<64x32xf32>
    %96 = math.exp %95 : vector<64x32xf32>
    %97 = arith.addf %90, %92 : vector<64x32xf32>
    %98 = arith.addf %97, %94 : vector<64x32xf32>
    %99 = arith.addf %98, %96 : vector<64x32xf32>
    %100 = tpu.reciprocal %99 {approx = true} : vector<64x32xf32> -> vector<64x32xf32>
    %101 = arith.mulf %90, %100 : vector<64x32xf32>
    %102 = arith.mulf %101, %18 : vector<64x32xf32>
    %103 = arith.mulf %92, %100 : vector<64x32xf32>
    %104 = arith.mulf %103, %19 : vector<64x32xf32>
    %105 = arith.addf %102, %104 : vector<64x32xf32>
    %106 = arith.mulf %94, %100 : vector<64x32xf32>
    %107 = arith.mulf %106, %20 : vector<64x32xf32>
    %108 = arith.addf %105, %107 : vector<64x32xf32>
    %109 = arith.mulf %96, %100 : vector<64x32xf32>
    %110 = arith.mulf %109, %21 : vector<64x32xf32>
    %111 = arith.addf %108, %110 : vector<64x32xf32>
    %112 = vector.extract_strided_slice %13 {offsets = [32, 0], sizes = [32, 128], strides = [1, 1]} : vector<128x128xf32> to vector<32x128xf32>
    %cst_38 = arith.constant dense<0.000000e+00> : vector<64x128xf32>
    %113 = tpu.matmul %111, %112, %cst_38 {dimension_numbers = #tpu.dot_dimension_numbers<[1], [0], [0], [1], [0, 0, 1, 1], [], []>} : vector<64x32xf32>, vector<32x128xf32>, vector<64x128xf32> -> vector<64x128xf32>
    %114 = arith.addf %68, %113 : vector<64x128xf32>
    %115 = vector.extract_strided_slice %3 {offsets = [128, 0], sizes = [64, 32], strides = [1, 1]} : vector<256x32xf32> to vector<64x32xf32>
    %116 = arith.mulf %115, %14 : vector<64x32xf32>
    %cst_39 = arith.constant dense<0.000000e+00> : vector<64x32xf32>
    %117 = tpu.matmul %116, %12, %cst_39 {dimension_numbers = #tpu.dot_dimension_numbers<[1], [0], [0], [1], [0, 0, 1, 1], [], []>} : vector<64x32xf32>, vector<32x32xf32>, vector<64x32xf32> -> vector<64x32xf32>
    %cst_40 = arith.constant 0.353553385 : f32
    %118 = vector.broadcast %cst_40 : f32 to vector<64x32xf32>
    %119 = arith.mulf %117, %118 : vector<64x32xf32>
    %120 = arith.mulf %115, %15 : vector<64x32xf32>
    %cst_41 = arith.constant dense<0.000000e+00> : vector<64x32xf32>
    %121 = tpu.matmul %120, %12, %cst_41 {dimension_numbers = #tpu.dot_dimension_numbers<[1], [0], [0], [1], [0, 0, 1, 1], [], []>} : vector<64x32xf32>, vector<32x32xf32>, vector<64x32xf32> -> vector<64x32xf32>
    %cst_42 = arith.constant 0.353553385 : f32
    %122 = vector.broadcast %cst_42 : f32 to vector<64x32xf32>
    %123 = arith.mulf %121, %122 : vector<64x32xf32>
    %124 = arith.mulf %115, %16 : vector<64x32xf32>
    %cst_43 = arith.constant dense<0.000000e+00> : vector<64x32xf32>
    %125 = tpu.matmul %124, %12, %cst_43 {dimension_numbers = #tpu.dot_dimension_numbers<[1], [0], [0], [1], [0, 0, 1, 1], [], []>} : vector<64x32xf32>, vector<32x32xf32>, vector<64x32xf32> -> vector<64x32xf32>
    %cst_44 = arith.constant 0.353553385 : f32
    %126 = vector.broadcast %cst_44 : f32 to vector<64x32xf32>
    %127 = arith.mulf %125, %126 : vector<64x32xf32>
    %128 = arith.mulf %115, %17 : vector<64x32xf32>
    %cst_45 = arith.constant dense<0.000000e+00> : vector<64x32xf32>
    %129 = tpu.matmul %128, %12, %cst_45 {dimension_numbers = #tpu.dot_dimension_numbers<[1], [0], [0], [1], [0, 0, 1, 1], [], []>} : vector<64x32xf32>, vector<32x32xf32>, vector<64x32xf32> -> vector<64x32xf32>
    %cst_46 = arith.constant 0.353553385 : f32
    %130 = vector.broadcast %cst_46 : f32 to vector<64x32xf32>
    %131 = arith.mulf %129, %130 : vector<64x32xf32>
    %132 = arith.maximumf %119, %123 : vector<64x32xf32>
    %133 = arith.maximumf %132, %127 : vector<64x32xf32>
    %134 = arith.maximumf %133, %131 : vector<64x32xf32>
    %135 = arith.subf %119, %134 : vector<64x32xf32>
    %136 = math.exp %135 : vector<64x32xf32>
    %137 = arith.subf %123, %134 : vector<64x32xf32>
    %138 = math.exp %137 : vector<64x32xf32>
    %139 = arith.subf %127, %134 : vector<64x32xf32>
    %140 = math.exp %139 : vector<64x32xf32>
    %141 = arith.subf %131, %134 : vector<64x32xf32>
    %142 = math.exp %141 : vector<64x32xf32>
    %143 = arith.addf %136, %138 : vector<64x32xf32>
    %144 = arith.addf %143, %140 : vector<64x32xf32>
    %145 = arith.addf %144, %142 : vector<64x32xf32>
    %146 = tpu.reciprocal %145 {approx = true} : vector<64x32xf32> -> vector<64x32xf32>
    %147 = arith.mulf %136, %146 : vector<64x32xf32>
    %148 = arith.mulf %147, %18 : vector<64x32xf32>
    %149 = arith.mulf %138, %146 : vector<64x32xf32>
    %150 = arith.mulf %149, %19 : vector<64x32xf32>
    %151 = arith.addf %148, %150 : vector<64x32xf32>
    %152 = arith.mulf %140, %146 : vector<64x32xf32>
    %153 = arith.mulf %152, %20 : vector<64x32xf32>
    %154 = arith.addf %151, %153 : vector<64x32xf32>
    %155 = arith.mulf %142, %146 : vector<64x32xf32>
    %156 = arith.mulf %155, %21 : vector<64x32xf32>
    %157 = arith.addf %154, %156 : vector<64x32xf32>
    %158 = vector.extract_strided_slice %13 {offsets = [64, 0], sizes = [32, 128], strides = [1, 1]} : vector<128x128xf32> to vector<32x128xf32>
    %cst_47 = arith.constant dense<0.000000e+00> : vector<64x128xf32>
    %159 = tpu.matmul %157, %158, %cst_47 {dimension_numbers = #tpu.dot_dimension_numbers<[1], [0], [0], [1], [0, 0, 1, 1], [], []>} : vector<64x32xf32>, vector<32x128xf32>, vector<64x128xf32> -> vector<64x128xf32>
    %160 = arith.addf %114, %159 : vector<64x128xf32>
    %161 = vector.extract_strided_slice %3 {offsets = [192, 0], sizes = [64, 32], strides = [1, 1]} : vector<256x32xf32> to vector<64x32xf32>
    %162 = arith.mulf %161, %14 : vector<64x32xf32>
    %cst_48 = arith.constant dense<0.000000e+00> : vector<64x32xf32>
    %163 = tpu.matmul %162, %12, %cst_48 {dimension_numbers = #tpu.dot_dimension_numbers<[1], [0], [0], [1], [0, 0, 1, 1], [], []>} : vector<64x32xf32>, vector<32x32xf32>, vector<64x32xf32> -> vector<64x32xf32>
    %cst_49 = arith.constant 0.353553385 : f32
    %164 = vector.broadcast %cst_49 : f32 to vector<64x32xf32>
    %165 = arith.mulf %163, %164 : vector<64x32xf32>
    %166 = arith.mulf %161, %15 : vector<64x32xf32>
    %cst_50 = arith.constant dense<0.000000e+00> : vector<64x32xf32>
    %167 = tpu.matmul %166, %12, %cst_50 {dimension_numbers = #tpu.dot_dimension_numbers<[1], [0], [0], [1], [0, 0, 1, 1], [], []>} : vector<64x32xf32>, vector<32x32xf32>, vector<64x32xf32> -> vector<64x32xf32>
    %cst_51 = arith.constant 0.353553385 : f32
    %168 = vector.broadcast %cst_51 : f32 to vector<64x32xf32>
    %169 = arith.mulf %167, %168 : vector<64x32xf32>
    %170 = arith.mulf %161, %16 : vector<64x32xf32>
    %cst_52 = arith.constant dense<0.000000e+00> : vector<64x32xf32>
    %171 = tpu.matmul %170, %12, %cst_52 {dimension_numbers = #tpu.dot_dimension_numbers<[1], [0], [0], [1], [0, 0, 1, 1], [], []>} : vector<64x32xf32>, vector<32x32xf32>, vector<64x32xf32> -> vector<64x32xf32>
    %cst_53 = arith.constant 0.353553385 : f32
    %172 = vector.broadcast %cst_53 : f32 to vector<64x32xf32>
    %173 = arith.mulf %171, %172 : vector<64x32xf32>
    %174 = arith.mulf %161, %17 : vector<64x32xf32>
    %cst_54 = arith.constant dense<0.000000e+00> : vector<64x32xf32>
    %175 = tpu.matmul %174, %12, %cst_54 {dimension_numbers = #tpu.dot_dimension_numbers<[1], [0], [0], [1], [0, 0, 1, 1], [], []>} : vector<64x32xf32>, vector<32x32xf32>, vector<64x32xf32> -> vector<64x32xf32>
    %cst_55 = arith.constant 0.353553385 : f32
    %176 = vector.broadcast %cst_55 : f32 to vector<64x32xf32>
    %177 = arith.mulf %175, %176 : vector<64x32xf32>
    %178 = arith.maximumf %165, %169 : vector<64x32xf32>
    %179 = arith.maximumf %178, %173 : vector<64x32xf32>
    %180 = arith.maximumf %179, %177 : vector<64x32xf32>
    %181 = arith.subf %165, %180 : vector<64x32xf32>
    %182 = math.exp %181 : vector<64x32xf32>
    %183 = arith.subf %169, %180 : vector<64x32xf32>
    %184 = math.exp %183 : vector<64x32xf32>
    %185 = arith.subf %173, %180 : vector<64x32xf32>
    %186 = math.exp %185 : vector<64x32xf32>
    %187 = arith.subf %177, %180 : vector<64x32xf32>
    %188 = math.exp %187 : vector<64x32xf32>
    %189 = arith.addf %182, %184 : vector<64x32xf32>
    %190 = arith.addf %189, %186 : vector<64x32xf32>
    %191 = arith.addf %190, %188 : vector<64x32xf32>
    %192 = tpu.reciprocal %191 {approx = true} : vector<64x32xf32> -> vector<64x32xf32>
    %193 = arith.mulf %182, %192 : vector<64x32xf32>
    %194 = arith.mulf %193, %18 : vector<64x32xf32>
    %195 = arith.mulf %184, %192 : vector<64x32xf32>
    %196 = arith.mulf %195, %19 : vector<64x32xf32>
    %197 = arith.addf %194, %196 : vector<64x32xf32>
    %198 = arith.mulf %186, %192 : vector<64x32xf32>
    %199 = arith.mulf %198, %20 : vector<64x32xf32>
    %200 = arith.addf %197, %199 : vector<64x32xf32>
    %201 = arith.mulf %188, %192 : vector<64x32xf32>
    %202 = arith.mulf %201, %21 : vector<64x32xf32>
    %203 = arith.addf %200, %202 : vector<64x32xf32>
    %204 = vector.extract_strided_slice %13 {offsets = [96, 0], sizes = [32, 128], strides = [1, 1]} : vector<128x128xf32> to vector<32x128xf32>
    %cst_56 = arith.constant dense<0.000000e+00> : vector<64x128xf32>
    %205 = tpu.matmul %203, %204, %cst_56 {dimension_numbers = #tpu.dot_dimension_numbers<[1], [0], [0], [1], [0, 0, 1, 1], [], []>} : vector<64x32xf32>, vector<32x128xf32>, vector<64x128xf32> -> vector<64x128xf32>
    %206 = arith.addf %160, %205 : vector<64x128xf32>
    %c0_57 = arith.constant 0 : index
    %c0_58 = arith.constant 0 : index
    %c0_59 = arith.constant 0 : index
    %207 = vector.load %arg8[%c0_57, %c0_58, %c0_59] : memref<1x64x128xf32, #tpu.memory_space<vmem>>, vector<1x64x128xf32>
    %208 = vector.shape_cast %207 : vector<1x64x128xf32> to vector<64x128xf32>
    %209 = vector.shape_cast %206 : vector<64x128xf32> to vector<1x64x128xf32>
    tpu.vector_store %arg8[%c0_57, %c0_58, %c0_59], %209 {strides = array<i32>} : memref<1x64x128xf32, #tpu.memory_space<vmem>>, vector<1x64x128xf32>,
    return
  }
  func.func @transform_0(%arg0: i32) -> (i32, i32, i32) {
    %c0_i32 = arith.constant 0 : i32
    %c0_i32_0 = arith.constant 0 : i32
    %c0_i32_1 = arith.constant 0 : i32
    return %arg0, %c0_i32, %c0_i32_0 : i32, i32, i32
  }
  func.func @transform_1(%arg0: i32) -> (i32, i32, i32) {
    %c0_i32 = arith.constant 0 : i32
    %c0_i32_0 = arith.constant 0 : i32
    %c0_i32_1 = arith.constant 0 : i32
    return %arg0, %c0_i32, %c0_i32_0 : i32, i32, i32
  }
  func.func @transform_2(%arg0: i32) -> (i32, i32) {
    %c0_i32 = arith.constant 0 : i32
    %c0_i32_0 = arith.constant 0 : i32
    %c0_i32_1 = arith.constant 0 : i32
    return %c0_i32, %c0_i32_0 : i32, i32
  }
  func.func @transform_3(%arg0: i32) -> (i32, i32) {
    %c0_i32 = arith.constant 0 : i32
    %c0_i32_0 = arith.constant 0 : i32
    %c0_i32_1 = arith.constant 0 : i32
    return %c0_i32, %c0_i32_0 : i32, i32
  }
  func.func @transform_4(%arg0: i32) -> (i32, i32) {
    %c0_i32 = arith.constant 0 : i32
    %c0_i32_0 = arith.constant 0 : i32
    %c0_i32_1 = arith.constant 0 : i32
    return %c0_i32, %c0_i32_0 : i32, i32
  }
  func.func @transform_5(%arg0: i32) -> (i32, i32) {
    %c0_i32 = arith.constant 0 : i32
    %c0_i32_0 = arith.constant 0 : i32
    %c0_i32_1 = arith.constant 0 : i32
    return %c0_i32, %c0_i32_0 : i32, i32
  }
  func.func @transform_6(%arg0: i32) -> (i32, i32) {
    %c0_i32 = arith.constant 0 : i32
    %c0_i32_0 = arith.constant 0 : i32
    %c0_i32_1 = arith.constant 0 : i32
    return %c0_i32, %c0_i32_0 : i32, i32
  }
  func.func @transform_7(%arg0: i32) -> (i32, i32, i32) {
    %c0_i32 = arith.constant 0 : i32
    %c0_i32_0 = arith.constant 0 : i32
    %c0_i32_1 = arith.constant 0 : i32
    return %arg0, %c0_i32, %c0_i32_0 : i32, i32, i32
  }
}

</mosaic_0001>

<llo_original>
// kernel: window_attention_cross.1
$region0: #{window_attention_cross.1}
  #allocation0 [shape = 'u32[]', space=smem, size = 0x4, offset = 0x4, fixed_abs, tag = 'smem constant byte address 0x4 - core index']
  #allocation1 [shape = 'u32[72,128]{1,0:T(1,128)}', space=vmem, size = 0x9000, scoped, tag = 'internal scratch']
  %s0 = inlined_call_operand.vmem [shape: f32[2,256,32], index: 0, kind: input, shape index: {}]
  %s1 = inlined_call_operand.vmem [shape: f32[2,256,32], index: 1, kind: input, shape index: {}]
  %s2 = inlined_call_operand.vmem [shape: f32[32,32], index: 2, kind: input, shape index: {}]
  %s3 = inlined_call_operand.vmem [shape: f32[32,32], index: 3, kind: input, shape index: {}]
  %s4 = inlined_call_operand.vmem [shape: f32[32,32], index: 4, kind: input, shape index: {}]
  %s5 = inlined_call_operand.vmem [shape: f32[128,128], index: 5, kind: input, shape index: {}]
  %s6 = inlined_call_operand.vmem [shape: f32[32,32], index: 6, kind: input, shape index: {}]
  %s7 = inlined_call_operand.vmem [shape: f32[2,64,128], index: 7, kind: output, shape index: {}]
  %s8 = sld [smem:[#allocation0]]
  $region61: #{window_attention_cross.1} parent=0
    _
  %s10 = ssub.s32 1, %s8
  %s11 = scalar_select 0, %s10, %s8
  loop: start=0, step=1, limit=4
  $region2: #{window_attention_cross.1} parent=0 // loop_pre_header
    _
  $region3: #{window_attention_cross.1} parent=0 // loop_header
    %s13 = sphi 0, %s17
    %p14 = scmp.ge.s32.totalorder %s13, 4
    %s23 = sphi 0, %s25
    %s26 = sphi 0, %s23
    %s27 = sphi 0, %s26
    %s43 = sphi 0, %s27
    %s49 = sphi 0, %s51
    %s52 = sphi 0, %s49
    %s53 = sphi 0, %s52
    %s69 = sphi 0, %s53
    %s73 = sphi 0, %s73
    %s75 = sphi 0, %s73
    %s76 = sphi 0, %s75
    %s90 = sphi 0, %s76
    %s94 = sphi 0, %s94
    %s96 = sphi 0, %s94
    %s97 = sphi 0, %s96
    %s111 = sphi 0, %s97
    %s115 = sphi 0, %s115
    %s117 = sphi 0, %s115
    %s118 = sphi 0, %s117
    %s132 = sphi 0, %s118
    %s136 = sphi 0, %s136
    %s138 = sphi 0, %s136
    %s139 = sphi 0, %s138
    %s153 = sphi 0, %s139
    %s157 = sphi 0, %s157
    %s159 = sphi 0, %s157
    %s160 = sphi 0, %s159
    %s174 = sphi 0, %s160
    %s180 = sphi 0, %s182
    %s183 = sphi 0, %s180
    %s184 = sphi 0, %s183
    %s200 = sphi 0, %s184
  $region4: #{window_attention_cross.1} parent=0 // loop_header_branch
    %16 = sbr.rel (%p14) target = $region8
  $region5: #{window_attention_cross.1} parent=0 // loop_body
    %s18 = ssub.s32 %s13, 1
    %s19 = ssub.s32 %s13, 2
    %s20 = sadd.s32 %s13, 1
    %s21 = ssub.s32 %s13, %s20
    %p22 = scmp.eq.s32.totalorder %s21, 0
    %s24 = sadd.s32 %s23, 1
    %s25 = scalar_select %p22, %s23, %s24
    %p28 = pneg %p22
    %p29 = scmp.eq.s32.totalorder %s13, 1
    %p30 = por %p28, %p29
    %p31 = scmp.ne.s32.totalorder %s23, %s26
    %p32 = scmp.eq.s32.totalorder %s13, 0
    %p33 = por %p31, %p32
    %p34 = scmp.ne.s32.totalorder %s23, %s26
    %p35 = scmp.eq.s32.totalorder %s18, 1
    %p36 = por %p34, %p35
    %p37 = scmp.ne.s32.totalorder %s26, %s27
    %p38 = scmp.eq.s32.totalorder %s18, 0
    %p39 = por %p37, %p38
    %p40 = scmp.ne.s32.totalorder %s26, %s27
    %p41 = scmp.eq.s32.totalorder %s19, 1
    %p42 = por %p40, %p41
    %p44 = scmp.ne.s32.totalorder %s27, %s43
    %p45 = scmp.eq.s32.totalorder %s19, 0
    %p46 = por %p44, %p45
    %s47 = ssub.s32 %s13, %s20
    %p48 = scmp.eq.s32.totalorder %s47, 0
    %s50 = sadd.s32 %s49, 1
    %s51 = scalar_select %p48, %s49, %s50
    %p54 = pneg %p48
    %p55 = scmp.eq.s32.totalorder %s13, 1
    %p56 = por %p54, %p55
    %p57 = scmp.ne.s32.totalorder %s49, %s52
    %p58 = scmp.eq.s32.totalorder %s13, 0
    %p59 = por %p57, %p58
    %p60 = scmp.ne.s32.totalorder %s49, %s52
    %p61 = scmp.eq.s32.totalorder %s18, 1
    %p62 = por %p60, %p61
    %p63 = scmp.ne.s32.totalorder %s52, %s53
    %p64 = scmp.eq.s32.totalorder %s18, 0
    %p65 = por %p63, %p64
    %p66 = scmp.ne.s32.totalorder %s52, %s53
    %p67 = scmp.eq.s32.totalorder %s19, 1
    %p68 = por %p66, %p67
    %p70 = scmp.ne.s32.totalorder %s53, %s69
    %p71 = scmp.eq.s32.totalorder %s19, 0
    %p72 = por %p70, %p71
    %s74 = sadd.s32 %s73, 1
    %p77 = scmp.eq.s32.totalorder %s13, 1
    %p78 = scmp.ne.s32.totalorder %s73, %s75
    %p79 = scmp.eq.s32.totalorder %s13, 0
    %p80 = por %p78, %p79
    %p81 = scmp.ne.s32.totalorder %s73, %s75
    %p82 = scmp.eq.s32.totalorder %s18, 1
    %p83 = por %p81, %p82
    %p84 = scmp.ne.s32.totalorder %s75, %s76
    %p85 = scmp.eq.s32.totalorder %s18, 0
    %p86 = por %p84, %p85
    %p87 = scmp.ne.s32.totalorder %s75, %s76
    %p88 = scmp.eq.s32.totalorder %s19, 1
    %p89 = por %p87, %p88
    %p91 = scmp.ne.s32.totalorder %s76, %s90
    %p92 = scmp.eq.s32.totalorder %s19, 0
    %p93 = por %p91, %p92
    %s95 = sadd.s32 %s94, 1
    %p98 = scmp.eq.s32.totalorder %s13, 1
    %p99 = scmp.ne.s32.totalorder %s94, %s96
    %p100 = scmp.eq.s32.totalorder %s13, 0
    %p101 = por %p99, %p100
    %p102 = scmp.ne.s32.totalorder %s94, %s96
    %p103 = scmp.eq.s32.totalorder %s18, 1
    %p104 = por %p102, %p103
    %p105 = scmp.ne.s32.totalorder %s96, %s97
    %p106 = scmp.eq.s32.totalorder %s18, 0
    %p107 = por %p105, %p106
    %p108 = scmp.ne.s32.totalorder %s96, %s97
    %p109 = scmp.eq.s32.totalorder %s19, 1
    %p110 = por %p108, %p109
    %p112 = scmp.ne.s32.totalorder %s97, %s111
    %p113 = scmp.eq.s32.totalorder %s19, 0
    %p114 = por %p112, %p113
    %s116 = sadd.s32 %s115, 1
    %p119 = scmp.eq.s32.totalorder %s13, 1
    %p120 = scmp.ne.s32.totalorder %s115, %s117
    %p121 = scmp.eq.s32.totalorder %s13, 0
    %p122 = por %p120, %p121
    %p123 = scmp.ne.s32.totalorder %s115, %s117
    %p124 = scmp.eq.s32.totalorder %s18, 1
    %p125 = por %p123, %p124
    %p126 = scmp.ne.s32.totalorder %s117, %s118
    %p127 = scmp.eq.s32.totalorder %s18, 0
    %p128 = por %p126, %p127
    %p129 = scmp.ne.s32.totalorder %s117, %s118
    %p130 = scmp.eq.s32.totalorder %s19, 1
    %p131 = por %p129, %p130
    %p133 = scmp.ne.s32.totalorder %s118, %s132
    %p134 = scmp.eq.s32.totalorder %s19, 0
    %p135 = por %p133, %p134
    %s137 = sadd.s32 %s136, 1
    %p140 = scmp.eq.s32.totalorder %s13, 1
    %p141 = scmp.ne.s32.totalorder %s136, %s138
    %p142 = scmp.eq.s32.totalorder %s13, 0
    %p143 = por %p141, %p142
    %p144 = scmp.ne.s32.totalorder %s136, %s138
    %p145 = scmp.eq.s32.totalorder %s18, 1
    %p146 = por %p144, %p145
    %p147 = scmp.ne.s32.totalorder %s138, %s139
    %p148 = scmp.eq.s32.totalorder %s18, 0
    %p149 = por %p147, %p148
    %p150 = scmp.ne.s32.totalorder %s138, %s139
    %p151 = scmp.eq.s32.totalorder %s19, 1
    %p152 = por %p150, %p151
    %p154 = scmp.ne.s32.totalorder %s139, %s153
    %p155 = scmp.eq.s32.totalorder %s19, 0
    %p156 = por %p154, %p155
    %s158 = sadd.s32 %s157, 1
    %p161 = scmp.eq.s32.totalorder %s13, 1
    %p162 = scmp.ne.s32.totalorder %s157, %s159
    %p163 = scmp.eq.s32.totalorder %s13, 0
    %p164 = por %p162, %p163
    %p165 = scmp.ne.s32.totalorder %s157, %s159
    %p166 = scmp.eq.s32.totalorder %s18, 1
    %p167 = por %p165, %p166
    %p168 = scmp.ne.s32.totalorder %s159, %s160
    %p169 = scmp.eq.s32.totalorder %s18, 0
    %p170 = por %p168, %p169
    %p171 = scmp.ne.s32.totalorder %s159, %s160
    %p172 = scmp.eq.s32.totalorder %s19, 1
    %p173 = por %p171, %p172
    %p175 = scmp.ne.s32.totalorder %s160, %s174
    %p176 = scmp.eq.s32.totalorder %s19, 0
    %p177 = por %p175, %p176
    %s178 = ssub.s32 %s13, %s20
    %p179 = scmp.eq.s32.totalorder %s178, 0
    %s181 = sadd.s32 %s180, 1
    %s182 = scalar_select %p179, %s180, %s181
    %p185 = pneg %p179
    %p186 = scmp.eq.s32.totalorder %s13, 1
    %p187 = por %p185, %p186
    %p188 = scmp.ne.s32.totalorder %s180, %s183
    %p189 = scmp.eq.s32.totalorder %s13, 0
    %p190 = por %p188, %p189
    %p191 = scmp.ne.s32.totalorder %s180, %s183
    %p192 = scmp.eq.s32.totalorder %s18, 1
    %p193 = por %p191, %p192
    %p194 = scmp.ne.s32.totalorder %s183, %s184
    %p195 = scmp.eq.s32.totalorder %s18, 0
    %p196 = por %p194, %p195
    %p197 = scmp.ne.s32.totalorder %s183, %s184
    %p198 = scmp.eq.s32.totalorder %s19, 1
    %p199 = por %p197, %p198
    %p201 = scmp.ne.s32.totalorder %s184, %s200
    %p202 = scmp.eq.s32.totalorder %s19, 0
    %p203 = por %p201, %p202
    %p204 = scmp.le.s32.totalorder 1, %s13
    %p205 = scmp.lt.s32.totalorder %s13, 3
    %p206 = pnand %p204, %p205
    %p207 = pneg %p206
    // Predicated region
    $region9: #{window_attention_cross.1} parent=5 // pred_check
      _
    $region10: #{window_attention_cross.1} parent=5 // pred_check_branch
      %209 = sbr.rel (%p206) target = $region12
    $region11: #{window_attention_cross.1} parent=5 // pred_region
      %s210 = ssub.s32 %s13, 1
      // Predicated region
      $region13: #{window_attention_cross.1} parent=11 // pred_check
        %p211 = pneg %p86
      $region14: #{window_attention_cross.1} parent=11 // pred_check_branch
        %213 = sbr.rel (%p211) target = $region16
      $region15: #{window_attention_cross.1} parent=11 // pred_region
        _
      $region16: #{window_attention_cross.1} parent=11 // pred_fallthru
        _
      // Predicated region
      $region17: #{window_attention_cross.1} parent=11 // pred_check
        %p214 = pneg %p107
      $region18: #{window_attention_cross.1} parent=11 // pred_check_branch
        %216 = sbr.rel (%p214) target = $region20
      $region19: #{window_attention_cross.1} parent=11 // pred_region
        _
      $region20: #{window_attention_cross.1} parent=11 // pred_fallthru
        _
      // Predicated region
      $region21: #{window_attention_cross.1} parent=11 // pred_check
        %p217 = pneg %p128
      $region22: #{window_attention_cross.1} parent=11 // pred_check_branch
        %219 = sbr.rel (%p217) target = $region24
      $region23: #{window_attention_cross.1} parent=11 // pred_region
        _
      $region24: #{window_attention_cross.1} parent=11 // pred_fallthru
        _
      // Predicated region
      $region25: #{window_attention_cross.1} parent=11 // pred_check
        %p220 = pneg %p149
      $region26: #{window_attention_cross.1} parent=11 // pred_check_branch
        %222 = sbr.rel (%p220) target = $region28
      $region27: #{window_attention_cross.1} parent=11 // pred_region
        _
      $region28: #{window_attention_cross.1} parent=11 // pred_fallthru
        _
      // Predicated region
      $region29: #{window_attention_cross.1} parent=11 // pred_check
        %p223 = pneg %p170
      $region30: #{window_attention_cross.1} parent=11 // pred_check_branch
        %225 = sbr.rel (%p223) target = $region32
      $region31: #{window_attention_cross.1} parent=11 // pred_region
        _
      $region32: #{window_attention_cross.1} parent=11 // pred_fallthru
        _
    $region12: #{window_attention_cross.1} parent=5 // pred_fallthru
      _
    %p226 = scmp.lt.s32.totalorder %s13, 2
    // Predicated region
    $region33: #{window_attention_cross.1} parent=5 // pred_check
      %p227 = pneg %p226
    $region34: #{window_attention_cross.1} parent=5 // pred_check_branch
      %229 = sbr.rel (%p227) target = $region36
    $region35: #{window_attention_cross.1} parent=5 // pred_region
      // Predicated region
      $region37: #{window_attention_cross.1} parent=35 // pred_check
        %p230 = pneg %p33
      $region38: #{window_attention_cross.1} parent=35 // pred_check_branch
        %232 = sbr.rel (%p230) target = $region40
      $region39: #{window_attention_cross.1} parent=35 // pred_region
        %p233 = scmp.lt.s32.totalorder %s13, 1
        %s234 = scalar_select %p233, %s13, 1
        %s235 = smul.addr %s234, 32
        %s236 = smul.addr %s235, 8
        %s237 = scalar_lea.vmem %s0, %s236
      $region40: #{window_attention_cross.1} parent=35 // pred_fallthru
        _
      // Predicated region
      $region41: #{window_attention_cross.1} parent=35 // pred_check
        %p238 = pneg %p59
      $region42: #{window_attention_cross.1} parent=35 // pred_check_branch
        %240 = sbr.rel (%p238) target = $region44
      $region43: #{window_attention_cross.1} parent=35 // pred_region
        %p241 = scmp.lt.s32.totalorder %s13, 1
        %s242 = scalar_select %p241, %s13, 1
        %s243 = smul.addr %s242, 32
        %s244 = smul.addr %s243, 8
        %s245 = scalar_lea.vmem %s1, %s244
      $region44: #{window_attention_cross.1} parent=35 // pred_fallthru
        _
    $region36: #{window_attention_cross.1} parent=5 // pred_fallthru
      _
    %p246 = scmp.le.s32.totalorder 1, %s13
    %p247 = scmp.lt.s32.totalorder %s13, 3
    %p248 = pnand %p246, %p247
    %p249 = pneg %p248
    // Predicated region
    $region45: #{window_attention_cross.1} parent=5 // pred_check
      _
    $region46: #{window_attention_cross.1} parent=5 // pred_check_branch
      %251 = sbr.rel (%p248) target = $region48
    $region47: #{window_attention_cross.1} parent=5 // pred_region
      %s252 = ssub.s32 %s13, 1
      %p253 = scmp.lt.s32.totalorder %s18, 1
      %s254 = scalar_select %p253, %s18, 1
      %s255 = smul.addr %s254, 32
      %s256 = smul.addr %s255, 8
      %s257 = scalar_lea.vmem %s0, %s256
      %p258 = pneg %p39
      %p259 = pneg %p36
      %p260 = scmp.lt.s32.totalorder %s18, 1
      %s261 = scalar_select %p260, %s18, 1
      %s262 = smul.addr %s261, 32
      %s263 = smul.addr %s262, 8
      %s264 = scalar_lea.vmem %s1, %s263
      %p265 = pneg %p65
      %p266 = pneg %p62
      %p267 = pneg %p86
      %p268 = pneg %p83
      %p269 = pneg %p107
      %p270 = pneg %p104
      %p271 = pneg %p128
      %p272 = pneg %p125
      %p273 = pneg %p149
      %p274 = pneg %p146
      %p275 = pneg %p170
      %p276 = pneg %p167
      %p277 = pneg %p196
      %p278 = pneg %p193
      %p279 = scmp.lt.s32.totalorder %s18, 1
      %s280 = scalar_select %p279, %s18, 1
      %s281 = smul.addr %s280, 8
      %s282 = smul.addr %s281, 8
      %s283 = scalar_lea.vmem %s7, %s282
      %p284 = scmp.lt.s32.totalorder %s18, 1
      %s285 = scalar_select %p284, %s18, 1
      %s286 = smul.addr %s285, 32
      %s287 = smul.addr %s286, 8
      %s288 = scalar_lea.vmem %s0, %s287
      %p289 = scmp.lt.s32.totalorder %s18, 1
      %s290 = scalar_select %p289, %s18, 1
      %s291 = smul.addr %s290, 32
      %s292 = smul.addr %s291, 8
      %s293 = scalar_lea.vmem %s1, %s292
      %p294 = scmp.lt.s32.totalorder %s18, 1
      %s295 = scalar_select %p294, %s18, 1
      %s296 = smul.addr %s295, 8
      %s297 = smul.addr %s296, 8
      %s298 = scalar_lea.vmem %s7, %s297
      %v299 = vld [vmem:[%s288] sm:$0xff]
      %v300 = vld [vmem:[%s288 + $0x8] sm:$0xff]
      %v301 = vld [vmem:[%s288 + $0x10] sm:$0xff]
      %v302 = vld [vmem:[%s288 + $0x18] sm:$0xff]
      %v303 = vld [vmem:[%s288 + $0x20] sm:$0xff]
      %v304 = vld [vmem:[%s288 + $0x28] sm:$0xff]
      %v305 = vld [vmem:[%s288 + $0x30] sm:$0xff]
      %v306 = vld [vmem:[%s288 + $0x38] sm:$0xff]
      %v307 = vld [vmem:[%s288 + $0x40] sm:$0xff]
      %v308 = vld [vmem:[%s288 + $0x48] sm:$0xff]
      %v309 = vld [vmem:[%s288 + $0x50] sm:$0xff]
      %v310 = vld [vmem:[%s288 + $0x58] sm:$0xff]
      %v311 = vld [vmem:[%s288 + $0x60] sm:$0xff]
      %v312 = vld [vmem:[%s288 + $0x68] sm:$0xff]
      %v313 = vld [vmem:[%s288 + $0x70] sm:$0xff]
      %v314 = vld [vmem:[%s288 + $0x78] sm:$0xff]
      %v315 = vld [vmem:[%s288 + $0x80] sm:$0xff]
      %v316 = vld [vmem:[%s288 + $0x88] sm:$0xff]
      %v317 = vld [vmem:[%s288 + $0x90] sm:$0xff]
      %v318 = vld [vmem:[%s288 + $0x98] sm:$0xff]
      %v319 = vld [vmem:[%s288 + $0xa0] sm:$0xff]
      %v320 = vld [vmem:[%s288 + $0xa8] sm:$0xff]
      %v321 = vld [vmem:[%s288 + $0xb0] sm:$0xff]
      %v322 = vld [vmem:[%s288 + $0xb8] sm:$0xff]
      %v323 = vld [vmem:[%s288 + $0xc0] sm:$0xff]
      %v324 = vld [vmem:[%s288 + $0xc8] sm:$0xff]
      %v325 = vld [vmem:[%s288 + $0xd0] sm:$0xff]
      %v326 = vld [vmem:[%s288 + $0xd8] sm:$0xff]
      %v327 = vld [vmem:[%s288 + $0xe0] sm:$0xff]
      %v328 = vld [vmem:[%s288 + $0xe8] sm:$0xff]
      %v329 = vld [vmem:[%s288 + $0xf0] sm:$0xff]
      %v330 = vld [vmem:[%s288 + $0xf8] sm:$0xff]
      %v331 = vld [vmem:[%s2] sm:$0xff]
      %v332 = vld [vmem:[%s2 + $0x8] sm:$0xff]
      %v333 = vld [vmem:[%s2 + $0x10] sm:$0xff]
      %v334 = vld [vmem:[%s2 + $0x18] sm:$0xff]
      %vm335 = vcmask 261120
      %v337 = vsel %vm335, %v299, 0
      %v340 = vsel %vm335, %v300, 0
      %v343 = vsel %vm335, %v301, 0
      %v346 = vsel %vm335, %v302, 0
      %v349 = vsel %vm335, %v303, 0
      %v352 = vsel %vm335, %v304, 0
      %v355 = vsel %vm335, %v305, 0
      %v358 = vsel %vm335, %v306, 0
      %v361 = vsel %vm335, %v307, 0
      %v364 = vsel %vm335, %v308, 0
      %v367 = vsel %vm335, %v309, 0
      %v370 = vsel %vm335, %v310, 0
      %v373 = vsel %vm335, %v311, 0
      %v376 = vsel %vm335, %v312, 0
      %v379 = vsel %vm335, %v313, 0
      %v382 = vsel %vm335, %v314, 0
      %v385 = vsel %vm335, %v315, 0
      %v388 = vsel %vm335, %v316, 0
      %v391 = vsel %vm335, %v317, 0
      %v394 = vsel %vm335, %v318, 0
      %v397 = vsel %vm335, %v319, 0
      %v400 = vsel %vm335, %v320, 0
      %v403 = vsel %vm335, %v321, 0
      %v406 = vsel %vm335, %v322, 0
      %v409 = vsel %vm335, %v323, 0
      %v412 = vsel %vm335, %v324, 0
      %v415 = vsel %vm335, %v325, 0
      %v418 = vsel %vm335, %v326, 0
      %v421 = vsel %vm335, %v327, 0
      %v424 = vsel %vm335, %v328, 0
      %v427 = vsel %vm335, %v329, 0
      %v430 = vsel %vm335, %v330, 0
      %432 = vmatpush.msra.mxu0 0.0
      %433 = vmatpush.msra.mxu0 0.0
      %434 = vmatpush.msra.mxu0 0.0
      %435 = vmatpush.msra.mxu0 0.0
      %436 = vmatpush.msra.mxu0 0.0
      %437 = vmatpush.msra.mxu0 0.0
      %438 = vmatpush.msra.mxu0 0.0
      %439 = vmatpush.msra.mxu0 0.0
      %440 = vmatpush.msra.mxu0 0.0
      %441 = vmatpush.msra.mxu0 0.0
      %442 = vmatpush.msra.mxu0 0.0
      %443 = vmatpush.msra.mxu0 0.0
      %444 = vmatpush.msra.mxu0 %v334
      %445 = vmatpush.msra.mxu0 %v333
      %446 = vmatpush.msra.mxu0 %v332
      %447 = vmatpush.msra.mxu0 %v331
      %448 = vmatmul.f32.gmra.mxu0 %v337
      %v449 = vpop.f32.mrf.mxu0
      %v450 = vadd.f32 0.0, %v449
      %451 = vmatmul.f32.gmra.mxu0 %v340
      %v452 = vpop.f32.mrf.mxu0
      %v453 = vadd.f32 0.0, %v452
      %454 = vmatmul.f32.gmra.mxu0 %v343
      %v455 = vpop.f32.mrf.mxu0
      %v456 = vadd.f32 0.0, %v455
      %457 = vmatmul.f32.gmra.mxu0 %v346
      %v458 = vpop.f32.mrf.mxu0
      %v459 = vadd.f32 0.0, %v458
      %460 = vmatmul.f32.gmra.mxu0 %v349
      %v461 = vpop.f32.mrf.mxu0
      %v462 = vadd.f32 0.0, %v461
      %463 = vmatmul.f32.gmra.mxu0 %v352
      %v464 = vpop.f32.mrf.mxu0
      %v465 = vadd.f32 0.0, %v464
      %466 = vmatmul.f32.gmra.mxu0 %v355
      %v467 = vpop.f32.mrf.mxu0
      %v468 = vadd.f32 0.0, %v467
      %469 = vmatmul.f32.gmra.mxu0 %v358
      %v470 = vpop.f32.mrf.mxu0
      %v471 = vadd.f32 0.0, %v470
      %472 = vmatmul.f32.gmra.mxu0 %v361
      %v473 = vpop.f32.mrf.mxu0
      %v474 = vadd.f32 0.0, %v473
      %475 = vmatmul.f32.gmra.mxu0 %v364
      %v476 = vpop.f32.mrf.mxu0
      %v477 = vadd.f32 0.0, %v476
      %478 = vmatmul.f32.gmra.mxu0 %v367
      %v479 = vpop.f32.mrf.mxu0
      %v480 = vadd.f32 0.0, %v479
      %481 = vmatmul.f32.gmra.mxu0 %v370
      %v482 = vpop.f32.mrf.mxu0
      %v483 = vadd.f32 0.0, %v482
      %484 = vmatmul.f32.gmra.mxu0 %v373
      %v485 = vpop.f32.mrf.mxu0
      %v486 = vadd.f32 0.0, %v485
      %487 = vmatmul.f32.gmra.mxu0 %v376
      %v488 = vpop.f32.mrf.mxu0
      %v489 = vadd.f32 0.0, %v488
      %490 = vmatmul.f32.gmra.mxu0 %v379
      %v491 = vpop.f32.mrf.mxu0
      %v492 = vadd.f32 0.0, %v491
      %493 = vmatmul.f32.gmra.mxu0 %v382
      %v494 = vpop.f32.mrf.mxu0
      %v495 = vadd.f32 0.0, %v494
      %496 = vmatmul.f32.gmra.mxu0 %v385
      %v497 = vpop.f32.mrf.mxu0
      %v498 = vadd.f32 0.0, %v497
      %499 = vmatmul.f32.gmra.mxu0 %v388
      %v500 = vpop.f32.mrf.mxu0
      %v501 = vadd.f32 0.0, %v500
      %502 = vmatmul.f32.gmra.mxu0 %v391
      %v503 = vpop.f32.mrf.mxu0
      %v504 = vadd.f32 0.0, %v503
      %505 = vmatmul.f32.gmra.mxu0 %v394
      %v506 = vpop.f32.mrf.mxu0
      %v507 = vadd.f32 0.0, %v506
      %508 = vmatmul.f32.gmra.mxu0 %v397
      %v509 = vpop.f32.mrf.mxu0
      %v510 = vadd.f32 0.0, %v509
      %511 = vmatmul.f32.gmra.mxu0 %v400
      %v512 = vpop.f32.mrf.mxu0
      %v513 = vadd.f32 0.0, %v512
      %514 = vmatmul.f32.gmra.mxu0 %v403
      %v515 = vpop.f32.mrf.mxu0
      %v516 = vadd.f32 0.0, %v515
      %517 = vmatmul.f32.gmra.mxu0 %v406
      %v518 = vpop.f32.mrf.mxu0
      %v519 = vadd.f32 0.0, %v518
      %520 = vmatmul.f32.gmra.mxu0 %v409
      %v521 = vpop.f32.mrf.mxu0
      %v522 = vadd.f32 0.0, %v521
      %523 = vmatmul.f32.gmra.mxu0 %v412
      %v524 = vpop.f32.mrf.mxu0
      %v525 = vadd.f32 0.0, %v524
      %526 = vmatmul.f32.gmra.mxu0 %v415
      %v527 = vpop.f32.mrf.mxu0
      %v528 = vadd.f32 0.0, %v527
      %529 = vmatmul.f32.gmra.mxu0 %v418
      %v530 = vpop.f32.mrf.mxu0
      %v531 = vadd.f32 0.0, %v530
      %532 = vmatmul.f32.gmra.mxu0 %v421
      %v533 = vpop.f32.mrf.mxu0
      %v534 = vadd.f32 0.0, %v533
      %535 = vmatmul.f32.gmra.mxu0 %v424
      %v536 = vpop.f32.mrf.mxu0
      %v537 = vadd.f32 0.0, %v536
      %538 = vmatmul.f32.gmra.mxu0 %v427
      %v539 = vpop.f32.mrf.mxu0
      %v540 = vadd.f32 0.0, %v539
      %541 = vmatmul.f32.gmra.mxu0 %v430
      %v542 = vpop.f32.mrf.mxu0
      %v543 = vadd.f32 0.0, %v542
      %544 = vdwg.mxu0
      %v545 = vld [vmem:[%s293] sm:$0xff]
      %v546 = vld [vmem:[%s293 + $0x8] sm:$0xff]
      %v547 = vld [vmem:[%s293 + $0x10] sm:$0xff]
      %v548 = vld [vmem:[%s293 + $0x18] sm:$0xff]
      %v549 = vld [vmem:[%s293 + $0x20] sm:$0xff]
      %v550 = vld [vmem:[%s293 + $0x28] sm:$0xff]
      %v551 = vld [vmem:[%s293 + $0x30] sm:$0xff]
      %v552 = vld [vmem:[%s293 + $0x38] sm:$0xff]
      %v553 = vld [vmem:[%s293 + $0x40] sm:$0xff]
      %v554 = vld [vmem:[%s293 + $0x48] sm:$0xff]
      %v555 = vld [vmem:[%s293 + $0x50] sm:$0xff]
      %v556 = vld [vmem:[%s293 + $0x58] sm:$0xff]
      %v557 = vld [vmem:[%s293 + $0x60] sm:$0xff]
      %v558 = vld [vmem:[%s293 + $0x68] sm:$0xff]
      %v559 = vld [vmem:[%s293 + $0x70] sm:$0xff]
      %v560 = vld [vmem:[%s293 + $0x78] sm:$0xff]
      %v561 = vld [vmem:[%s293 + $0x80] sm:$0xff]
      %v562 = vld [vmem:[%s293 + $0x88] sm:$0xff]
      %v563 = vld [vmem:[%s293 + $0x90] sm:$0xff]
      %v564 = vld [vmem:[%s293 + $0x98] sm:$0xff]
      %v565 = vld [vmem:[%s293 + $0xa0] sm:$0xff]
      %v566 = vld [vmem:[%s293 + $0xa8] sm:$0xff]
      %v567 = vld [vmem:[%s293 + $0xb0] sm:$0xff]
      %v568 = vld [vmem:[%s293 + $0xb8] sm:$0xff]
      %v569 = vld [vmem:[%s293 + $0xc0] sm:$0xff]
      %v570 = vld [vmem:[%s293 + $0xc8] sm:$0xff]
      %v571 = vld [vmem:[%s293 + $0xd0] sm:$0xff]
      %v572 = vld [vmem:[%s293 + $0xd8] sm:$0xff]
      %v573 = vld [vmem:[%s293 + $0xe0] sm:$0xff]
      %v574 = vld [vmem:[%s293 + $0xe8] sm:$0xff]
      %v575 = vld [vmem:[%s293 + $0xf0] sm:$0xff]
      %v576 = vld [vmem:[%s293 + $0xf8] sm:$0xff]
      %v577 = vld [vmem:[%s3] sm:$0xff]
      %v578 = vld [vmem:[%s3 + $0x8] sm:$0xff]
      %v579 = vld [vmem:[%s3 + $0x10] sm:$0xff]
      %v580 = vld [vmem:[%s3 + $0x18] sm:$0xff]
      %v582 = vsel %vm335, %v545, 0
      %v585 = vsel %vm335, %v546, 0
      %v588 = vsel %vm335, %v547, 0
      %v591 = vsel %vm335, %v548, 0
      %v594 = vsel %vm335, %v549, 0
      %v597 = vsel %vm335, %v550, 0
      %v600 = vsel %vm335, %v551, 0
      %v603 = vsel %vm335, %v552, 0
      %v606 = vsel %vm335, %v553, 0
      %v609 = vsel %vm335, %v554, 0
      %v612 = vsel %vm335, %v555, 0
      %v615 = vsel %vm335, %v556, 0
      %v618 = vsel %vm335, %v557, 0
      %v621 = vsel %vm335, %v558, 0
      %v624 = vsel %vm335, %v559, 0
      %v627 = vsel %vm335, %v560, 0
      %v630 = vsel %vm335, %v561, 0
      %v633 = vsel %vm335, %v562, 0
      %v636 = vsel %vm335, %v563, 0
      %v639 = vsel %vm335, %v564, 0
      %v642 = vsel %vm335, %v565, 0
      %v645 = vsel %vm335, %v566, 0
      %v648 = vsel %vm335, %v567, 0
      %v651 = vsel %vm335, %v568, 0
      %v654 = vsel %vm335, %v569, 0
      %v657 = vsel %vm335, %v570, 0
      %v660 = vsel %vm335, %v571, 0
      %v663 = vsel %vm335, %v572, 0
      %v666 = vsel %vm335, %v573, 0
      %v669 = vsel %vm335, %v574, 0
      %v672 = vsel %vm335, %v575, 0
      %v675 = vsel %vm335, %v576, 0
      %677 = vmatpush.msra.mxu0 0.0
      %678 = vmatpush.msra.mxu0 0.0
      %679 = vmatpush.msra.mxu0 0.0
      %680 = vmatpush.msra.mxu0 0.0
      %681 = vmatpush.msra.mxu0 0.0
      %682 = vmatpush.msra.mxu0 0.0
      %683 = vmatpush.msra.mxu0 0.0
      %684 = vmatpush.msra.mxu0 0.0
      %685 = vmatpush.msra.mxu0 0.0
      %686 = vmatpush.msra.mxu0 0.0
      %687 = vmatpush.msra.mxu0 0.0
      %688 = vmatpush.msra.mxu0 0.0
      %689 = vmatpush.msra.mxu0 %v580
      %690 = vmatpush.msra.mxu0 %v579
      %691 = vmatpush.msra.mxu0 %v578
      %692 = vmatpush.msra.mxu0 %v577
      %693 = vmatmul.f32.gmra.mxu0 %v582
      %v694 = vpop.f32.mrf.mxu0
      %v695 = vadd.f32 0.0, %v694
      %696 = vmatmul.f32.gmra.mxu0 %v585
      %v697 = vpop.f32.mrf.mxu0
      %v698 = vadd.f32 0.0, %v697
      %699 = vmatmul.f32.gmra.mxu0 %v588
      %v700 = vpop.f32.mrf.mxu0
      %v701 = vadd.f32 0.0, %v700
      %702 = vmatmul.f32.gmra.mxu0 %v591
      %v703 = vpop.f32.mrf.mxu0
      %v704 = vadd.f32 0.0, %v703
      %705 = vmatmul.f32.gmra.mxu0 %v594
      %v706 = vpop.f32.mrf.mxu0
      %v707 = vadd.f32 0.0, %v706
      %708 = vmatmul.f32.gmra.mxu0 %v597
      %v709 = vpop.f32.mrf.mxu0
      %v710 = vadd.f32 0.0, %v709
      %711 = vmatmul.f32.gmra.mxu0 %v600
      %v712 = vpop.f32.mrf.mxu0
      %v713 = vadd.f32 0.0, %v712
      %714 = vmatmul.f32.gmra.mxu0 %v603
      %v715 = vpop.f32.mrf.mxu0
      %v716 = vadd.f32 0.0, %v715
      %717 = vmatmul.f32.gmra.mxu0 %v606
      %v718 = vpop.f32.mrf.mxu0
      %v719 = vadd.f32 0.0, %v718
      %720 = vmatmul.f32.gmra.mxu0 %v609
      %v721 = vpop.f32.mrf.mxu0
      %v722 = vadd.f32 0.0, %v721
      %723 = vmatmul.f32.gmra.mxu0 %v612
      %v724 = vpop.f32.mrf.mxu0
      %v725 = vadd.f32 0.0, %v724
      %726 = vmatmul.f32.gmra.mxu0 %v615
      %v727 = vpop.f32.mrf.mxu0
      %v728 = vadd.f32 0.0, %v727
      %729 = vmatmul.f32.gmra.mxu0 %v618
      %v730 = vpop.f32.mrf.mxu0
      %v731 = vadd.f32 0.0, %v730
      %732 = vmatmul.f32.gmra.mxu0 %v621
      %v733 = vpop.f32.mrf.mxu0
      %v734 = vadd.f32 0.0, %v733
      %735 = vmatmul.f32.gmra.mxu0 %v624
      %v736 = vpop.f32.mrf.mxu0
      %v737 = vadd.f32 0.0, %v736
      %738 = vmatmul.f32.gmra.mxu0 %v627
      %v739 = vpop.f32.mrf.mxu0
      %v740 = vadd.f32 0.0, %v739
      %741 = vmatmul.f32.gmra.mxu0 %v630
      %v742 = vpop.f32.mrf.mxu0
      %v743 = vadd.f32 0.0, %v742
      %744 = vmatmul.f32.gmra.mxu0 %v633
      %v745 = vpop.f32.mrf.mxu0
      %v746 = vadd.f32 0.0, %v745
      %747 = vmatmul.f32.gmra.mxu0 %v636
      %v748 = vpop.f32.mrf.mxu0
      %v749 = vadd.f32 0.0, %v748
      %750 = vmatmul.f32.gmra.mxu0 %v639
      %v751 = vpop.f32.mrf.mxu0
      %v752 = vadd.f32 0.0, %v751
      %753 = vmatmul.f32.gmra.mxu0 %v642
      %v754 = vpop.f32.mrf.mxu0
      %v755 = vadd.f32 0.0, %v754
      %756 = vmatmul.f32.gmra.mxu0 %v645
      %v757 = vpop.f32.mrf.mxu0
      %v758 = vadd.f32 0.0, %v757
      %759 = vmatmul.f32.gmra.mxu0 %v648
      %v760 = vpop.f32.mrf.mxu0
      %v761 = vadd.f32 0.0, %v760
      %762 = vmatmul.f32.gmra.mxu0 %v651
      %v763 = vpop.f32.mrf.mxu0
      %v764 = vadd.f32 0.0, %v763
      %765 = vmatmul.f32.gmra.mxu0 %v654
      %v766 = vpop.f32.mrf.mxu0
      %v767 = vadd.f32 0.0, %v766
      %768 = vmatmul.f32.gmra.mxu0 %v657
      %v769 = vpop.f32.mrf.mxu0
      %v770 = vadd.f32 0.0, %v769
      %771 = vmatmul.f32.gmra.mxu0 %v660
      %v772 = vpop.f32.mrf.mxu0
      %v773 = vadd.f32 0.0, %v772
      %774 = vmatmul.f32.gmra.mxu0 %v663
      %v775 = vpop.f32.mrf.mxu0
      %v776 = vadd.f32 0.0, %v775
      %777 = vmatmul.f32.gmra.mxu0 %v666
      %v778 = vpop.f32.mrf.mxu0
      %v779 = vadd.f32 0.0, %v778
      %780 = vmatmul.f32.gmra.mxu0 %v669
      %v781 = vpop.f32.mrf.mxu0
      %v782 = vadd.f32 0.0, %v781
      %783 = vmatmul.f32.gmra.mxu0 %v672
      %v784 = vpop.f32.mrf.mxu0
      %v785 = vadd.f32 0.0, %v784
      %786 = vmatmul.f32.gmra.mxu0 %v675
      %v787 = vpop.f32.mrf.mxu0
      %v788 = vadd.f32 0.0, %v787
      %789 = vdwg.mxu0
      %v790 = vld [vmem:[%s4] sm:$0xff]
      %v791 = vld [vmem:[%s4 + $0x8] sm:$0xff]
      %v792 = vld [vmem:[%s4 + $0x10] sm:$0xff]
      %v793 = vld [vmem:[%s4 + $0x18] sm:$0xff]
      %794 = vmatpush.msra.mxu0 0.0
      %795 = vmatpush.msra.mxu0 0.0
      %796 = vmatpush.msra.mxu0 0.0
      %797 = vmatpush.msra.mxu0 0.0
      %798 = vmatpush.msra.mxu0 0.0
      %799 = vmatpush.msra.mxu0 0.0
      %800 = vmatpush.msra.mxu0 0.0
      %801 = vmatpush.msra.mxu0 0.0
      %802 = vmatpush.msra.mxu0 0.0
      %803 = vmatpush.msra.mxu0 0.0
      %804 = vmatpush.msra.mxu0 0.0
      %805 = vmatpush.msra.mxu0 0.0
      %806 = vmatpush.msra.mxu0 %v793
      %807 = vmatpush.msra.mxu0 %v792
      %808 = vmatpush.msra.mxu0 %v791
      %809 = vmatpush.msra.mxu0 %v790
      %810 = vmatmul.f32.gmra.mxu0 %v582
      %v811 = vpop.f32.mrf.mxu0
      %v812 = vadd.f32 0.0, %v811
      %813 = vmatmul.f32.gmra.mxu0 %v585
      %v814 = vpop.f32.mrf.mxu0
      %v815 = vadd.f32 0.0, %v814
      %816 = vmatmul.f32.gmra.mxu0 %v588
      %v817 = vpop.f32.mrf.mxu0
      %v818 = vadd.f32 0.0, %v817
      %819 = vmatmul.f32.gmra.mxu0 %v591
      %v820 = vpop.f32.mrf.mxu0
      %v821 = vadd.f32 0.0, %v820
      %822 = vmatmul.f32.gmra.mxu0 %v594
      %v823 = vpop.f32.mrf.mxu0
      %v824 = vadd.f32 0.0, %v823
      %825 = vmatmul.f32.gmra.mxu0 %v597
      %v826 = vpop.f32.mrf.mxu0
      %v827 = vadd.f32 0.0, %v826
      %828 = vmatmul.f32.gmra.mxu0 %v600
      %v829 = vpop.f32.mrf.mxu0
      %v830 = vadd.f32 0.0, %v829
      %831 = vmatmul.f32.gmra.mxu0 %v603
      %v832 = vpop.f32.mrf.mxu0
      %v833 = vadd.f32 0.0, %v832
      %834 = vmatmul.f32.gmra.mxu0 %v606
      %v835 = vpop.f32.mrf.mxu0
      %v836 = vadd.f32 0.0, %v835
      %837 = vmatmul.f32.gmra.mxu0 %v609
      %v838 = vpop.f32.mrf.mxu0
      %v839 = vadd.f32 0.0, %v838
      %840 = vmatmul.f32.gmra.mxu0 %v612
      %v841 = vpop.f32.mrf.mxu0
      %v842 = vadd.f32 0.0, %v841
      %843 = vmatmul.f32.gmra.mxu0 %v615
      %v844 = vpop.f32.mrf.mxu0
      %v845 = vadd.f32 0.0, %v844
      %846 = vmatmul.f32.gmra.mxu0 %v618
      %v847 = vpop.f32.mrf.mxu0
      %v848 = vadd.f32 0.0, %v847
      %849 = vmatmul.f32.gmra.mxu0 %v621
      %v850 = vpop.f32.mrf.mxu0
      %v851 = vadd.f32 0.0, %v850
      %852 = vmatmul.f32.gmra.mxu0 %v624
      %v853 = vpop.f32.mrf.mxu0
      %v854 = vadd.f32 0.0, %v853
      %855 = vmatmul.f32.gmra.mxu0 %v627
      %v856 = vpop.f32.mrf.mxu0
      %v857 = vadd.f32 0.0, %v856
      %858 = vmatmul.f32.gmra.mxu0 %v630
      %v859 = vpop.f32.mrf.mxu0
      %v860 = vadd.f32 0.0, %v859
      %861 = vmatmul.f32.gmra.mxu0 %v633
      %v862 = vpop.f32.mrf.mxu0
      %v863 = vadd.f32 0.0, %v862
      %864 = vmatmul.f32.gmra.mxu0 %v636
      %v865 = vpop.f32.mrf.mxu0
      %v866 = vadd.f32 0.0, %v865
      %867 = vmatmul.f32.gmra.mxu0 %v639
      %v868 = vpop.f32.mrf.mxu0
      %v869 = vadd.f32 0.0, %v868
      %870 = vmatmul.f32.gmra.mxu0 %v642
      %v871 = vpop.f32.mrf.mxu0
      %v872 = vadd.f32 0.0, %v871
      %873 = vmatmul.f32.gmra.mxu0 %v645
      %v874 = vpop.f32.mrf.mxu0
      %v875 = vadd.f32 0.0, %v874
      %876 = vmatmul.f32.gmra.mxu0 %v648
      %v877 = vpop.f32.mrf.mxu0
      %v878 = vadd.f32 0.0, %v877
      %879 = vmatmul.f32.gmra.mxu0 %v651
      %v880 = vpop.f32.mrf.mxu0
      %v881 = vadd.f32 0.0, %v880
      %882 = vmatmul.f32.gmra.mxu0 %v654
      %v883 = vpop.f32.mrf.mxu0
      %v884 = vadd.f32 0.0, %v883
      %885 = vmatmul.f32.gmra.mxu0 %v657
      %v886 = vpop.f32.mrf.mxu0
      %v887 = vadd.f32 0.0, %v886
      %888 = vmatmul.f32.gmra.mxu0 %v660
      %v889 = vpop.f32.mrf.mxu0
      %v890 = vadd.f32 0.0, %v889
      %891 = vmatmul.f32.gmra.mxu0 %v663
      %v892 = vpop.f32.mrf.mxu0
      %v893 = vadd.f32 0.0, %v892
      %894 = vmatmul.f32.gmra.mxu0 %v666
      %v895 = vpop.f32.mrf.mxu0
      %v896 = vadd.f32 0.0, %v895
      %897 = vmatmul.f32.gmra.mxu0 %v669
      %v898 = vpop.f32.mrf.mxu0
      %v899 = vadd.f32 0.0, %v898
      %900 = vmatmul.f32.gmra.mxu0 %v672
      %v901 = vpop.f32.mrf.mxu0
      %v902 = vadd.f32 0.0, %v901
      %903 = vmatmul.f32.gmra.mxu0 %v675
      %v904 = vpop.f32.mrf.mxu0
      %v905 = vadd.f32 0.0, %v904
      %906 = vdwg.mxu0
      %v907 = vld [vmem:[%s6] sm:$0xff]
      %v908 = vld [vmem:[%s6 + $0x8] sm:$0xff]
      %v909 = vld [vmem:[%s6 + $0x10] sm:$0xff]
      %v910 = vld [vmem:[%s6 + $0x18] sm:$0xff]
      %v911 = vld [vmem:[%s5] sm:$0xff]
      %v912 = vld [vmem:[%s5 + $0x8] sm:$0xff]
      %v913 = vld [vmem:[%s5 + $0x10] sm:$0xff]
      %v914 = vld [vmem:[%s5 + $0x18] sm:$0xff]
      %v915 = vld [vmem:[%s5 + $0x20] sm:$0xff]
      %v916 = vld [vmem:[%s5 + $0x28] sm:$0xff]
      %v917 = vld [vmem:[%s5 + $0x30] sm:$0xff]
      %v918 = vld [vmem:[%s5 + $0x38] sm:$0xff]
      %v919 = vld [vmem:[%s5 + $0x40] sm:$0xff]
      %v920 = vld [vmem:[%s5 + $0x48] sm:$0xff]
      %v921 = vld [vmem:[%s5 + $0x50] sm:$0xff]
      %v922 = vld [vmem:[%s5 + $0x58] sm:$0xff]
      %v923 = vld [vmem:[%s5 + $0x60] sm:$0xff]
      %v924 = vld [vmem:[%s5 + $0x68] sm:$0xff]
      %v925 = vld [vmem:[%s5 + $0x70] sm:$0xff]
      %v926 = vld [vmem:[%s5 + $0x78] sm:$0xff]
      %v927 = vmul.f32 %v450, %v695
      %v928 = vmul.f32 %v453, %v698
      %v929 = vmul.f32 %v456, %v701
      %v930 = vmul.f32 %v459, %v704
      %v931 = vmul.f32 %v462, %v707
      %v932 = vmul.f32 %v465, %v710
      %v933 = vmul.f32 %v468, %v713
      %v934 = vmul.f32 %v471, %v716
      %v936 = vsel %vm335, %v927, 0
      %v939 = vsel %vm335, %v928, 0
      %v942 = vsel %vm335, %v929, 0
      %v945 = vsel %vm335, %v930, 0
      %v948 = vsel %vm335, %v931, 0
      %v951 = vsel %vm335, %v932, 0
      %v954 = vsel %vm335, %v933, 0
      %v957 = vsel %vm335, %v934, 0
      %959 = vmatpush.msra.mxu0 0.0
      %960 = vmatpush.msra.mxu0 0.0
      %961 = vmatpush.msra.mxu0 0.0
      %962 = vmatpush.msra.mxu0 0.0
      %963 = vmatpush.msra.mxu0 0.0
      %964 = vmatpush.msra.mxu0 0.0
      %965 = vmatpush.msra.mxu0 0.0
      %966 = vmatpush.msra.mxu0 0.0
      %967 = vmatpush.msra.mxu0 0.0
      %968 = vmatpush.msra.mxu0 0.0
      %969 = vmatpush.msra.mxu0 0.0
      %970 = vmatpush.msra.mxu0 0.0
      %971 = vmatpush.msra.mxu0 %v910
      %972 = vmatpush.msra.mxu0 %v909
      %973 = vmatpush.msra.mxu0 %v908
      %974 = vmatpush.msra.mxu0 %v907
      %975 = vmatmul.f32.gmra.mxu0 %v936
      %v976 = vpop.f32.mrf.mxu0
      %v977 = vadd.f32 0.0, %v976
      %978 = vmatmul.f32.gmra.mxu0 %v939
      %v979 = vpop.f32.mrf.mxu0
      %v980 = vadd.f32 0.0, %v979
      %981 = vmatmul.f32.gmra.mxu0 %v942
      %v982 = vpop.f32.mrf.mxu0
      %v983 = vadd.f32 0.0, %v982
      %984 = vmatmul.f32.gmra.mxu0 %v945
      %v985 = vpop.f32.mrf.mxu0
      %v986 = vadd.f32 0.0, %v985
      %987 = vmatmul.f32.gmra.mxu0 %v948
      %v988 = vpop.f32.mrf.mxu0
      %v989 = vadd.f32 0.0, %v988
      %990 = vmatmul.f32.gmra.mxu0 %v951
      %v991 = vpop.f32.mrf.mxu0
      %v992 = vadd.f32 0.0, %v991
      %993 = vmatmul.f32.gmra.mxu0 %v954
      %v994 = vpop.f32.mrf.mxu0
      %v995 = vadd.f32 0.0, %v994
      %996 = vmatmul.f32.gmra.mxu0 %v957
      %v997 = vpop.f32.mrf.mxu0
      %v998 = vadd.f32 0.0, %v997
      %999 = vdwg.mxu0
      %v1000 = vmul.f32 %v977, 0.35355338
      %v1001 = vmul.f32 %v980, 0.35355338
      %v1002 = vmul.f32 %v983, 0.35355338
      %v1003 = vmul.f32 %v986, 0.35355338
      %v1004 = vmul.f32 %v989, 0.35355338
      %v1005 = vmul.f32 %v992, 0.35355338
      %v1006 = vmul.f32 %v995, 0.35355338
      %v1007 = vmul.f32 %v998, 0.35355338
      %v1008 = vmul.f32 %v450, %v719
      %v1009 = vmul.f32 %v453, %v722
      %v1010 = vmul.f32 %v456, %v725
      %v1011 = vmul.f32 %v459, %v728
      %v1012 = vmul.f32 %v462, %v731
      %v1013 = vmul.f32 %v465, %v734
      %v1014 = vmul.f32 %v468, %v737
      %v1015 = vmul.f32 %v471, %v740
      %v1017 = vsel %vm335, %v1008, 0
      %v1020 = vsel %vm335, %v1009, 0
      %v1023 = vsel %vm335, %v1010, 0
      %v1026 = vsel %vm335, %v1011, 0
      %v1029 = vsel %vm335, %v1012, 0
      %v1032 = vsel %vm335, %v1013, 0
      %v1035 = vsel %vm335, %v1014, 0
      %v1038 = vsel %vm335, %v1015, 0
      %1040 = vmatpush.msra.mxu0 0.0
      %1041 = vmatpush.msra.mxu0 0.0
      %1042 = vmatpush.msra.mxu0 0.0
      %1043 = vmatpush.msra.mxu0 0.0
      %1044 = vmatpush.msra.mxu0 0.0
      %1045 = vmatpush.msra.mxu0 0.0
      %1046 = vmatpush.msra.mxu0 0.0
      %1047 = vmatpush.msra.mxu0 0.0
      %1048 = vmatpush.msra.mxu0 0.0
      %1049 = vmatpush.msra.mxu0 0.0
      %1050 = vmatpush.msra.mxu0 0.0
      %1051 = vmatpush.msra.mxu0 0.0
      %1052 = vmatpush.msra.mxu0 %v910
      %1053 = vmatpush.msra.mxu0 %v909
      %1054 = vmatpush.msra.mxu0 %v908
      %1055 = vmatpush.msra.mxu0 %v907
      %1056 = vmatmul.f32.gmra.mxu0 %v1017
      %v1057 = vpop.f32.mrf.mxu0
      %v1058 = vadd.f32 0.0, %v1057
      %1059 = vmatmul.f32.gmra.mxu0 %v1020
      %v1060 = vpop.f32.mrf.mxu0
      %v1061 = vadd.f32 0.0, %v1060
      %1062 = vmatmul.f32.gmra.mxu0 %v1023
      %v1063 = vpop.f32.mrf.mxu0
      %v1064 = vadd.f32 0.0, %v1063
      %1065 = vmatmul.f32.gmra.mxu0 %v1026
      %v1066 = vpop.f32.mrf.mxu0
      %v1067 = vadd.f32 0.0, %v1066
      %1068 = vmatmul.f32.gmra.mxu0 %v1029
      %v1069 = vpop.f32.mrf.mxu0
      %v1070 = vadd.f32 0.0, %v1069
      %1071 = vmatmul.f32.gmra.mxu0 %v1032
      %v1072 = vpop.f32.mrf.mxu0
      %v1073 = vadd.f32 0.0, %v1072
      %1074 = vmatmul.f32.gmra.mxu0 %v1035
      %v1075 = vpop.f32.mrf.mxu0
      %v1076 = vadd.f32 0.0, %v1075
      %1077 = vmatmul.f32.gmra.mxu0 %v1038
      %v1078 = vpop.f32.mrf.mxu0
      %v1079 = vadd.f32 0.0, %v1078
      %1080 = vdwg.mxu0
      %v1081 = vmul.f32 %v1058, 0.35355338
      %v1082 = vmul.f32 %v1061, 0.35355338
      %v1083 = vmul.f32 %v1064, 0.35355338
      %v1084 = vmul.f32 %v1067, 0.35355338
      %v1085 = vmul.f32 %v1070, 0.35355338
      %v1086 = vmul.f32 %v1073, 0.35355338
      %v1087 = vmul.f32 %v1076, 0.35355338
      %v1088 = vmul.f32 %v1079, 0.35355338
      %v1089 = vmul.f32 %v450, %v743
      %v1090 = vmul.f32 %v453, %v746
      %v1091 = vmul.f32 %v456, %v749
      %v1092 = vmul.f32 %v459, %v752
      %v1093 = vmul.f32 %v462, %v755
      %v1094 = vmul.f32 %v465, %v758
      %v1095 = vmul.f32 %v468, %v761
      %v1096 = vmul.f32 %v471, %v764
      %v1098 = vsel %vm335, %v1089, 0
      %v1101 = vsel %vm335, %v1090, 0
      %v1104 = vsel %vm335, %v1091, 0
      %v1107 = vsel %vm335, %v1092, 0
      %v1110 = vsel %vm335, %v1093, 0
      %v1113 = vsel %vm335, %v1094, 0
      %v1116 = vsel %vm335, %v1095, 0
      %v1119 = vsel %vm335, %v1096, 0
      %1121 = vmatpush.msra.mxu0 0.0
      %1122 = vmatpush.msra.mxu0 0.0
      %1123 = vmatpush.msra.mxu0 0.0
      %1124 = vmatpush.msra.mxu0 0.0
      %1125 = vmatpush.msra.mxu0 0.0
      %1126 = vmatpush.msra.mxu0 0.0
      %1127 = vmatpush.msra.mxu0 0.0
      %1128 = vmatpush.msra.mxu0 0.0
      %1129 = vmatpush.msra.mxu0 0.0
      %1130 = vmatpush.msra.mxu0 0.0
      %1131 = vmatpush.msra.mxu0 0.0
      %1132 = vmatpush.msra.mxu0 0.0
      %1133 = vmatpush.msra.mxu0 %v910
      %1134 = vmatpush.msra.mxu0 %v909
      %1135 = vmatpush.msra.mxu0 %v908
      %1136 = vmatpush.msra.mxu0 %v907
      %1137 = vmatmul.f32.gmra.mxu0 %v1098
      %v1138 = vpop.f32.mrf.mxu0
      %v1139 = vadd.f32 0.0, %v1138
      %1140 = vmatmul.f32.gmra.mxu0 %v1101
      %v1141 = vpop.f32.mrf.mxu0
      %v1142 = vadd.f32 0.0, %v1141
      %1143 = vmatmul.f32.gmra.mxu0 %v1104
      %v1144 = vpop.f32.mrf.mxu0
      %v1145 = vadd.f32 0.0, %v1144
      %1146 = vmatmul.f32.gmra.mxu0 %v1107
      %v1147 = vpop.f32.mrf.mxu0
      %v1148 = vadd.f32 0.0, %v1147
      %1149 = vmatmul.f32.gmra.mxu0 %v1110
      %v1150 = vpop.f32.mrf.mxu0
      %v1151 = vadd.f32 0.0, %v1150
      %1152 = vmatmul.f32.gmra.mxu0 %v1113
      %v1153 = vpop.f32.mrf.mxu0
      %v1154 = vadd.f32 0.0, %v1153
      %1155 = vmatmul.f32.gmra.mxu0 %v1116
      %v1156 = vpop.f32.mrf.mxu0
      %v1157 = vadd.f32 0.0, %v1156
      %1158 = vmatmul.f32.gmra.mxu0 %v1119
      %v1159 = vpop.f32.mrf.mxu0
      %v1160 = vadd.f32 0.0, %v1159
      %1161 = vdwg.mxu0
      %v1162 = vmul.f32 %v1139, 0.35355338
      %v1163 = vmul.f32 %v1142, 0.35355338
      %v1164 = vmul.f32 %v1145, 0.35355338
      %v1165 = vmul.f32 %v1148, 0.35355338
      %v1166 = vmul.f32 %v1151, 0.35355338
      %v1167 = vmul.f32 %v1154, 0.35355338
      %v1168 = vmul.f32 %v1157, 0.35355338
      %v1169 = vmul.f32 %v1160, 0.35355338
      %v1170 = vmul.f32 %v450, %v767
      %v1171 = vmul.f32 %v453, %v770
      %v1172 = vmul.f32 %v456, %v773
      %v1173 = vmul.f32 %v459, %v776
      %v1174 = vmul.f32 %v462, %v779
      %v1175 = vmul.f32 %v465, %v782
      %v1176 = vmul.f32 %v468, %v785
      %v1177 = vmul.f32 %v471, %v788
      %v1179 = vsel %vm335, %v1170, 0
      %v1182 = vsel %vm335, %v1171, 0
      %v1185 = vsel %vm335, %v1172, 0
      %v1188 = vsel %vm335, %v1173, 0
      %v1191 = vsel %vm335, %v1174, 0
      %v1194 = vsel %vm335, %v1175, 0
      %v1197 = vsel %vm335, %v1176, 0
      %v1200 = vsel %vm335, %v1177, 0
      %1202 = vmatpush.msra.mxu0 0.0
      %1203 = vmatpush.msra.mxu0 0.0
      %1204 = vmatpush.msra.mxu0 0.0
      %1205 = vmatpush.msra.mxu0 0.0
      %1206 = vmatpush.msra.mxu0 0.0
      %1207 = vmatpush.msra.mxu0 0.0
      %1208 = vmatpush.msra.mxu0 0.0
      %1209 = vmatpush.msra.mxu0 0.0
      %1210 = vmatpush.msra.mxu0 0.0
      %1211 = vmatpush.msra.mxu0 0.0
      %1212 = vmatpush.msra.mxu0 0.0
      %1213 = vmatpush.msra.mxu0 0.0
      %1214 = vmatpush.msra.mxu0 %v910
      %1215 = vmatpush.msra.mxu0 %v909
      %1216 = vmatpush.msra.mxu0 %v908
      %1217 = vmatpush.msra.mxu0 %v907
      %1218 = vmatmul.f32.gmra.mxu0 %v1179
      %v1219 = vpop.f32.mrf.mxu0
      %v1220 = vadd.f32 0.0, %v1219
      %1221 = vmatmul.f32.gmra.mxu0 %v1182
      %v1222 = vpop.f32.mrf.mxu0
      %v1223 = vadd.f32 0.0, %v1222
      %1224 = vmatmul.f32.gmra.mxu0 %v1185
      %v1225 = vpop.f32.mrf.mxu0
      %v1226 = vadd.f32 0.0, %v1225
      %1227 = vmatmul.f32.gmra.mxu0 %v1188
      %v1228 = vpop.f32.mrf.mxu0
      %v1229 = vadd.f32 0.0, %v1228
      %1230 = vmatmul.f32.gmra.mxu0 %v1191
      %v1231 = vpop.f32.mrf.mxu0
      %v1232 = vadd.f32 0.0, %v1231
      %1233 = vmatmul.f32.gmra.mxu0 %v1194
      %v1234 = vpop.f32.mrf.mxu0
      %v1235 = vadd.f32 0.0, %v1234
      %1236 = vmatmul.f32.gmra.mxu0 %v1197
      %v1237 = vpop.f32.mrf.mxu0
      %v1238 = vadd.f32 0.0, %v1237
      %1239 = vmatmul.f32.gmra.mxu0 %v1200
      %v1240 = vpop.f32.mrf.mxu0
      %v1241 = vadd.f32 0.0, %v1240
      %1242 = vdwg.mxu0
      %v1243 = vmul.f32 %v1220, 0.35355338
      %v1244 = vmul.f32 %v1223, 0.35355338
      %v1245 = vmul.f32 %v1226, 0.35355338
      %v1246 = vmul.f32 %v1229, 0.35355338
      %v1247 = vmul.f32 %v1232, 0.35355338
      %v1248 = vmul.f32 %v1235, 0.35355338
      %v1249 = vmul.f32 %v1238, 0.35355338
      %v1250 = vmul.f32 %v1241, 0.35355338
      %v1251 = vmax.f32 %v1000, %v1081
      %v1252 = vmax.f32 %v1001, %v1082
      %v1253 = vmax.f32 %v1002, %v1083
      %v1254 = vmax.f32 %v1003, %v1084
      %v1255 = vmax.f32 %v1004, %v1085
      %v1256 = vmax.f32 %v1005, %v1086
      %v1257 = vmax.f32 %v1006, %v1087
      %v1258 = vmax.f32 %v1007, %v1088
      %v1259 = vmax.f32 %v1251, %v1162
      %v1260 = vmax.f32 %v1252, %v1163
      %v1261 = vmax.f32 %v1253, %v1164
      %v1262 = vmax.f32 %v1254, %v1165
      %v1263 = vmax.f32 %v1255, %v1166
      %v1264 = vmax.f32 %v1256, %v1167
      %v1265 = vmax.f32 %v1257, %v1168
      %v1266 = vmax.f32 %v1258, %v1169
      %v1267 = vmax.f32 %v1259, %v1243
      %v1268 = vmax.f32 %v1260, %v1244
      %v1269 = vmax.f32 %v1261, %v1245
      %v1270 = vmax.f32 %v1262, %v1246
      %v1271 = vmax.f32 %v1263, %v1247
      %v1272 = vmax.f32 %v1264, %v1248
      %v1273 = vmax.f32 %v1265, %v1249
      %v1274 = vmax.f32 %v1266, %v1250
      %v1275 = vsub.f32 %v1000, %v1267
      %v1276 = vsub.f32 %v1001, %v1268
      %v1277 = vsub.f32 %v1002, %v1269
      %v1278 = vsub.f32 %v1003, %v1270
      %v1279 = vsub.f32 %v1004, %v1271
      %v1280 = vsub.f32 %v1005, %v1272
      %v1281 = vsub.f32 %v1006, %v1273
      %v1282 = vsub.f32 %v1007, %v1274
      %v1283 = vmul.f32 %v1275, 1.442695
      %v1284 = vpow.pop %v1283
      %v1285 = vmul.f32 %v1276, 1.442695
      %v1286 = vpow.pop %v1285
      %v1287 = vmul.f32 %v1277, 1.442695
      %v1288 = vpow.pop %v1287
      %v1289 = vmul.f32 %v1278, 1.442695
      %v1290 = vpow.pop %v1289
      %v1291 = vmul.f32 %v1279, 1.442695
      %v1292 = vpow.pop %v1291
      %v1293 = vmul.f32 %v1280, 1.442695
      %v1294 = vpow.pop %v1293
      %v1295 = vmul.f32 %v1281, 1.442695
      %v1296 = vpow.pop %v1295
      %v1297 = vmul.f32 %v1282, 1.442695
      %v1298 = vpow.pop %v1297
      %v1299 = vsub.f32 %v1081, %v1267
      %v1300 = vsub.f32 %v1082, %v1268
      %v1301 = vsub.f32 %v1083, %v1269
      %v1302 = vsub.f32 %v1084, %v1270
      %v1303 = vsub.f32 %v1085, %v1271
      %v1304 = vsub.f32 %v1086, %v1272
      %v1305 = vsub.f32 %v1087, %v1273
      %v1306 = vsub.f32 %v1088, %v1274
      %v1307 = vmul.f32 %v1299, 1.442695
      %v1308 = vpow.pop %v1307
      %v1309 = vmul.f32 %v1300, 1.442695
      %v1310 = vpow.pop %v1309
      %v1311 = vmul.f32 %v1301, 1.442695
      %v1312 = vpow.pop %v1311
      %v1313 = vmul.f32 %v1302, 1.442695
      %v1314 = vpow.pop %v1313
      %v1315 = vmul.f32 %v1303, 1.442695
      %v1316 = vpow.pop %v1315
      %v1317 = vmul.f32 %v1304, 1.442695
      %v1318 = vpow.pop %v1317
      %v1319 = vmul.f32 %v1305, 1.442695
      %v1320 = vpow.pop %v1319
      %v1321 = vmul.f32 %v1306, 1.442695
      %v1322 = vpow.pop %v1321
      %v1323 = vsub.f32 %v1162, %v1267
      %v1324 = vsub.f32 %v1163, %v1268
      %v1325 = vsub.f32 %v1164, %v1269
      %v1326 = vsub.f32 %v1165, %v1270
      %v1327 = vsub.f32 %v1166, %v1271
      %v1328 = vsub.f32 %v1167, %v1272
      %v1329 = vsub.f32 %v1168, %v1273
      %v1330 = vsub.f32 %v1169, %v1274
      %v1331 = vmul.f32 %v1323, 1.442695
      %v1332 = vpow.pop %v1331
      %v1333 = vmul.f32 %v1324, 1.442695
      %v1334 = vpow.pop %v1333
      %v1335 = vmul.f32 %v1325, 1.442695
      %v1336 = vpow.pop %v1335
      %v1337 = vmul.f32 %v1326, 1.442695
      %v1338 = vpow.pop %v1337
      %v1339 = vmul.f32 %v1327, 1.442695
      %v1340 = vpow.pop %v1339
      %v1341 = vmul.f32 %v1328, 1.442695
      %v1342 = vpow.pop %v1341
      %v1343 = vmul.f32 %v1329, 1.442695
      %v1344 = vpow.pop %v1343
      %v1345 = vmul.f32 %v1330, 1.442695
      %v1346 = vpow.pop %v1345
      %v1347 = vsub.f32 %v1243, %v1267
      %v1348 = vsub.f32 %v1244, %v1268
      %v1349 = vsub.f32 %v1245, %v1269
      %v1350 = vsub.f32 %v1246, %v1270
      %v1351 = vsub.f32 %v1247, %v1271
      %v1352 = vsub.f32 %v1248, %v1272
      %v1353 = vsub.f32 %v1249, %v1273
      %v1354 = vsub.f32 %v1250, %v1274
      %v1355 = vmul.f32 %v1347, 1.442695
      %v1356 = vpow.pop %v1355
      %v1357 = vmul.f32 %v1348, 1.442695
      %v1358 = vpow.pop %v1357
      %v1359 = vmul.f32 %v1349, 1.442695
      %v1360 = vpow.pop %v1359
      %v1361 = vmul.f32 %v1350, 1.442695
      %v1362 = vpow.pop %v1361
      %v1363 = vmul.f32 %v1351, 1.442695
      %v1364 = vpow.pop %v1363
      %v1365 = vmul.f32 %v1352, 1.442695
      %v1366 = vpow.pop %v1365
      %v1367 = vmul.f32 %v1353, 1.442695
      %v1368 = vpow.pop %v1367
      %v1369 = vmul.f32 %v1354, 1.442695
      %v1370 = vpow.pop %v1369
      %v1371 = vadd.f32 %v1284, %v1308
      %v1372 = vadd.f32 %v1286, %v1310
      %v1373 = vadd.f32 %v1288, %v1312
      %v1374 = vadd.f32 %v1290, %v1314
      %v1375 = vadd.f32 %v1292, %v1316
      %v1376 = vadd.f32 %v1294, %v1318
      %v1377 = vadd.f32 %v1296, %v1320
      %v1378 = vadd.f32 %v1298, %v1322
      %v1379 = vadd.f32 %v1371, %v1332
      %v1380 = vadd.f32 %v1372, %v1334
      %v1381 = vadd.f32 %v1373, %v1336
      %v1382 = vadd.f32 %v1374, %v1338
      %v1383 = vadd.f32 %v1375, %v1340
      %v1384 = vadd.f32 %v1376, %v1342
      %v1385 = vadd.f32 %v1377, %v1344
      %v1386 = vadd.f32 %v1378, %v1346
      %v1387 = vadd.f32 %v1379, %v1356
      %v1388 = vadd.f32 %v1380, %v1358
      %v1389 = vadd.f32 %v1381, %v1360
      %v1390 = vadd.f32 %v1382, %v1362
      %v1391 = vadd.f32 %v1383, %v1364
      %v1392 = vadd.f32 %v1384, %v1366
      %v1393 = vadd.f32 %v1385, %v1368
      %v1394 = vadd.f32 %v1386, %v1370
      %v1395 = vrcp.pop %v1387
      %v1396 = vrcp.pop %v1388
      %v1397 = vrcp.pop %v1389
      %v1398 = vrcp.pop %v1390
      %v1399 = vrcp.pop %v1391
      %v1400 = vrcp.pop %v1392
      %v1401 = vrcp.pop %v1393
      %v1402 = vrcp.pop %v1394
      %v1403 = vmul.f32 %v1284, %v1395
      %v1404 = vmul.f32 %v1286, %v1396
      %v1405 = vmul.f32 %v1288, %v1397
      %v1406 = vmul.f32 %v1290, %v1398
      %v1407 = vmul.f32 %v1292, %v1399
      %v1408 = vmul.f32 %v1294, %v1400
      %v1409 = vmul.f32 %v1296, %v1401
      %v1410 = vmul.f32 %v1298, %v1402
      %v1411 = vmul.f32 %v1403, %v812
      %v1412 = vmul.f32 %v1404, %v815
      %v1413 = vmul.f32 %v1405, %v818
      %v1414 = vmul.f32 %v1406, %v821
      %v1415 = vmul.f32 %v1407, %v824
      %v1416 = vmul.f32 %v1408, %v827
      %v1417 = vmul.f32 %v1409, %v830
      %v1418 = vmul.f32 %v1410, %v833
      %v1419 = vmul.f32 %v1308, %v1395
      %v1420 = vmul.f32 %v1310, %v1396
      %v1421 = vmul.f32 %v1312, %v1397
      %v1422 = vmul.f32 %v1314, %v1398
      %v1423 = vmul.f32 %v1316, %v1399
      %v1424 = vmul.f32 %v1318, %v1400
      %v1425 = vmul.f32 %v1320, %v1401
      %v1426 = vmul.f32 %v1322, %v1402
      %v1427 = vmul.f32 %v1419, %v836
      %v1428 = vmul.f32 %v1420, %v839
      %v1429 = vmul.f32 %v1421, %v842
      %v1430 = vmul.f32 %v1422, %v845
      %v1431 = vmul.f32 %v1423, %v848
      %v1432 = vmul.f32 %v1424, %v851
      %v1433 = vmul.f32 %v1425, %v854
      %v1434 = vmul.f32 %v1426, %v857
      %v1435 = vadd.f32 %v1411, %v1427
      %v1436 = vadd.f32 %v1412, %v1428
      %v1437 = vadd.f32 %v1413, %v1429
      %v1438 = vadd.f32 %v1414, %v1430
      %v1439 = vadd.f32 %v1415, %v1431
      %v1440 = vadd.f32 %v1416, %v1432
      %v1441 = vadd.f32 %v1417, %v1433
      %v1442 = vadd.f32 %v1418, %v1434
      %v1443 = vmul.f32 %v1332, %v1395
      %v1444 = vmul.f32 %v1334, %v1396
      %v1445 = vmul.f32 %v1336, %v1397
      %v1446 = vmul.f32 %v1338, %v1398
      %v1447 = vmul.f32 %v1340, %v1399
      %v1448 = vmul.f32 %v1342, %v1400
      %v1449 = vmul.f32 %v1344, %v1401
      %v1450 = vmul.f32 %v1346, %v1402
      %v1451 = vmul.f32 %v1443, %v860
      %v1452 = vmul.f32 %v1444, %v863
      %v1453 = vmul.f32 %v1445, %v866
      %v1454 = vmul.f32 %v1446, %v869
      %v1455 = vmul.f32 %v1447, %v872
      %v1456 = vmul.f32 %v1448, %v875
      %v1457 = vmul.f32 %v1449, %v878
      %v1458 = vmul.f32 %v1450, %v881
      %v1459 = vadd.f32 %v1435, %v1451
      %v1460 = vadd.f32 %v1436, %v1452
      %v1461 = vadd.f32 %v1437, %v1453
      %v1462 = vadd.f32 %v1438, %v1454
      %v1463 = vadd.f32 %v1439, %v1455
      %v1464 = vadd.f32 %v1440, %v1456
      %v1465 = vadd.f32 %v1441, %v1457
      %v1466 = vadd.f32 %v1442, %v1458
      %v1467 = vmul.f32 %v1356, %v1395
      %v1468 = vmul.f32 %v1358, %v1396
      %v1469 = vmul.f32 %v1360, %v1397
      %v1470 = vmul.f32 %v1362, %v1398
      %v1471 = vmul.f32 %v1364, %v1399
      %v1472 = vmul.f32 %v1366, %v1400
      %v1473 = vmul.f32 %v1368, %v1401
      %v1474 = vmul.f32 %v1370, %v1402
      %v1475 = vmul.f32 %v1467, %v884
      %v1476 = vmul.f32 %v1468, %v887
      %v1477 = vmul.f32 %v1469, %v890
      %v1478 = vmul.f32 %v1470, %v893
      %v1479 = vmul.f32 %v1471, %v896
      %v1480 = vmul.f32 %v1472, %v899
      %v1481 = vmul.f32 %v1473, %v902
      %v1482 = vmul.f32 %v1474, %v905
      %v1483 = vadd.f32 %v1459, %v1475
      %v1484 = vadd.f32 %v1460, %v1476
      %v1485 = vadd.f32 %v1461, %v1477
      %v1486 = vadd.f32 %v1462, %v1478
      %v1487 = vadd.f32 %v1463, %v1479
      %v1488 = vadd.f32 %v1464, %v1480
      %v1489 = vadd.f32 %v1465, %v1481
      %v1490 = vadd.f32 %v1466, %v1482
      %v1491 = vmul.f32 %v474, %v695
      %v1492 = vmul.f32 %v477, %v698
      %v1493 = vmul.f32 %v480, %v701
      %v1494 = vmul.f32 %v483, %v704
      %v1495 = vmul.f32 %v486, %v707
      %v1496 = vmul.f32 %v489, %v710
      %v1497 = vmul.f32 %v492, %v713
      %v1498 = vmul.f32 %v495, %v716
      %v1500 = vsel %vm335, %v1491, 0
      %v1503 = vsel %vm335, %v1492, 0
      %v1506 = vsel %vm335, %v1493, 0
      %v1509 = vsel %vm335, %v1494, 0
      %v1512 = vsel %vm335, %v1495, 0
      %v1515 = vsel %vm335, %v1496, 0
      %v1518 = vsel %vm335, %v1497, 0
      %v1521 = vsel %vm335, %v1498, 0
      %1523 = vmatpush.msra.mxu0 0.0
      %1524 = vmatpush.msra.mxu0 0.0
      %1525 = vmatpush.msra.mxu0 0.0
      %1526 = vmatpush.msra.mxu0 0.0
      %1527 = vmatpush.msra.mxu0 0.0
      %1528 = vmatpush.msra.mxu0 0.0
      %1529 = vmatpush.msra.mxu0 0.0
      %1530 = vmatpush.msra.mxu0 0.0
      %1531 = vmatpush.msra.mxu0 0.0
      %1532 = vmatpush.msra.mxu0 0.0
      %1533 = vmatpush.msra.mxu0 0.0
      %1534 = vmatpush.msra.mxu0 0.0
      %1535 = vmatpush.msra.mxu0 %v910
      %1536 = vmatpush.msra.mxu0 %v909
      %1537 = vmatpush.msra.mxu0 %v908
      %1538 = vmatpush.msra.mxu0 %v907
      %1539 = vmatmul.f32.gmra.mxu0 %v1500
      %v1540 = vpop.f32.mrf.mxu0
      %v1541 = vadd.f32 0.0, %v1540
      %1542 = vmatmul.f32.gmra.mxu0 %v1503
      %v1543 = vpop.f32.mrf.mxu0
      %v1544 = vadd.f32 0.0, %v1543
      %1545 = vmatmul.f32.gmra.mxu0 %v1506
      %v1546 = vpop.f32.mrf.mxu0
      %v1547 = vadd.f32 0.0, %v1546
      %1548 = vmatmul.f32.gmra.mxu0 %v1509
      %v1549 = vpop.f32.mrf.mxu0
      %v1550 = vadd.f32 0.0, %v1549
      %1551 = vmatmul.f32.gmra.mxu0 %v1512
      %v1552 = vpop.f32.mrf.mxu0
      %v1553 = vadd.f32 0.0, %v1552
      %1554 = vmatmul.f32.gmra.mxu0 %v1515
      %v1555 = vpop.f32.mrf.mxu0
      %v1556 = vadd.f32 0.0, %v1555
      %1557 = vmatmul.f32.gmra.mxu0 %v1518
      %v1558 = vpop.f32.mrf.mxu0
      %v1559 = vadd.f32 0.0, %v1558
      %1560 = vmatmul.f32.gmra.mxu0 %v1521
      %v1561 = vpop.f32.mrf.mxu0
      %v1562 = vadd.f32 0.0, %v1561
      %1563 = vdwg.mxu0
      %v1564 = vmul.f32 %v1541, 0.35355338
      %v1565 = vmul.f32 %v1544, 0.35355338
      %v1566 = vmul.f32 %v1547, 0.35355338
      %v1567 = vmul.f32 %v1550, 0.35355338
      %v1568 = vmul.f32 %v1553, 0.35355338
      %v1569 = vmul.f32 %v1556, 0.35355338
      %v1570 = vmul.f32 %v1559, 0.35355338
      %v1571 = vmul.f32 %v1562, 0.35355338
      %v1572 = vmul.f32 %v474, %v719
      %v1573 = vmul.f32 %v477, %v722
      %v1574 = vmul.f32 %v480, %v725
      %v1575 = vmul.f32 %v483, %v728
      %v1576 = vmul.f32 %v486, %v731
      %v1577 = vmul.f32 %v489, %v734
      %v1578 = vmul.f32 %v492, %v737
      %v1579 = vmul.f32 %v495, %v740
      %v1581 = vsel %vm335, %v1572, 0
      %v1584 = vsel %vm335, %v1573, 0
      %v1587 = vsel %vm335, %v1574, 0
      %v1590 = vsel %vm335, %v1575, 0
      %v1593 = vsel %vm335, %v1576, 0
      %v1596 = vsel %vm335, %v1577, 0
      %v1599 = vsel %vm335, %v1578, 0
      %v1602 = vsel %vm335, %v1579, 0
      %1604 = vmatpush.msra.mxu0 0.0
      %1605 = vmatpush.msra.mxu0 0.0
      %1606 = vmatpush.msra.mxu0 0.0
      %1607 = vmatpush.msra.mxu0 0.0
      %1608 = vmatpush.msra.mxu0 0.0
      %1609 = vmatpush.msra.mxu0 0.0
      %1610 = vmatpush.msra.mxu0 0.0
      %1611 = vmatpush.msra.mxu0 0.0
      %1612 = vmatpush.msra.mxu0 0.0
      %1613 = vmatpush.msra.mxu0 0.0
      %1614 = vmatpush.msra.mxu0 0.0
      %1615 = vmatpush.msra.mxu0 0.0
      %1616 = vmatpush.msra.mxu0 %v910
      %1617 = vmatpush.msra.mxu0 %v909
      %1618 = vmatpush.msra.mxu0 %v908
      %1619 = vmatpush.msra.mxu0 %v907
      %1620 = vmatmul.f32.gmra.mxu0 %v1581
      %v1621 = vpop.f32.mrf.mxu0
      %v1622 = vadd.f32 0.0, %v1621
      %1623 = vmatmul.f32.gmra.mxu0 %v1584
      %v1624 = vpop.f32.mrf.mxu0
      %v1625 = vadd.f32 0.0, %v1624
      %1626 = vmatmul.f32.gmra.mxu0 %v1587
      %v1627 = vpop.f32.mrf.mxu0
      %v1628 = vadd.f32 0.0, %v1627
      %1629 = vmatmul.f32.gmra.mxu0 %v1590
      %v1630 = vpop.f32.mrf.mxu0
      %v1631 = vadd.f32 0.0, %v1630
      %1632 = vmatmul.f32.gmra.mxu0 %v1593
      %v1633 = vpop.f32.mrf.mxu0
      %v1634 = vadd.f32 0.0, %v1633
      %1635 = vmatmul.f32.gmra.mxu0 %v1596
      %v1636 = vpop.f32.mrf.mxu0
      %v1637 = vadd.f32 0.0, %v1636
      %1638 = vmatmul.f32.gmra.mxu0 %v1599
      %v1639 = vpop.f32.mrf.mxu0
      %v1640 = vadd.f32 0.0, %v1639
      %1641 = vmatmul.f32.gmra.mxu0 %v1602
      %v1642 = vpop.f32.mrf.mxu0
      %v1643 = vadd.f32 0.0, %v1642
      %1644 = vdwg.mxu0
      %v1645 = vmul.f32 %v1622, 0.35355338
      %v1646 = vmul.f32 %v1625, 0.35355338
      %v1647 = vmul.f32 %v1628, 0.35355338
      %v1648 = vmul.f32 %v1631, 0.35355338
      %v1649 = vmul.f32 %v1634, 0.35355338
      %v1650 = vmul.f32 %v1637, 0.35355338
      %v1651 = vmul.f32 %v1640, 0.35355338
      %v1652 = vmul.f32 %v1643, 0.35355338
      %v1653 = vmul.f32 %v474, %v743
      %v1654 = vmul.f32 %v477, %v746
      %v1655 = vmul.f32 %v480, %v749
      %v1656 = vmul.f32 %v483, %v752
      %v1657 = vmul.f32 %v486, %v755
      %v1658 = vmul.f32 %v489, %v758
      %v1659 = vmul.f32 %v492, %v761
      %v1660 = vmul.f32 %v495, %v764
      %v1662 = vsel %vm335, %v1653, 0
      %v1665 = vsel %vm335, %v1654, 0
      %v1668 = vsel %vm335, %v1655, 0
      %v1671 = vsel %vm335, %v1656, 0
      %v1674 = vsel %vm335, %v1657, 0
      %v1677 = vsel %vm335, %v1658, 0
      %v1680 = vsel %vm335, %v1659, 0
      %v1683 = vsel %vm335, %v1660, 0
      %1685 = vmatpush.msra.mxu0 0.0
      %1686 = vmatpush.msra.mxu0 0.0
      %1687 = vmatpush.msra.mxu0 0.0
      %1688 = vmatpush.msra.mxu0 0.0
      %1689 = vmatpush.msra.mxu0 0.0
      %1690 = vmatpush.msra.mxu0 0.0
      %1691 = vmatpush.msra.mxu0 0.0
      %1692 = vmatpush.msra.mxu0 0.0
      %1693 = vmatpush.msra.mxu0 0.0
      %1694 = vmatpush.msra.mxu0 0.0
      %1695 = vmatpush.msra.mxu0 0.0
      %1696 = vmatpush.msra.mxu0 0.0
      %1697 = vmatpush.msra.mxu0 %v910
      %1698 = vmatpush.msra.mxu0 %v909
      %1699 = vmatpush.msra.mxu0 %v908
      %1700 = vmatpush.msra.mxu0 %v907
      %1701 = vmatmul.f32.gmra.mxu0 %v1662
      %v1702 = vpop.f32.mrf.mxu0
      %v1703 = vadd.f32 0.0, %v1702
      %1704 = vmatmul.f32.gmra.mxu0 %v1665
      %v1705 = vpop.f32.mrf.mxu0
      %v1706 = vadd.f32 0.0, %v1705
      %1707 = vmatmul.f32.gmra.mxu0 %v1668
      %v1708 = vpop.f32.mrf.mxu0
      %v1709 = vadd.f32 0.0, %v1708
      %1710 = vmatmul.f32.gmra.mxu0 %v1671
      %v1711 = vpop.f32.mrf.mxu0
      %v1712 = vadd.f32 0.0, %v1711
      %1713 = vmatmul.f32.gmra.mxu0 %v1674
      %v1714 = vpop.f32.mrf.mxu0
      %v1715 = vadd.f32 0.0, %v1714
      %1716 = vmatmul.f32.gmra.mxu0 %v1677
      %v1717 = vpop.f32.mrf.mxu0
      %v1718 = vadd.f32 0.0, %v1717
      %1719 = vmatmul.f32.gmra.mxu0 %v1680
      %v1720 = vpop.f32.mrf.mxu0
      %v1721 = vadd.f32 0.0, %v1720
      %1722 = vmatmul.f32.gmra.mxu0 %v1683
      %v1723 = vpop.f32.mrf.mxu0
      %v1724 = vadd.f32 0.0, %v1723
      %1725 = vdwg.mxu0
      %v1726 = vmul.f32 %v1703, 0.35355338
      %v1727 = vmul.f32 %v1706, 0.35355338
      %v1728 = vmul.f32 %v1709, 0.35355338
      %v1729 = vmul.f32 %v1712, 0.35355338
      %v1730 = vmul.f32 %v1715, 0.35355338
      %v1731 = vmul.f32 %v1718, 0.35355338
      %v1732 = vmul.f32 %v1721, 0.35355338
      %v1733 = vmul.f32 %v1724, 0.35355338
      %v1734 = vmul.f32 %v474, %v767
      %v1735 = vmul.f32 %v477, %v770
      %v1736 = vmul.f32 %v480, %v773
      %v1737 = vmul.f32 %v483, %v776
      %v1738 = vmul.f32 %v486, %v779
      %v1739 = vmul.f32 %v489, %v782
      %v1740 = vmul.f32 %v492, %v785
      %v1741 = vmul.f32 %v495, %v788
      %v1743 = vsel %vm335, %v1734, 0
      %v1746 = vsel %vm335, %v1735, 0
      %v1749 = vsel %vm335, %v1736, 0
      %v1752 = vsel %vm335, %v1737, 0
      %v1755 = vsel %vm335, %v1738, 0
      %v1758 = vsel %vm335, %v1739, 0
      %v1761 = vsel %vm335, %v1740, 0
      %v1764 = vsel %vm335, %v1741, 0
      %1766 = vmatpush.msra.mxu0 0.0
      %1767 = vmatpush.msra.mxu0 0.0
      %1768 = vmatpush.msra.mxu0 0.0
      %1769 = vmatpush.msra.mxu0 0.0
      %1770 = vmatpush.msra.mxu0 0.0
      %1771 = vmatpush.msra.mxu0 0.0
      %1772 = vmatpush.msra.mxu0 0.0
      %1773 = vmatpush.msra.mxu0 0.0
      %1774 = vmatpush.msra.mxu0 0.0
      %1775 = vmatpush.msra.mxu0 0.0
      %1776 = vmatpush.msra.mxu0 0.0
      %1777 = vmatpush.msra.mxu0 0.0
      %1778 = vmatpush.msra.mxu0 %v910
      %1779 = vmatpush.msra.mxu0 %v909
      %1780 = vmatpush.msra.mxu0 %v908
      %1781 = vmatpush.msra.mxu0 %v907
      %1782 = vmatmul.f32.gmra.mxu0 %v1743
      %v1783 = vpop.f32.mrf.mxu0
      %v1784 = vadd.f32 0.0, %v1783
      %1785 = vmatmul.f32.gmra.mxu0 %v1746
      %v1786 = vpop.f32.mrf.mxu0
      %v1787 = vadd.f32 0.0, %v1786
      %1788 = vmatmul.f32.gmra.mxu0 %v1749
      %v1789 = vpop.f32.mrf.mxu0
      %v1790 = vadd.f32 0.0, %v1789
      %1791 = vmatmul.f32.gmra.mxu0 %v1752
      %v1792 = vpop.f32.mrf.mxu0
      %v1793 = vadd.f32 0.0, %v1792
      %1794 = vmatmul.f32.gmra.mxu0 %v1755
      %v1795 = vpop.f32.mrf.mxu0
      %v1796 = vadd.f32 0.0, %v1795
      %1797 = vmatmul.f32.gmra.mxu0 %v1758
      %v1798 = vpop.f32.mrf.mxu0
      %v1799 = vadd.f32 0.0, %v1798
      %1800 = vmatmul.f32.gmra.mxu0 %v1761
      %v1801 = vpop.f32.mrf.mxu0
      %v1802 = vadd.f32 0.0, %v1801
      %1803 = vmatmul.f32.gmra.mxu0 %v1764
      %v1804 = vpop.f32.mrf.mxu0
      %v1805 = vadd.f32 0.0, %v1804
      %1806 = vdwg.mxu0
      %v1807 = vmul.f32 %v1784, 0.35355338
      %v1808 = vmul.f32 %v1787, 0.35355338
      %v1809 = vmul.f32 %v1790, 0.35355338
      %v1810 = vmul.f32 %v1793, 0.35355338
      %v1811 = vmul.f32 %v1796, 0.35355338
      %v1812 = vmul.f32 %v1799, 0.35355338
      %v1813 = vmul.f32 %v1802, 0.35355338
      %v1814 = vmul.f32 %v1805, 0.35355338
      %v1815 = vmax.f32 %v1564, %v1645
      %v1816 = vmax.f32 %v1565, %v1646
      %v1817 = vmax.f32 %v1566, %v1647
      %v1818 = vmax.f32 %v1567, %v1648
      %v1819 = vmax.f32 %v1568, %v1649
      %v1820 = vmax.f32 %v1569, %v1650
      %v1821 = vmax.f32 %v1570, %v1651
      %v1822 = vmax.f32 %v1571, %v1652
      %v1823 = vmax.f32 %v1815, %v1726
      %v1824 = vmax.f32 %v1816, %v1727
      %v1825 = vmax.f32 %v1817, %v1728
      %v1826 = vmax.f32 %v1818, %v1729
      %v1827 = vmax.f32 %v1819, %v1730
      %v1828 = vmax.f32 %v1820, %v1731
      %v1829 = vmax.f32 %v1821, %v1732
      %v1830 = vmax.f32 %v1822, %v1733
      %v1831 = vmax.f32 %v1823, %v1807
      %v1832 = vmax.f32 %v1824, %v1808
      %v1833 = vmax.f32 %v1825, %v1809
      %v1834 = vmax.f32 %v1826, %v1810
      %v1835 = vmax.f32 %v1827, %v1811
      %v1836 = vmax.f32 %v1828, %v1812
      %v1837 = vmax.f32 %v1829, %v1813
      %v1838 = vmax.f32 %v1830, %v1814
      %v1839 = vsub.f32 %v1564, %v1831
      %v1840 = vsub.f32 %v1565, %v1832
      %v1841 = vsub.f32 %v1566, %v1833
      %v1842 = vsub.f32 %v1567, %v1834
      %v1843 = vsub.f32 %v1568, %v1835
      %v1844 = vsub.f32 %v1569, %v1836
      %v1845 = vsub.f32 %v1570, %v1837
      %v1846 = vsub.f32 %v1571, %v1838
      %v1847 = vmul.f32 %v1839, 1.442695
      %v1848 = vpow.pop %v1847
      %v1849 = vmul.f32 %v1840, 1.442695
      %v1850 = vpow.pop %v1849
      %v1851 = vmul.f32 %v1841, 1.442695
      %v1852 = vpow.pop %v1851
      %v1853 = vmul.f32 %v1842, 1.442695
      %v1854 = vpow.pop %v1853
      %v1855 = vmul.f32 %v1843, 1.442695
      %v1856 = vpow.pop %v1855
      %v1857 = vmul.f32 %v1844, 1.442695
      %v1858 = vpow.pop %v1857
      %v1859 = vmul.f32 %v1845, 1.442695
      %v1860 = vpow.pop %v1859
      %v1861 = vmul.f32 %v1846, 1.442695
      %v1862 = vpow.pop %v1861
      %v1863 = vsub.f32 %v1645, %v1831
      %v1864 = vsub.f32 %v1646, %v1832
      %v1865 = vsub.f32 %v1647, %v1833
      %v1866 = vsub.f32 %v1648, %v1834
      %v1867 = vsub.f32 %v1649, %v1835
      %v1868 = vsub.f32 %v1650, %v1836
      %v1869 = vsub.f32 %v1651, %v1837
      %v1870 = vsub.f32 %v1652, %v1838
      %v1871 = vmul.f32 %v1863, 1.442695
      %v1872 = vpow.pop %v1871
      %v1873 = vmul.f32 %v1864, 1.442695
      %v1874 = vpow.pop %v1873
      %v1875 = vmul.f32 %v1865, 1.442695
      %v1876 = vpow.pop %v1875
      %v1877 = vmul.f32 %v1866, 1.442695
      %v1878 = vpow.pop %v1877
      %v1879 = vmul.f32 %v1867, 1.442695
      %v1880 = vpow.pop %v1879
      %v1881 = vmul.f32 %v1868, 1.442695
      %v1882 = vpow.pop %v1881
      %v1883 = vmul.f32 %v1869, 1.442695
      %v1884 = vpow.pop %v1883
      %v1885 = vmul.f32 %v1870, 1.442695
      %v1886 = vpow.pop %v1885
      %v1887 = vsub.f32 %v1726, %v1831
      %v1888 = vsub.f32 %v1727, %v1832
      %v1889 = vsub.f32 %v1728, %v1833
      %v1890 = vsub.f32 %v1729, %v1834
      %v1891 = vsub.f32 %v1730, %v1835
      %v1892 = vsub.f32 %v1731, %v1836
      %v1893 = vsub.f32 %v1732, %v1837
      %v1894 = vsub.f32 %v1733, %v1838
      %v1895 = vmul.f32 %v1887, 1.442695
      %v1896 = vpow.pop %v1895
      %v1897 = vmul.f32 %v1888, 1.442695
      %v1898 = vpow.pop %v1897
      %v1899 = vmul.f32 %v1889, 1.442695
      %v1900 = vpow.pop %v1899
      %v1901 = vmul.f32 %v1890, 1.442695
      %v1902 = vpow.pop %v1901
      %v1903 = vmul.f32 %v1891, 1.442695
      %v1904 = vpow.pop %v1903
      %v1905 = vmul.f32 %v1892, 1.442695
      %v1906 = vpow.pop %v1905
      %v1907 = vmul.f32 %v1893, 1.442695
      %v1908 = vpow.pop %v1907
      %v1909 = vmul.f32 %v1894, 1.442695
      %v1910 = vpow.pop %v1909
      %v1911 = vsub.f32 %v1807, %v1831
      %v1912 = vsub.f32 %v1808, %v1832
      %v1913 = vsub.f32 %v1809, %v1833
      %v1914 = vsub.f32 %v1810, %v1834
      %v1915 = vsub.f32 %v1811, %v1835
      %v1916 = vsub.f32 %v1812, %v1836
      %v1917 = vsub.f32 %v1813, %v1837
      %v1918 = vsub.f32 %v1814, %v1838
      %v1919 = vmul.f32 %v1911, 1.442695
      %v1920 = vpow.pop %v1919
      %v1921 = vmul.f32 %v1912, 1.442695
      %v1922 = vpow.pop %v1921
      %v1923 = vmul.f32 %v1913, 1.442695
      %v1924 = vpow.pop %v1923
      %v1925 = vmul.f32 %v1914, 1.442695
      %v1926 = vpow.pop %v1925
      %v1927 = vmul.f32 %v1915, 1.442695
      %v1928 = vpow.pop %v1927
      %v1929 = vmul.f32 %v1916, 1.442695
      %v1930 = vpow.pop %v1929
      %v1931 = vmul.f32 %v1917, 1.442695
      %v1932 = vpow.pop %v1931
      %v1933 = vmul.f32 %v1918, 1.442695
      %v1934 = vpow.pop %v1933
      %v1935 = vadd.f32 %v1848, %v1872
      %v1936 = vadd.f32 %v1850, %v1874
      %v1937 = vadd.f32 %v1852, %v1876
      %v1938 = vadd.f32 %v1854, %v1878
      %v1939 = vadd.f32 %v1856, %v1880
      %v1940 = vadd.f32 %v1858, %v1882
      %v1941 = vadd.f32 %v1860, %v1884
      %v1942 = vadd.f32 %v1862, %v1886
      %v1943 = vadd.f32 %v1935, %v1896
      %v1944 = vadd.f32 %v1936, %v1898
      %v1945 = vadd.f32 %v1937, %v1900
      %v1946 = vadd.f32 %v1938, %v1902
      %v1947 = vadd.f32 %v1939, %v1904
      %v1948 = vadd.f32 %v1940, %v1906
      %v1949 = vadd.f32 %v1941, %v1908
      %v1950 = vadd.f32 %v1942, %v1910
      %v1951 = vadd.f32 %v1943, %v1920
      %v1952 = vadd.f32 %v1944, %v1922
      %v1953 = vadd.f32 %v1945, %v1924
      %v1954 = vadd.f32 %v1946, %v1926
      %v1955 = vadd.f32 %v1947, %v1928
      %v1956 = vadd.f32 %v1948, %v1930
      %v1957 = vadd.f32 %v1949, %v1932
      %v1958 = vadd.f32 %v1950, %v1934
      %v1959 = vrcp.pop %v1951
      %v1960 = vrcp.pop %v1952
      %v1961 = vrcp.pop %v1953
      %v1962 = vrcp.pop %v1954
      %v1963 = vrcp.pop %v1955
      %v1964 = vrcp.pop %v1956
      %v1965 = vrcp.pop %v1957
      %v1966 = vrcp.pop %v1958
      %v1967 = vmul.f32 %v1848, %v1959
      %v1968 = vmul.f32 %v1850, %v1960
      %v1969 = vmul.f32 %v1852, %v1961
      %v1970 = vmul.f32 %v1854, %v1962
      %v1971 = vmul.f32 %v1856, %v1963
      %v1972 = vmul.f32 %v1858, %v1964
      %v1973 = vmul.f32 %v1860, %v1965
      %v1974 = vmul.f32 %v1862, %v1966
      %v1975 = vmul.f32 %v1967, %v812
      %v1976 = vmul.f32 %v1968, %v815
      %v1977 = vmul.f32 %v1969, %v818
      %v1978 = vmul.f32 %v1970, %v821
      %v1979 = vmul.f32 %v1971, %v824
      %v1980 = vmul.f32 %v1972, %v827
      %v1981 = vmul.f32 %v1973, %v830
      %v1982 = vmul.f32 %v1974, %v833
      %v1983 = vmul.f32 %v1872, %v1959
      %v1984 = vmul.f32 %v1874, %v1960
      %v1985 = vmul.f32 %v1876, %v1961
      %v1986 = vmul.f32 %v1878, %v1962
      %v1987 = vmul.f32 %v1880, %v1963
      %v1988 = vmul.f32 %v1882, %v1964
      %v1989 = vmul.f32 %v1884, %v1965
      %v1990 = vmul.f32 %v1886, %v1966
      %v1991 = vmul.f32 %v1983, %v836
      %v1992 = vmul.f32 %v1984, %v839
      %v1993 = vmul.f32 %v1985, %v842
      %v1994 = vmul.f32 %v1986, %v845
      %v1995 = vmul.f32 %v1987, %v848
      %v1996 = vmul.f32 %v1988, %v851
      %v1997 = vmul.f32 %v1989, %v854
      %v1998 = vmul.f32 %v1990, %v857
      %v1999 = vadd.f32 %v1975, %v1991
      %v2000 = vadd.f32 %v1976, %v1992
      %v2001 = vadd.f32 %v1977, %v1993
      %v2002 = vadd.f32 %v1978, %v1994
      %v2003 = vadd.f32 %v1979, %v1995
      %v2004 = vadd.f32 %v1980, %v1996
      %v2005 = vadd.f32 %v1981, %v1997
      %v2006 = vadd.f32 %v1982, %v1998
      %v2007 = vmul.f32 %v1896, %v1959
      %v2008 = vmul.f32 %v1898, %v1960
      %v2009 = vmul.f32 %v1900, %v1961
      %v2010 = vmul.f32 %v1902, %v1962
      %v2011 = vmul.f32 %v1904, %v1963
      %v2012 = vmul.f32 %v1906, %v1964
      %v2013 = vmul.f32 %v1908, %v1965
      %v2014 = vmul.f32 %v1910, %v1966
      %v2015 = vmul.f32 %v2007, %v860
      %v2016 = vmul.f32 %v2008, %v863
      %v2017 = vmul.f32 %v2009, %v866
      %v2018 = vmul.f32 %v2010, %v869
      %v2019 = vmul.f32 %v2011, %v872
      %v2020 = vmul.f32 %v2012, %v875
      %v2021 = vmul.f32 %v2013, %v878
      %v2022 = vmul.f32 %v2014, %v881
      %v2023 = vadd.f32 %v1999, %v2015
      %v2024 = vadd.f32 %v2000, %v2016
      %v2025 = vadd.f32 %v2001, %v2017
      %v2026 = vadd.f32 %v2002, %v2018
      %v2027 = vadd.f32 %v2003, %v2019
      %v2028 = vadd.f32 %v2004, %v2020
      %v2029 = vadd.f32 %v2005, %v2021
      %v2030 = vadd.f32 %v2006, %v2022
      %v2031 = vmul.f32 %v1920, %v1959
      %v2032 = vmul.f32 %v1922, %v1960
      %v2033 = vmul.f32 %v1924, %v1961
      %v2034 = vmul.f32 %v1926, %v1962
      %v2035 = vmul.f32 %v1928, %v1963
      %v2036 = vmul.f32 %v1930, %v1964
      %v2037 = vmul.f32 %v1932, %v1965
      %v2038 = vmul.f32 %v1934, %v1966
      %v2039 = vmul.f32 %v2031, %v884
      %v2040 = vmul.f32 %v2032, %v887
      %v2041 = vmul.f32 %v2033, %v890
      %v2042 = vmul.f32 %v2034, %v893
      %v2043 = vmul.f32 %v2035, %v896
      %v2044 = vmul.f32 %v2036, %v899
      %v2045 = vmul.f32 %v2037, %v902
      %v2046 = vmul.f32 %v2038, %v905
      %v2047 = vadd.f32 %v2023, %v2039
      %v2048 = vadd.f32 %v2024, %v2040
      %v2049 = vadd.f32 %v2025, %v2041
      %v2050 = vadd.f32 %v2026, %v2042
      %v2051 = vadd.f32 %v2027, %v2043
      %v2052 = vadd.f32 %v2028, %v2044
      %v2053 = vadd.f32 %v2029, %v2045
      %v2054 = vadd.f32 %v2030, %v2046
      %v2056 = vsel %vm335, %v2047, 0
      %v2059 = vsel %vm335, %v2048, 0
      %v2062 = vsel %vm335, %v2049, 0
      %v2065 = vsel %vm335, %v2050, 0
      %v2068 = vsel %vm335, %v2051, 0
      %v2071 = vsel %vm335, %v2052, 0
      %v2074 = vsel %vm335, %v2053, 0
      %v2077 = vsel %vm335, %v2054, 0
      %2079 = vmatpush.msra.mxu0 0.0
      %2080 = vmatpush.msra.mxu0 0.0
      %2081 = vmatpush.msra.mxu0 0.0
      %2082 = vmatpush.msra.mxu0 0.0
      %2083 = vmatpush.msra.mxu0 0.0
      %2084 = vmatpush.msra.mxu0 0.0
      %2085 = vmatpush.msra.mxu0 0.0
      %2086 = vmatpush.msra.mxu0 0.0
      %2087 = vmatpush.msra.mxu0 0.0
      %2088 = vmatpush.msra.mxu0 0.0
      %2089 = vmatpush.msra.mxu0 0.0
      %2090 = vmatpush.msra.mxu0 0.0
      %2091 = vmatpush.msra.mxu0 %v918
      %2092 = vmatpush.msra.mxu0 %v917
      %2093 = vmatpush.msra.mxu0 %v916
      %2094 = vmatpush.msra.mxu0 %v915
      %2095 = vmatmul.f32.gmra.mxu0 %v2056
      %v2096 = vpop.f32.mrf.mxu0
      %v2097 = vadd.f32 0.0, %v2096
      %2098 = vmatmul.f32.gmra.mxu0 %v2059
      %v2099 = vpop.f32.mrf.mxu0
      %v2100 = vadd.f32 0.0, %v2099
      %2101 = vmatmul.f32.gmra.mxu0 %v2062
      %v2102 = vpop.f32.mrf.mxu0
      %v2103 = vadd.f32 0.0, %v2102
      %2104 = vmatmul.f32.gmra.mxu0 %v2065
      %v2105 = vpop.f32.mrf.mxu0
      %v2106 = vadd.f32 0.0, %v2105
      %2107 = vmatmul.f32.gmra.mxu0 %v2068
      %v2108 = vpop.f32.mrf.mxu0
      %v2109 = vadd.f32 0.0, %v2108
      %2110 = vmatmul.f32.gmra.mxu0 %v2071
      %v2111 = vpop.f32.mrf.mxu0
      %v2112 = vadd.f32 0.0, %v2111
      %2113 = vmatmul.f32.gmra.mxu0 %v2074
      %v2114 = vpop.f32.mrf.mxu0
      %v2115 = vadd.f32 0.0, %v2114
      %2116 = vmatmul.f32.gmra.mxu0 %v2077
      %v2117 = vpop.f32.mrf.mxu0
      %v2118 = vadd.f32 0.0, %v2117
      %2119 = vdwg.mxu0
      %v2121 = vsel %vm335, %v1483, 0
      %v2124 = vsel %vm335, %v1484, 0
      %v2127 = vsel %vm335, %v1485, 0
      %v2130 = vsel %vm335, %v1486, 0
      %v2133 = vsel %vm335, %v1487, 0
      %v2136 = vsel %vm335, %v1488, 0
      %v2139 = vsel %vm335, %v1489, 0
      %v2142 = vsel %vm335, %v1490, 0
      %2144 = vmatpush.msra.mxu0 0.0
      %2145 = vmatpush.msra.mxu0 0.0
      %2146 = vmatpush.msra.mxu0 0.0
      %2147 = vmatpush.msra.mxu0 0.0
      %2148 = vmatpush.msra.mxu0 0.0
      %2149 = vmatpush.msra.mxu0 0.0
      %2150 = vmatpush.msra.mxu0 0.0
      %2151 = vmatpush.msra.mxu0 0.0
      %2152 = vmatpush.msra.mxu0 0.0
      %2153 = vmatpush.msra.mxu0 0.0
      %2154 = vmatpush.msra.mxu0 0.0
      %2155 = vmatpush.msra.mxu0 0.0
      %2156 = vmatpush.msra.mxu0 %v914
      %2157 = vmatpush.msra.mxu0 %v913
      %2158 = vmatpush.msra.mxu0 %v912
      %2159 = vmatpush.msra.mxu0 %v911
      %2160 = vmatmul.f32.gmra.mxu0 %v2121
      %v2161 = vpop.f32.mrf.mxu0
      %v2162 = vadd.f32 %v2097, %v2161
      %2163 = vmatmul.f32.gmra.mxu0 %v2124
      %v2164 = vpop.f32.mrf.mxu0
      %v2165 = vadd.f32 %v2100, %v2164
      %2166 = vmatmul.f32.gmra.mxu0 %v2127
      %v2167 = vpop.f32.mrf.mxu0
      %v2168 = vadd.f32 %v2103, %v2167
      %2169 = vmatmul.f32.gmra.mxu0 %v2130
      %v2170 = vpop.f32.mrf.mxu0
      %v2171 = vadd.f32 %v2106, %v2170
      %2172 = vmatmul.f32.gmra.mxu0 %v2133
      %v2173 = vpop.f32.mrf.mxu0
      %v2174 = vadd.f32 %v2109, %v2173
      %2175 = vmatmul.f32.gmra.mxu0 %v2136
      %v2176 = vpop.f32.mrf.mxu0
      %v2177 = vadd.f32 %v2112, %v2176
      %2178 = vmatmul.f32.gmra.mxu0 %v2139
      %v2179 = vpop.f32.mrf.mxu0
      %v2180 = vadd.f32 %v2115, %v2179
      %2181 = vmatmul.f32.gmra.mxu0 %v2142
      %v2182 = vpop.f32.mrf.mxu0
      %v2183 = vadd.f32 %v2118, %v2182
      %2184 = vdwg.mxu0
      %v2185 = vmul.f32 %v498, %v695
      %v2186 = vmul.f32 %v501, %v698
      %v2187 = vmul.f32 %v504, %v701
      %v2188 = vmul.f32 %v507, %v704
      %v2189 = vmul.f32 %v510, %v707
      %v2190 = vmul.f32 %v513, %v710
      %v2191 = vmul.f32 %v516, %v713
      %v2192 = vmul.f32 %v519, %v716
      %v2194 = vsel %vm335, %v2185, 0
      %v2197 = vsel %vm335, %v2186, 0
      %v2200 = vsel %vm335, %v2187, 0
      %v2203 = vsel %vm335, %v2188, 0
      %v2206 = vsel %vm335, %v2189, 0
      %v2209 = vsel %vm335, %v2190, 0
      %v2212 = vsel %vm335, %v2191, 0
      %v2215 = vsel %vm335, %v2192, 0
      %2217 = vmatpush.msra.mxu0 0.0
      %2218 = vmatpush.msra.mxu0 0.0
      %2219 = vmatpush.msra.mxu0 0.0
      %2220 = vmatpush.msra.mxu0 0.0
      %2221 = vmatpush.msra.mxu0 0.0
      %2222 = vmatpush.msra.mxu0 0.0
      %2223 = vmatpush.msra.mxu0 0.0
      %2224 = vmatpush.msra.mxu0 0.0
      %2225 = vmatpush.msra.mxu0 0.0
      %2226 = vmatpush.msra.mxu0 0.0
      %2227 = vmatpush.msra.mxu0 0.0
      %2228 = vmatpush.msra.mxu0 0.0
      %2229 = vmatpush.msra.mxu0 %v910
      %2230 = vmatpush.msra.mxu0 %v909
      %2231 = vmatpush.msra.mxu0 %v908
      %2232 = vmatpush.msra.mxu0 %v907
      %2233 = vmatmul.f32.gmra.mxu0 %v2194
      %v2234 = vpop.f32.mrf.mxu0
      %v2235 = vadd.f32 0.0, %v2234
      %2236 = vmatmul.f32.gmra.mxu0 %v2197
      %v2237 = vpop.f32.mrf.mxu0
      %v2238 = vadd.f32 0.0, %v2237
      %2239 = vmatmul.f32.gmra.mxu0 %v2200
      %v2240 = vpop.f32.mrf.mxu0
      %v2241 = vadd.f32 0.0, %v2240
      %2242 = vmatmul.f32.gmra.mxu0 %v2203
      %v2243 = vpop.f32.mrf.mxu0
      %v2244 = vadd.f32 0.0, %v2243
      %2245 = vmatmul.f32.gmra.mxu0 %v2206
      %v2246 = vpop.f32.mrf.mxu0
      %v2247 = vadd.f32 0.0, %v2246
      %2248 = vmatmul.f32.gmra.mxu0 %v2209
      %v2249 = vpop.f32.mrf.mxu0
      %v2250 = vadd.f32 0.0, %v2249
      %2251 = vmatmul.f32.gmra.mxu0 %v2212
      %v2252 = vpop.f32.mrf.mxu0
      %v2253 = vadd.f32 0.0, %v2252
      %2254 = vmatmul.f32.gmra.mxu0 %v2215
      %v2255 = vpop.f32.mrf.mxu0
      %v2256 = vadd.f32 0.0, %v2255
      %2257 = vdwg.mxu0
      %v2258 = vmul.f32 %v2235, 0.35355338
      %v2259 = vmul.f32 %v2238, 0.35355338
      %v2260 = vmul.f32 %v2241, 0.35355338
      %v2261 = vmul.f32 %v2244, 0.35355338
      %v2262 = vmul.f32 %v2247, 0.35355338
      %v2263 = vmul.f32 %v2250, 0.35355338
      %v2264 = vmul.f32 %v2253, 0.35355338
      %v2265 = vmul.f32 %v2256, 0.35355338
      %v2266 = vmul.f32 %v498, %v719
      %v2267 = vmul.f32 %v501, %v722
      %v2268 = vmul.f32 %v504, %v725
      %v2269 = vmul.f32 %v507, %v728
      %v2270 = vmul.f32 %v510, %v731
      %v2271 = vmul.f32 %v513, %v734
      %v2272 = vmul.f32 %v516, %v737
      %v2273 = vmul.f32 %v519, %v740
      %v2275 = vsel %vm335, %v2266, 0
      %v2278 = vsel %vm335, %v2267, 0
      %v2281 = vsel %vm335, %v2268, 0
      %v2284 = vsel %vm335, %v2269, 0
      %v2287 = vsel %vm335, %v2270, 0
      %v2290 = vsel %vm335, %v2271, 0
      %v2293 = vsel %vm335, %v2272, 0
      %v2296 = vsel %vm335, %v2273, 0
      %2298 = vmatpush.msra.mxu0 0.0
      %2299 = vmatpush.msra.mxu0 0.0
      %2300 = vmatpush.msra.mxu0 0.0
      %2301 = vmatpush.msra.mxu0 0.0
      %2302 = vmatpush.msra.mxu0 0.0
      %2303 = vmatpush.msra.mxu0 0.0
      %2304 = vmatpush.msra.mxu0 0.0
      %2305 = vmatpush.msra.mxu0 0.0
      %2306 = vmatpush.msra.mxu0 0.0
      %2307 = vmatpush.msra.mxu0 0.0
      %2308 = vmatpush.msra.mxu0 0.0
      %2309 = vmatpush.msra.mxu0 0.0
      %2310 = vmatpush.msra.mxu0 %v910
      %2311 = vmatpush.msra.mxu0 %v909
      %2312 = vmatpush.msra.mxu0 %v908
      %2313 = vmatpush.msra.mxu0 %v907
      %2314 = vmatmul.f32.gmra.mxu0 %v2275
      %v2315 = vpop.f32.mrf.mxu0
      %v2316 = vadd.f32 0.0, %v2315
      %2317 = vmatmul.f32.gmra.mxu0 %v2278
      %v2318 = vpop.f32.mrf.mxu0
      %v2319 = vadd.f32 0.0, %v2318
      %2320 = vmatmul.f32.gmra.mxu0 %v2281
      %v2321 = vpop.f32.mrf.mxu0
      %v2322 = vadd.f32 0.0, %v2321
      %2323 = vmatmul.f32.gmra.mxu0 %v2284
      %v2324 = vpop.f32.mrf.mxu0
      %v2325 = vadd.f32 0.0, %v2324
      %2326 = vmatmul.f32.gmra.mxu0 %v2287
      %v2327 = vpop.f32.mrf.mxu0
      %v2328 = vadd.f32 0.0, %v2327
      %2329 = vmatmul.f32.gmra.mxu0 %v2290
      %v2330 = vpop.f32.mrf.mxu0
      %v2331 = vadd.f32 0.0, %v2330
      %2332 = vmatmul.f32.gmra.mxu0 %v2293
      %v2333 = vpop.f32.mrf.mxu0
      %v2334 = vadd.f32 0.0, %v2333
      %2335 = vmatmul.f32.gmra.mxu0 %v2296
      %v2336 = vpop.f32.mrf.mxu0
      %v2337 = vadd.f32 0.0, %v2336
      %2338 = vdwg.mxu0
      %v2339 = vmul.f32 %v2316, 0.35355338
      %v2340 = vmul.f32 %v2319, 0.35355338
      %v2341 = vmul.f32 %v2322, 0.35355338
      %v2342 = vmul.f32 %v2325, 0.35355338
      %v2343 = vmul.f32 %v2328, 0.35355338
      %v2344 = vmul.f32 %v2331, 0.35355338
      %v2345 = vmul.f32 %v2334, 0.35355338
      %v2346 = vmul.f32 %v2337, 0.35355338
      %v2347 = vmul.f32 %v498, %v743
      %v2348 = vmul.f32 %v501, %v746
      %v2349 = vmul.f32 %v504, %v749
      %v2350 = vmul.f32 %v507, %v752
      %v2351 = vmul.f32 %v510, %v755
      %v2352 = vmul.f32 %v513, %v758
      %v2353 = vmul.f32 %v516, %v761
      %v2354 = vmul.f32 %v519, %v764
      %v2356 = vsel %vm335, %v2347, 0
      %v2359 = vsel %vm335, %v2348, 0
      %v2362 = vsel %vm335, %v2349, 0
      %v2365 = vsel %vm335, %v2350, 0
      %v2368 = vsel %vm335, %v2351, 0
      %v2371 = vsel %vm335, %v2352, 0
      %v2374 = vsel %vm335, %v2353, 0
      %v2377 = vsel %vm335, %v2354, 0
      %2379 = vmatpush.msra.mxu0 0.0
      %2380 = vmatpush.msra.mxu0 0.0
      %2381 = vmatpush.msra.mxu0 0.0
      %2382 = vmatpush.msra.mxu0 0.0
      %2383 = vmatpush.msra.mxu0 0.0
      %2384 = vmatpush.msra.mxu0 0.0
      %2385 = vmatpush.msra.mxu0 0.0
      %2386 = vmatpush.msra.mxu0 0.0
      %2387 = vmatpush.msra.mxu0 0.0
      %2388 = vmatpush.msra.mxu0 0.0
      %2389 = vmatpush.msra.mxu0 0.0
      %2390 = vmatpush.msra.mxu0 0.0
      %2391 = vmatpush.msra.mxu0 %v910
      %2392 = vmatpush.msra.mxu0 %v909
      %2393 = vmatpush.msra.mxu0 %v908
      %2394 = vmatpush.msra.mxu0 %v907
      %2395 = vmatmul.f32.gmra.mxu0 %v2356
      %v2396 = vpop.f32.mrf.mxu0
      %v2397 = vadd.f32 0.0, %v2396
      %2398 = vmatmul.f32.gmra.mxu0 %v2359
      %v2399 = vpop.f32.mrf.mxu0
      %v2400 = vadd.f32 0.0, %v2399
      %2401 = vmatmul.f32.gmra.mxu0 %v2362
      %v2402 = vpop.f32.mrf.mxu0
      %v2403 = vadd.f32 0.0, %v2402
      %2404 = vmatmul.f32.gmra.mxu0 %v2365
      %v2405 = vpop.f32.mrf.mxu0
      %v2406 = vadd.f32 0.0, %v2405
      %2407 = vmatmul.f32.gmra.mxu0 %v2368
      %v2408 = vpop.f32.mrf.mxu0
      %v2409 = vadd.f32 0.0, %v2408
      %2410 = vmatmul.f32.gmra.mxu0 %v2371
      %v2411 = vpop.f32.mrf.mxu0
      %v2412 = vadd.f32 0.0, %v2411
      %2413 = vmatmul.f32.gmra.mxu0 %v2374
      %v2414 = vpop.f32.mrf.mxu0
      %v2415 = vadd.f32 0.0, %v2414
      %2416 = vmatmul.f32.gmra.mxu0 %v2377
      %v2417 = vpop.f32.mrf.mxu0
      %v2418 = vadd.f32 0.0, %v2417
      %2419 = vdwg.mxu0
      %v2420 = vmul.f32 %v2397, 0.35355338
      %v2421 = vmul.f32 %v2400, 0.35355338
      %v2422 = vmul.f32 %v2403, 0.35355338
      %v2423 = vmul.f32 %v2406, 0.35355338
      %v2424 = vmul.f32 %v2409, 0.35355338
      %v2425 = vmul.f32 %v2412, 0.35355338
      %v2426 = vmul.f32 %v2415, 0.35355338
      %v2427 = vmul.f32 %v2418, 0.35355338
      %v2428 = vmul.f32 %v498, %v767
      %v2429 = vmul.f32 %v501, %v770
      %v2430 = vmul.f32 %v504, %v773
      %v2431 = vmul.f32 %v507, %v776
      %v2432 = vmul.f32 %v510, %v779
      %v2433 = vmul.f32 %v513, %v782
      %v2434 = vmul.f32 %v516, %v785
      %v2435 = vmul.f32 %v519, %v788
      %v2437 = vsel %vm335, %v2428, 0
      %v2440 = vsel %vm335, %v2429, 0
      %v2443 = vsel %vm335, %v2430, 0
      %v2446 = vsel %vm335, %v2431, 0
      %v2449 = vsel %vm335, %v2432, 0
      %v2452 = vsel %vm335, %v2433, 0
      %v2455 = vsel %vm335, %v2434, 0
      %v2458 = vsel %vm335, %v2435, 0
      %2460 = vmatpush.msra.mxu0 0.0
      %2461 = vmatpush.msra.mxu0 0.0
      %2462 = vmatpush.msra.mxu0 0.0
      %2463 = vmatpush.msra.mxu0 0.0
      %2464 = vmatpush.msra.mxu0 0.0
      %2465 = vmatpush.msra.mxu0 0.0
      %2466 = vmatpush.msra.mxu0 0.0
      %2467 = vmatpush.msra.mxu0 0.0
      %2468 = vmatpush.msra.mxu0 0.0
      %2469 = vmatpush.msra.mxu0 0.0
      %2470 = vmatpush.msra.mxu0 0.0
      %2471 = vmatpush.msra.mxu0 0.0
      %2472 = vmatpush.msra.mxu0 %v910
      %2473 = vmatpush.msra.mxu0 %v909
      %2474 = vmatpush.msra.mxu0 %v908
      %2475 = vmatpush.msra.mxu0 %v907
      %2476 = vmatmul.f32.gmra.mxu0 %v2437
      %v2477 = vpop.f32.mrf.mxu0
      %v2478 = vadd.f32 0.0, %v2477
      %2479 = vmatmul.f32.gmra.mxu0 %v2440
      %v2480 = vpop.f32.mrf.mxu0
      %v2481 = vadd.f32 0.0, %v2480
      %2482 = vmatmul.f32.gmra.mxu0 %v2443
      %v2483 = vpop.f32.mrf.mxu0
      %v2484 = vadd.f32 0.0, %v2483
      %2485 = vmatmul.f32.gmra.mxu0 %v2446
      %v2486 = vpop.f32.mrf.mxu0
      %v2487 = vadd.f32 0.0, %v2486
      %2488 = vmatmul.f32.gmra.mxu0 %v2449
      %v2489 = vpop.f32.mrf.mxu0
      %v2490 = vadd.f32 0.0, %v2489
      %2491 = vmatmul.f32.gmra.mxu0 %v2452
      %v2492 = vpop.f32.mrf.mxu0
      %v2493 = vadd.f32 0.0, %v2492
      %2494 = vmatmul.f32.gmra.mxu0 %v2455
      %v2495 = vpop.f32.mrf.mxu0
      %v2496 = vadd.f32 0.0, %v2495
      %2497 = vmatmul.f32.gmra.mxu0 %v2458
      %v2498 = vpop.f32.mrf.mxu0
      %v2499 = vadd.f32 0.0, %v2498
      %2500 = vdwg.mxu0
      %v2501 = vmul.f32 %v2478, 0.35355338
      %v2502 = vmul.f32 %v2481, 0.35355338
      %v2503 = vmul.f32 %v2484, 0.35355338
      %v2504 = vmul.f32 %v2487, 0.35355338
      %v2505 = vmul.f32 %v2490, 0.35355338
      %v2506 = vmul.f32 %v2493, 0.35355338
      %v2507 = vmul.f32 %v2496, 0.35355338
      %v2508 = vmul.f32 %v2499, 0.35355338
      %v2509 = vmax.f32 %v2258, %v2339
      %v2510 = vmax.f32 %v2259, %v2340
      %v2511 = vmax.f32 %v2260, %v2341
      %v2512 = vmax.f32 %v2261, %v2342
      %v2513 = vmax.f32 %v2262, %v2343
      %v2514 = vmax.f32 %v2263, %v2344
      %v2515 = vmax.f32 %v2264, %v2345
      %v2516 = vmax.f32 %v2265, %v2346
      %v2517 = vmax.f32 %v2509, %v2420
      %v2518 = vmax.f32 %v2510, %v2421
      %v2519 = vmax.f32 %v2511, %v2422
      %v2520 = vmax.f32 %v2512, %v2423
      %v2521 = vmax.f32 %v2513, %v2424
      %v2522 = vmax.f32 %v2514, %v2425
      %v2523 = vmax.f32 %v2515, %v2426
      %v2524 = vmax.f32 %v2516, %v2427
      %v2525 = vmax.f32 %v2517, %v2501
      %v2526 = vmax.f32 %v2518, %v2502
      %v2527 = vmax.f32 %v2519, %v2503
      %v2528 = vmax.f32 %v2520, %v2504
      %v2529 = vmax.f32 %v2521, %v2505
      %v2530 = vmax.f32 %v2522, %v2506
      %v2531 = vmax.f32 %v2523, %v2507
      %v2532 = vmax.f32 %v2524, %v2508
      %v2533 = vsub.f32 %v2258, %v2525
      %v2534 = vsub.f32 %v2259, %v2526
      %v2535 = vsub.f32 %v2260, %v2527
      %v2536 = vsub.f32 %v2261, %v2528
      %v2537 = vsub.f32 %v2262, %v2529
      %v2538 = vsub.f32 %v2263, %v2530
      %v2539 = vsub.f32 %v2264, %v2531
      %v2540 = vsub.f32 %v2265, %v2532
      %v2541 = vmul.f32 %v2533, 1.442695
      %v2542 = vpow.pop %v2541
      %v2543 = vmul.f32 %v2534, 1.442695
      %v2544 = vpow.pop %v2543
      %v2545 = vmul.f32 %v2535, 1.442695
      %v2546 = vpow.pop %v2545
      %v2547 = vmul.f32 %v2536, 1.442695
      %v2548 = vpow.pop %v2547
      %v2549 = vmul.f32 %v2537, 1.442695
      %v2550 = vpow.pop %v2549
      %v2551 = vmul.f32 %v2538, 1.442695
      %v2552 = vpow.pop %v2551
      %v2553 = vmul.f32 %v2539, 1.442695
      %v2554 = vpow.pop %v2553
      %v2555 = vmul.f32 %v2540, 1.442695
      %v2556 = vpow.pop %v2555
      %v2557 = vsub.f32 %v2339, %v2525
      %v2558 = vsub.f32 %v2340, %v2526
      %v2559 = vsub.f32 %v2341, %v2527
      %v2560 = vsub.f32 %v2342, %v2528
      %v2561 = vsub.f32 %v2343, %v2529
      %v2562 = vsub.f32 %v2344, %v2530
      %v2563 = vsub.f32 %v2345, %v2531
      %v2564 = vsub.f32 %v2346, %v2532
      %v2565 = vmul.f32 %v2557, 1.442695
      %v2566 = vpow.pop %v2565
      %v2567 = vmul.f32 %v2558, 1.442695
      %v2568 = vpow.pop %v2567
      %v2569 = vmul.f32 %v2559, 1.442695
      %v2570 = vpow.pop %v2569
      %v2571 = vmul.f32 %v2560, 1.442695
      %v2572 = vpow.pop %v2571
      %v2573 = vmul.f32 %v2561, 1.442695
      %v2574 = vpow.pop %v2573
      %v2575 = vmul.f32 %v2562, 1.442695
      %v2576 = vpow.pop %v2575
      %v2577 = vmul.f32 %v2563, 1.442695
      %v2578 = vpow.pop %v2577
      %v2579 = vmul.f32 %v2564, 1.442695
      %v2580 = vpow.pop %v2579
      %v2581 = vsub.f32 %v2420, %v2525
      %v2582 = vsub.f32 %v2421, %v2526
      %v2583 = vsub.f32 %v2422, %v2527
      %v2584 = vsub.f32 %v2423, %v2528
      %v2585 = vsub.f32 %v2424, %v2529
      %v2586 = vsub.f32 %v2425, %v2530
      %v2587 = vsub.f32 %v2426, %v2531
      %v2588 = vsub.f32 %v2427, %v2532
      %v2589 = vmul.f32 %v2581, 1.442695
      %v2590 = vpow.pop %v2589
      %v2591 = vmul.f32 %v2582, 1.442695
      %v2592 = vpow.pop %v2591
      %v2593 = vmul.f32 %v2583, 1.442695
      %v2594 = vpow.pop %v2593
      %v2595 = vmul.f32 %v2584, 1.442695
      %v2596 = vpow.pop %v2595
      %v2597 = vmul.f32 %v2585, 1.442695
      %v2598 = vpow.pop %v2597
      %v2599 = vmul.f32 %v2586, 1.442695
      %v2600 = vpow.pop %v2599
      %v2601 = vmul.f32 %v2587, 1.442695
      %v2602 = vpow.pop %v2601
      %v2603 = vmul.f32 %v2588, 1.442695
      %v2604 = vpow.pop %v2603
      %v2605 = vsub.f32 %v2501, %v2525
      %v2606 = vsub.f32 %v2502, %v2526
      %v2607 = vsub.f32 %v2503, %v2527
      %v2608 = vsub.f32 %v2504, %v2528
      %v2609 = vsub.f32 %v2505, %v2529
      %v2610 = vsub.f32 %v2506, %v2530
      %v2611 = vsub.f32 %v2507, %v2531
      %v2612 = vsub.f32 %v2508, %v2532
      %v2613 = vmul.f32 %v2605, 1.442695
      %v2614 = vpow.pop %v2613
      %v2615 = vmul.f32 %v2606, 1.442695
      %v2616 = vpow.pop %v2615
      %v2617 = vmul.f32 %v2607, 1.442695
      %v2618 = vpow.pop %v2617
      %v2619 = vmul.f32 %v2608, 1.442695
      %v2620 = vpow.pop %v2619
      %v2621 = vmul.f32 %v2609, 1.442695
      %v2622 = vpow.pop %v2621
      %v2623 = vmul.f32 %v2610, 1.442695
      %v2624 = vpow.pop %v2623
      %v2625 = vmul.f32 %v2611, 1.442695
      %v2626 = vpow.pop %v2625
      %v2627 = vmul.f32 %v2612, 1.442695
      %v2628 = vpow.pop %v2627
      %v2629 = vadd.f32 %v2542, %v2566
      %v2630 = vadd.f32 %v2544, %v2568
      %v2631 = vadd.f32 %v2546, %v2570
      %v2632 = vadd.f32 %v2548, %v2572
      %v2633 = vadd.f32 %v2550, %v2574
      %v2634 = vadd.f32 %v2552, %v2576
      %v2635 = vadd.f32 %v2554, %v2578
      %v2636 = vadd.f32 %v2556, %v2580
      %v2637 = vadd.f32 %v2629, %v2590
      %v2638 = vadd.f32 %v2630, %v2592
      %v2639 = vadd.f32 %v2631, %v2594
      %v2640 = vadd.f32 %v2632, %v2596
      %v2641 = vadd.f32 %v2633, %v2598
      %v2642 = vadd.f32 %v2634, %v2600
      %v2643 = vadd.f32 %v2635, %v2602
      %v2644 = vadd.f32 %v2636, %v2604
      %v2645 = vadd.f32 %v2637, %v2614
      %v2646 = vadd.f32 %v2638, %v2616
      %v2647 = vadd.f32 %v2639, %v2618
      %v2648 = vadd.f32 %v2640, %v2620
      %v2649 = vadd.f32 %v2641, %v2622
      %v2650 = vadd.f32 %v2642, %v2624
      %v2651 = vadd.f32 %v2643, %v2626
      %v2652 = vadd.f32 %v2644, %v2628
      %v2653 = vrcp.pop %v2645
      %v2654 = vrcp.pop %v2646
      %v2655 = vrcp.pop %v2647
      %v2656 = vrcp.pop %v2648
      %v2657 = vrcp.pop %v2649
      %v2658 = vrcp.pop %v2650
      %v2659 = vrcp.pop %v2651
      %v2660 = vrcp.pop %v2652
      %v2661 = vmul.f32 %v2542, %v2653
      %v2662 = vmul.f32 %v2544, %v2654
      %v2663 = vmul.f32 %v2546, %v2655
      %v2664 = vmul.f32 %v2548, %v2656
      %v2665 = vmul.f32 %v2550, %v2657
      %v2666 = vmul.f32 %v2552, %v2658
      %v2667 = vmul.f32 %v2554, %v2659
      %v2668 = vmul.f32 %v2556, %v2660
      %v2669 = vmul.f32 %v2661, %v812
      %v2670 = vmul.f32 %v2662, %v815
      %v2671 = vmul.f32 %v2663, %v818
      %v2672 = vmul.f32 %v2664, %v821
      %v2673 = vmul.f32 %v2665, %v824
      %v2674 = vmul.f32 %v2666, %v827
      %v2675 = vmul.f32 %v2667, %v830
      %v2676 = vmul.f32 %v2668, %v833
      %v2677 = vmul.f32 %v2566, %v2653
      %v2678 = vmul.f32 %v2568, %v2654
      %v2679 = vmul.f32 %v2570, %v2655
      %v2680 = vmul.f32 %v2572, %v2656
      %v2681 = vmul.f32 %v2574, %v2657
      %v2682 = vmul.f32 %v2576, %v2658
      %v2683 = vmul.f32 %v2578, %v2659
      %v2684 = vmul.f32 %v2580, %v2660
      %v2685 = vmul.f32 %v2677, %v836
      %v2686 = vmul.f32 %v2678, %v839
      %v2687 = vmul.f32 %v2679, %v842
      %v2688 = vmul.f32 %v2680, %v845
      %v2689 = vmul.f32 %v2681, %v848
      %v2690 = vmul.f32 %v2682, %v851
      %v2691 = vmul.f32 %v2683, %v854
      %v2692 = vmul.f32 %v2684, %v857
      %v2693 = vadd.f32 %v2669, %v2685
      %v2694 = vadd.f32 %v2670, %v2686
      %v2695 = vadd.f32 %v2671, %v2687
      %v2696 = vadd.f32 %v2672, %v2688
      %v2697 = vadd.f32 %v2673, %v2689
      %v2698 = vadd.f32 %v2674, %v2690
      %v2699 = vadd.f32 %v2675, %v2691
      %v2700 = vadd.f32 %v2676, %v2692
      %v2701 = vmul.f32 %v2590, %v2653
      %v2702 = vmul.f32 %v2592, %v2654
      %v2703 = vmul.f32 %v2594, %v2655
      %v2704 = vmul.f32 %v2596, %v2656
      %v2705 = vmul.f32 %v2598, %v2657
      %v2706 = vmul.f32 %v2600, %v2658
      %v2707 = vmul.f32 %v2602, %v2659
      %v2708 = vmul.f32 %v2604, %v2660
      %v2709 = vmul.f32 %v2701, %v860
      %v2710 = vmul.f32 %v2702, %v863
      %v2711 = vmul.f32 %v2703, %v866
      %v2712 = vmul.f32 %v2704, %v869
      %v2713 = vmul.f32 %v2705, %v872
      %v2714 = vmul.f32 %v2706, %v875
      %v2715 = vmul.f32 %v2707, %v878
      %v2716 = vmul.f32 %v2708, %v881
      %v2717 = vadd.f32 %v2693, %v2709
      %v2718 = vadd.f32 %v2694, %v2710
      %v2719 = vadd.f32 %v2695, %v2711
      %v2720 = vadd.f32 %v2696, %v2712
      %v2721 = vadd.f32 %v2697, %v2713
      %v2722 = vadd.f32 %v2698, %v2714
      %v2723 = vadd.f32 %v2699, %v2715
      %v2724 = vadd.f32 %v2700, %v2716
      %v2725 = vmul.f32 %v2614, %v2653
      %v2726 = vmul.f32 %v2616, %v2654
      %v2727 = vmul.f32 %v2618, %v2655
      %v2728 = vmul.f32 %v2620, %v2656
      %v2729 = vmul.f32 %v2622, %v2657
      %v2730 = vmul.f32 %v2624, %v2658
      %v2731 = vmul.f32 %v2626, %v2659
      %v2732 = vmul.f32 %v2628, %v2660
      %v2733 = vmul.f32 %v2725, %v884
      %v2734 = vmul.f32 %v2726, %v887
      %v2735 = vmul.f32 %v2727, %v890
      %v2736 = vmul.f32 %v2728, %v893
      %v2737 = vmul.f32 %v2729, %v896
      %v2738 = vmul.f32 %v2730, %v899
      %v2739 = vmul.f32 %v2731, %v902
      %v2740 = vmul.f32 %v2732, %v905
      %v2741 = vadd.f32 %v2717, %v2733
      %v2742 = vadd.f32 %v2718, %v2734
      %v2743 = vadd.f32 %v2719, %v2735
      %v2744 = vadd.f32 %v2720, %v2736
      %v2745 = vadd.f32 %v2721, %v2737
      %v2746 = vadd.f32 %v2722, %v2738
      %v2747 = vadd.f32 %v2723, %v2739
      %v2748 = vadd.f32 %v2724, %v2740
      %v2750 = vsel %vm335, %v2741, 0
      %v2753 = vsel %vm335, %v2742, 0
      %v2756 = vsel %vm335, %v2743, 0
      %v2759 = vsel %vm335, %v2744, 0
      %v2762 = vsel %vm335, %v2745, 0
      %v2765 = vsel %vm335, %v2746, 0
      %v2768 = vsel %vm335, %v2747, 0
      %v2771 = vsel %vm335, %v2748, 0
      %2773 = vmatpush.msra.mxu0 0.0
      %2774 = vmatpush.msra.mxu0 0.0
      %2775 = vmatpush.msra.mxu0 0.0
      %2776 = vmatpush.msra.mxu0 0.0
      %2777 = vmatpush.msra.mxu0 0.0
      %2778 = vmatpush.msra.mxu0 0.0
      %2779 = vmatpush.msra.mxu0 0.0
      %2780 = vmatpush.msra.mxu0 0.0
      %2781 = vmatpush.msra.mxu0 0.0
      %2782 = vmatpush.msra.mxu0 0.0
      %2783 = vmatpush.msra.mxu0 0.0
      %2784 = vmatpush.msra.mxu0 0.0
      %2785 = vmatpush.msra.mxu0 %v922
      %2786 = vmatpush.msra.mxu0 %v921
      %2787 = vmatpush.msra.mxu0 %v920
      %2788 = vmatpush.msra.mxu0 %v919
      %2789 = vmatmul.f32.gmra.mxu0 %v2750
      %v2790 = vpop.f32.mrf.mxu0
      %v2791 = vadd.f32 0.0, %v2790
      %2792 = vmatmul.f32.gmra.mxu0 %v2753
      %v2793 = vpop.f32.mrf.mxu0
      %v2794 = vadd.f32 0.0, %v2793
      %2795 = vmatmul.f32.gmra.mxu0 %v2756
      %v2796 = vpop.f32.mrf.mxu0
      %v2797 = vadd.f32 0.0, %v2796
      %2798 = vmatmul.f32.gmra.mxu0 %v2759
      %v2799 = vpop.f32.mrf.mxu0
      %v2800 = vadd.f32 0.0, %v2799
      %2801 = vmatmul.f32.gmra.mxu0 %v2762
      %v2802 = vpop.f32.mrf.mxu0
      %v2803 = vadd.f32 0.0, %v2802
      %2804 = vmatmul.f32.gmra.mxu0 %v2765
      %v2805 = vpop.f32.mrf.mxu0
      %v2806 = vadd.f32 0.0, %v2805
      %2807 = vmatmul.f32.gmra.mxu0 %v2768
      %v2808 = vpop.f32.mrf.mxu0
      %v2809 = vadd.f32 0.0, %v2808
      %2810 = vmatmul.f32.gmra.mxu0 %v2771
      %v2811 = vpop.f32.mrf.mxu0
      %v2812 = vadd.f32 0.0, %v2811
      %2813 = vdwg.mxu0
      %v2814 = vadd.f32 %v2162, %v2791
      %v2815 = vadd.f32 %v2165, %v2794
      %v2816 = vadd.f32 %v2168, %v2797
      %v2817 = vadd.f32 %v2171, %v2800
      %v2818 = vadd.f32 %v2174, %v2803
      %v2819 = vadd.f32 %v2177, %v2806
      %v2820 = vadd.f32 %v2180, %v2809
      %v2821 = vadd.f32 %v2183, %v2812
      %v2822 = vmul.f32 %v522, %v695
      %v2823 = vmul.f32 %v525, %v698
      %v2824 = vmul.f32 %v528, %v701
      %v2825 = vmul.f32 %v531, %v704
      %v2826 = vmul.f32 %v534, %v707
      %v2827 = vmul.f32 %v537, %v710
      %v2828 = vmul.f32 %v540, %v713
      %v2829 = vmul.f32 %v543, %v716
      %v2831 = vsel %vm335, %v2822, 0
      %v2834 = vsel %vm335, %v2823, 0
      %v2837 = vsel %vm335, %v2824, 0
      %v2840 = vsel %vm335, %v2825, 0
      %v2843 = vsel %vm335, %v2826, 0
      %v2846 = vsel %vm335, %v2827, 0
      %v2849 = vsel %vm335, %v2828, 0
      %v2852 = vsel %vm335, %v2829, 0
      %2854 = vmatpush.msra.mxu0 0.0
      %2855 = vmatpush.msra.mxu0 0.0
      %2856 = vmatpush.msra.mxu0 0.0
      %2857 = vmatpush.msra.mxu0 0.0
      %2858 = vmatpush.msra.mxu0 0.0
      %2859 = vmatpush.msra.mxu0 0.0
      %2860 = vmatpush.msra.mxu0 0.0
      %2861 = vmatpush.msra.mxu0 0.0
      %2862 = vmatpush.msra.mxu0 0.0
      %2863 = vmatpush.msra.mxu0 0.0
      %2864 = vmatpush.msra.mxu0 0.0
      %2865 = vmatpush.msra.mxu0 0.0
      %2866 = vmatpush.msra.mxu0 %v910
      %2867 = vmatpush.msra.mxu0 %v909
      %2868 = vmatpush.msra.mxu0 %v908
      %2869 = vmatpush.msra.mxu0 %v907
      %2870 = vmatmul.f32.gmra.mxu0 %v2831
      %v2871 = vpop.f32.mrf.mxu0
      %v2872 = vadd.f32 0.0, %v2871
      %2873 = vmatmul.f32.gmra.mxu0 %v2834
      %v2874 = vpop.f32.mrf.mxu0
      %v2875 = vadd.f32 0.0, %v2874
      %2876 = vmatmul.f32.gmra.mxu0 %v2837
      %v2877 = vpop.f32.mrf.mxu0
      %v2878 = vadd.f32 0.0, %v2877
      %2879 = vmatmul.f32.gmra.mxu0 %v2840
      %v2880 = vpop.f32.mrf.mxu0
      %v2881 = vadd.f32 0.0, %v2880
      %2882 = vmatmul.f32.gmra.mxu0 %v2843
      %v2883 = vpop.f32.mrf.mxu0
      %v2884 = vadd.f32 0.0, %v2883
      %2885 = vmatmul.f32.gmra.mxu0 %v2846
      %v2886 = vpop.f32.mrf.mxu0
      %v2887 = vadd.f32 0.0, %v2886
      %2888 = vmatmul.f32.gmra.mxu0 %v2849
      %v2889 = vpop.f32.mrf.mxu0
      %v2890 = vadd.f32 0.0, %v2889
      %2891 = vmatmul.f32.gmra.mxu0 %v2852
      %v2892 = vpop.f32.mrf.mxu0
      %v2893 = vadd.f32 0.0, %v2892
      %2894 = vdwg.mxu0
      %v2895 = vmul.f32 %v2872, 0.35355338
      %v2896 = vmul.f32 %v2875, 0.35355338
      %v2897 = vmul.f32 %v2878, 0.35355338
      %v2898 = vmul.f32 %v2881, 0.35355338
      %v2899 = vmul.f32 %v2884, 0.35355338
      %v2900 = vmul.f32 %v2887, 0.35355338
      %v2901 = vmul.f32 %v2890, 0.35355338
      %v2902 = vmul.f32 %v2893, 0.35355338
      %v2903 = vmul.f32 %v522, %v719
      %v2904 = vmul.f32 %v525, %v722
      %v2905 = vmul.f32 %v528, %v725
      %v2906 = vmul.f32 %v531, %v728
      %v2907 = vmul.f32 %v534, %v731
      %v2908 = vmul.f32 %v537, %v734
      %v2909 = vmul.f32 %v540, %v737
      %v2910 = vmul.f32 %v543, %v740
      %v2912 = vsel %vm335, %v2903, 0
      %v2915 = vsel %vm335, %v2904, 0
      %v2918 = vsel %vm335, %v2905, 0
      %v2921 = vsel %vm335, %v2906, 0
      %v2924 = vsel %vm335, %v2907, 0
      %v2927 = vsel %vm335, %v2908, 0
      %v2930 = vsel %vm335, %v2909, 0
      %v2933 = vsel %vm335, %v2910, 0
      %2935 = vmatpush.msra.mxu0 0.0
      %2936 = vmatpush.msra.mxu0 0.0
      %2937 = vmatpush.msra.mxu0 0.0
      %2938 = vmatpush.msra.mxu0 0.0
      %2939 = vmatpush.msra.mxu0 0.0
      %2940 = vmatpush.msra.mxu0 0.0
      %2941 = vmatpush.msra.mxu0 0.0
      %2942 = vmatpush.msra.mxu0 0.0
      %2943 = vmatpush.msra.mxu0 0.0
      %2944 = vmatpush.msra.mxu0 0.0
      %2945 = vmatpush.msra.mxu0 0.0
      %2946 = vmatpush.msra.mxu0 0.0
      %2947 = vmatpush.msra.mxu0 %v910
      %2948 = vmatpush.msra.mxu0 %v909
      %2949 = vmatpush.msra.mxu0 %v908
      %2950 = vmatpush.msra.mxu0 %v907
      %2951 = vmatmul.f32.gmra.mxu0 %v2912
      %v2952 = vpop.f32.mrf.mxu0
      %v2953 = vadd.f32 0.0, %v2952
      %2954 = vmatmul.f32.gmra.mxu0 %v2915
      %v2955 = vpop.f32.mrf.mxu0
      %v2956 = vadd.f32 0.0, %v2955
      %2957 = vmatmul.f32.gmra.mxu0 %v2918
      %v2958 = vpop.f32.mrf.mxu0
      %v2959 = vadd.f32 0.0, %v2958
      %2960 = vmatmul.f32.gmra.mxu0 %v2921
      %v2961 = vpop.f32.mrf.mxu0
      %v2962 = vadd.f32 0.0, %v2961
      %2963 = vmatmul.f32.gmra.mxu0 %v2924
      %v2964 = vpop.f32.mrf.mxu0
      %v2965 = vadd.f32 0.0, %v2964
      %2966 = vmatmul.f32.gmra.mxu0 %v2927
      %v2967 = vpop.f32.mrf.mxu0
      %v2968 = vadd.f32 0.0, %v2967
      %2969 = vmatmul.f32.gmra.mxu0 %v2930
      %v2970 = vpop.f32.mrf.mxu0
      %v2971 = vadd.f32 0.0, %v2970
      %2972 = vmatmul.f32.gmra.mxu0 %v2933
      %v2973 = vpop.f32.mrf.mxu0
      %v2974 = vadd.f32 0.0, %v2973
      %2975 = vdwg.mxu0
      %v2976 = vmul.f32 %v2953, 0.35355338
      %v2977 = vmul.f32 %v2956, 0.35355338
      %v2978 = vmul.f32 %v2959, 0.35355338
      %v2979 = vmul.f32 %v2962, 0.35355338
      %v2980 = vmul.f32 %v2965, 0.35355338
      %v2981 = vmul.f32 %v2968, 0.35355338
      %v2982 = vmul.f32 %v2971, 0.35355338
      %v2983 = vmul.f32 %v2974, 0.35355338
      %v2984 = vmul.f32 %v522, %v743
      %v2985 = vmul.f32 %v525, %v746
      %v2986 = vmul.f32 %v528, %v749
      %v2987 = vmul.f32 %v531, %v752
      %v2988 = vmul.f32 %v534, %v755
      %v2989 = vmul.f32 %v537, %v758
      %v2990 = vmul.f32 %v540, %v761
      %v2991 = vmul.f32 %v543, %v764
      %v2993 = vsel %vm335, %v2984, 0
      %v2996 = vsel %vm335, %v2985, 0
      %v2999 = vsel %vm335, %v2986, 0
      %v3002 = vsel %vm335, %v2987, 0
      %v3005 = vsel %vm335, %v2988, 0
      %v3008 = vsel %vm335, %v2989, 0
      %v3011 = vsel %vm335, %v2990, 0
      %v3014 = vsel %vm335, %v2991, 0
      %3016 = vmatpush.msra.mxu0 0.0
      %3017 = vmatpush.msra.mxu0 0.0
      %3018 = vmatpush.msra.mxu0 0.0
      %3019 = vmatpush.msra.mxu0 0.0
      %3020 = vmatpush.msra.mxu0 0.0
      %3021 = vmatpush.msra.mxu0 0.0
      %3022 = vmatpush.msra.mxu0 0.0
      %3023 = vmatpush.msra.mxu0 0.0
      %3024 = vmatpush.msra.mxu0 0.0
      %3025 = vmatpush.msra.mxu0 0.0
      %3026 = vmatpush.msra.mxu0 0.0
      %3027 = vmatpush.msra.mxu0 0.0
      %3028 = vmatpush.msra.mxu0 %v910
      %3029 = vmatpush.msra.mxu0 %v909
      %3030 = vmatpush.msra.mxu0 %v908
      %3031 = vmatpush.msra.mxu0 %v907
      %3032 = vmatmul.f32.gmra.mxu0 %v2993
      %v3033 = vpop.f32.mrf.mxu0
      %v3034 = vadd.f32 0.0, %v3033
      %3035 = vmatmul.f32.gmra.mxu0 %v2996
      %v3036 = vpop.f32.mrf.mxu0
      %v3037 = vadd.f32 0.0, %v3036
      %3038 = vmatmul.f32.gmra.mxu0 %v2999
      %v3039 = vpop.f32.mrf.mxu0
      %v3040 = vadd.f32 0.0, %v3039
      %3041 = vmatmul.f32.gmra.mxu0 %v3002
      %v3042 = vpop.f32.mrf.mxu0
      %v3043 = vadd.f32 0.0, %v3042
      %3044 = vmatmul.f32.gmra.mxu0 %v3005
      %v3045 = vpop.f32.mrf.mxu0
      %v3046 = vadd.f32 0.0, %v3045
      %3047 = vmatmul.f32.gmra.mxu0 %v3008
      %v3048 = vpop.f32.mrf.mxu0
      %v3049 = vadd.f32 0.0, %v3048
      %3050 = vmatmul.f32.gmra.mxu0 %v3011
      %v3051 = vpop.f32.mrf.mxu0
      %v3052 = vadd.f32 0.0, %v3051
      %3053 = vmatmul.f32.gmra.mxu0 %v3014
      %v3054 = vpop.f32.mrf.mxu0
      %v3055 = vadd.f32 0.0, %v3054
      %3056 = vdwg.mxu0
      %v3057 = vmul.f32 %v3034, 0.35355338
      %v3058 = vmul.f32 %v3037, 0.35355338
      %v3059 = vmul.f32 %v3040, 0.35355338
      %v3060 = vmul.f32 %v3043, 0.35355338
      %v3061 = vmul.f32 %v3046, 0.35355338
      %v3062 = vmul.f32 %v3049, 0.35355338
      %v3063 = vmul.f32 %v3052, 0.35355338
      %v3064 = vmul.f32 %v3055, 0.35355338
      %v3065 = vmul.f32 %v522, %v767
      %v3066 = vmul.f32 %v525, %v770
      %v3067 = vmul.f32 %v528, %v773
      %v3068 = vmul.f32 %v531, %v776
      %v3069 = vmul.f32 %v534, %v779
      %v3070 = vmul.f32 %v537, %v782
      %v3071 = vmul.f32 %v540, %v785
      %v3072 = vmul.f32 %v543, %v788
      %v3074 = vsel %vm335, %v3065, 0
      %v3077 = vsel %vm335, %v3066, 0
      %v3080 = vsel %vm335, %v3067, 0
      %v3083 = vsel %vm335, %v3068, 0
      %v3086 = vsel %vm335, %v3069, 0
      %v3089 = vsel %vm335, %v3070, 0
      %v3092 = vsel %vm335, %v3071, 0
      %v3095 = vsel %vm335, %v3072, 0
      %3097 = vmatpush.msra.mxu0 0.0
      %3098 = vmatpush.msra.mxu0 0.0
      %3099 = vmatpush.msra.mxu0 0.0
      %3100 = vmatpush.msra.mxu0 0.0
      %3101 = vmatpush.msra.mxu0 0.0
      %3102 = vmatpush.msra.mxu0 0.0
      %3103 = vmatpush.msra.mxu0 0.0
      %3104 = vmatpush.msra.mxu0 0.0
      %3105 = vmatpush.msra.mxu0 0.0
      %3106 = vmatpush.msra.mxu0 0.0
      %3107 = vmatpush.msra.mxu0 0.0
      %3108 = vmatpush.msra.mxu0 0.0
      %3109 = vmatpush.msra.mxu0 %v910
      %3110 = vmatpush.msra.mxu0 %v909
      %3111 = vmatpush.msra.mxu0 %v908
      %3112 = vmatpush.msra.mxu0 %v907
      %3113 = vmatmul.f32.gmra.mxu0 %v3074
      %v3114 = vpop.f32.mrf.mxu0
      %v3115 = vadd.f32 0.0, %v3114
      %3116 = vmatmul.f32.gmra.mxu0 %v3077
      %v3117 = vpop.f32.mrf.mxu0
      %v3118 = vadd.f32 0.0, %v3117
      %3119 = vmatmul.f32.gmra.mxu0 %v3080
      %v3120 = vpop.f32.mrf.mxu0
      %v3121 = vadd.f32 0.0, %v3120
      %3122 = vmatmul.f32.gmra.mxu0 %v3083
      %v3123 = vpop.f32.mrf.mxu0
      %v3124 = vadd.f32 0.0, %v3123
      %3125 = vmatmul.f32.gmra.mxu0 %v3086
      %v3126 = vpop.f32.mrf.mxu0
      %v3127 = vadd.f32 0.0, %v3126
      %3128 = vmatmul.f32.gmra.mxu0 %v3089
      %v3129 = vpop.f32.mrf.mxu0
      %v3130 = vadd.f32 0.0, %v3129
      %3131 = vmatmul.f32.gmra.mxu0 %v3092
      %v3132 = vpop.f32.mrf.mxu0
      %v3133 = vadd.f32 0.0, %v3132
      %3134 = vmatmul.f32.gmra.mxu0 %v3095
      %v3135 = vpop.f32.mrf.mxu0
      %v3136 = vadd.f32 0.0, %v3135
      %3137 = vdwg.mxu0
      %v3138 = vmul.f32 %v3115, 0.35355338
      %v3139 = vmul.f32 %v3118, 0.35355338
      %v3140 = vmul.f32 %v3121, 0.35355338
      %v3141 = vmul.f32 %v3124, 0.35355338
      %v3142 = vmul.f32 %v3127, 0.35355338
      %v3143 = vmul.f32 %v3130, 0.35355338
      %v3144 = vmul.f32 %v3133, 0.35355338
      %v3145 = vmul.f32 %v3136, 0.35355338
      %v3146 = vmax.f32 %v2895, %v2976
      %v3147 = vmax.f32 %v2896, %v2977
      %v3148 = vmax.f32 %v2897, %v2978
      %v3149 = vmax.f32 %v2898, %v2979
      %v3150 = vmax.f32 %v2899, %v2980
      %v3151 = vmax.f32 %v2900, %v2981
      %v3152 = vmax.f32 %v2901, %v2982
      %v3153 = vmax.f32 %v2902, %v2983
      %v3154 = vmax.f32 %v3146, %v3057
      %v3155 = vmax.f32 %v3147, %v3058
      %v3156 = vmax.f32 %v3148, %v3059
      %v3157 = vmax.f32 %v3149, %v3060
      %v3158 = vmax.f32 %v3150, %v3061
      %v3159 = vmax.f32 %v3151, %v3062
      %v3160 = vmax.f32 %v3152, %v3063
      %v3161 = vmax.f32 %v3153, %v3064
      %v3162 = vmax.f32 %v3154, %v3138
      %v3163 = vmax.f32 %v3155, %v3139
      %v3164 = vmax.f32 %v3156, %v3140
      %v3165 = vmax.f32 %v3157, %v3141
      %v3166 = vmax.f32 %v3158, %v3142
      %v3167 = vmax.f32 %v3159, %v3143
      %v3168 = vmax.f32 %v3160, %v3144
      %v3169 = vmax.f32 %v3161, %v3145
      %v3170 = vsub.f32 %v2895, %v3162
      %v3171 = vsub.f32 %v2896, %v3163
      %v3172 = vsub.f32 %v2897, %v3164
      %v3173 = vsub.f32 %v2898, %v3165
      %v3174 = vsub.f32 %v2899, %v3166
      %v3175 = vsub.f32 %v2900, %v3167
      %v3176 = vsub.f32 %v2901, %v3168
      %v3177 = vsub.f32 %v2902, %v3169
      %v3178 = vmul.f32 %v3170, 1.442695
      %v3179 = vpow.pop %v3178
      %v3180 = vmul.f32 %v3171, 1.442695
      %v3181 = vpow.pop %v3180
      %v3182 = vmul.f32 %v3172, 1.442695
      %v3183 = vpow.pop %v3182
      %v3184 = vmul.f32 %v3173, 1.442695
      %v3185 = vpow.pop %v3184
      %v3186 = vmul.f32 %v3174, 1.442695
      %v3187 = vpow.pop %v3186
      %v3188 = vmul.f32 %v3175, 1.442695
      %v3189 = vpow.pop %v3188
      %v3190 = vmul.f32 %v3176, 1.442695
      %v3191 = vpow.pop %v3190
      %v3192 = vmul.f32 %v3177, 1.442695
      %v3193 = vpow.pop %v3192
      %v3194 = vsub.f32 %v2976, %v3162
      %v3195 = vsub.f32 %v2977, %v3163
      %v3196 = vsub.f32 %v2978, %v3164
      %v3197 = vsub.f32 %v2979, %v3165
      %v3198 = vsub.f32 %v2980, %v3166
      %v3199 = vsub.f32 %v2981, %v3167
      %v3200 = vsub.f32 %v2982, %v3168
      %v3201 = vsub.f32 %v2983, %v3169
      %v3202 = vmul.f32 %v3194, 1.442695
      %v3203 = vpow.pop %v3202
      %v3204 = vmul.f32 %v3195, 1.442695
      %v3205 = vpow.pop %v3204
      %v3206 = vmul.f32 %v3196, 1.442695
      %v3207 = vpow.pop %v3206
      %v3208 = vmul.f32 %v3197, 1.442695
      %v3209 = vpow.pop %v3208
      %v3210 = vmul.f32 %v3198, 1.442695
      %v3211 = vpow.pop %v3210
      %v3212 = vmul.f32 %v3199, 1.442695
      %v3213 = vpow.pop %v3212
      %v3214 = vmul.f32 %v3200, 1.442695
      %v3215 = vpow.pop %v3214
      %v3216 = vmul.f32 %v3201, 1.442695
      %v3217 = vpow.pop %v3216
      %v3218 = vsub.f32 %v3057, %v3162
      %v3219 = vsub.f32 %v3058, %v3163
      %v3220 = vsub.f32 %v3059, %v3164
      %v3221 = vsub.f32 %v3060, %v3165
      %v3222 = vsub.f32 %v3061, %v3166
      %v3223 = vsub.f32 %v3062, %v3167
      %v3224 = vsub.f32 %v3063, %v3168
      %v3225 = vsub.f32 %v3064, %v3169
      %v3226 = vmul.f32 %v3218, 1.442695
      %v3227 = vpow.pop %v3226
      %v3228 = vmul.f32 %v3219, 1.442695
      %v3229 = vpow.pop %v3228
      %v3230 = vmul.f32 %v3220, 1.442695
      %v3231 = vpow.pop %v3230
      %v3232 = vmul.f32 %v3221, 1.442695
      %v3233 = vpow.pop %v3232
      %v3234 = vmul.f32 %v3222, 1.442695
      %v3235 = vpow.pop %v3234
      %v3236 = vmul.f32 %v3223, 1.442695
      %v3237 = vpow.pop %v3236
      %v3238 = vmul.f32 %v3224, 1.442695
      %v3239 = vpow.pop %v3238
      %v3240 = vmul.f32 %v3225, 1.442695
      %v3241 = vpow.pop %v3240
      %v3242 = vsub.f32 %v3138, %v3162
      %v3243 = vsub.f32 %v3139, %v3163
      %v3244 = vsub.f32 %v3140, %v3164
      %v3245 = vsub.f32 %v3141, %v3165
      %v3246 = vsub.f32 %v3142, %v3166
      %v3247 = vsub.f32 %v3143, %v3167
      %v3248 = vsub.f32 %v3144, %v3168
      %v3249 = vsub.f32 %v3145, %v3169
      %v3250 = vmul.f32 %v3242, 1.442695
      %v3251 = vpow.pop %v3250
      %v3252 = vmul.f32 %v3243, 1.442695
      %v3253 = vpow.pop %v3252
      %v3254 = vmul.f32 %v3244, 1.442695
      %v3255 = vpow.pop %v3254
      %v3256 = vmul.f32 %v3245, 1.442695
      %v3257 = vpow.pop %v3256
      %v3258 = vmul.f32 %v3246, 1.442695
      %v3259 = vpow.pop %v3258
      %v3260 = vmul.f32 %v3247, 1.442695
      %v3261 = vpow.pop %v3260
      %v3262 = vmul.f32 %v3248, 1.442695
      %v3263 = vpow.pop %v3262
      %v3264 = vmul.f32 %v3249, 1.442695
      %v3265 = vpow.pop %v3264
      %v3266 = vadd.f32 %v3179, %v3203
      %v3267 = vadd.f32 %v3181, %v3205
      %v3268 = vadd.f32 %v3183, %v3207
      %v3269 = vadd.f32 %v3185, %v3209
      %v3270 = vadd.f32 %v3187, %v3211
      %v3271 = vadd.f32 %v3189, %v3213
      %v3272 = vadd.f32 %v3191, %v3215
      %v3273 = vadd.f32 %v3193, %v3217
      %v3274 = vadd.f32 %v3266, %v3227
      %v3275 = vadd.f32 %v3267, %v3229
      %v3276 = vadd.f32 %v3268, %v3231
      %v3277 = vadd.f32 %v3269, %v3233
      %v3278 = vadd.f32 %v3270, %v3235
      %v3279 = vadd.f32 %v3271, %v3237
      %v3280 = vadd.f32 %v3272, %v3239
      %v3281 = vadd.f32 %v3273, %v3241
      %v3282 = vadd.f32 %v3274, %v3251
      %v3283 = vadd.f32 %v3275, %v3253
      %v3284 = vadd.f32 %v3276, %v3255
      %v3285 = vadd.f32 %v3277, %v3257
      %v3286 = vadd.f32 %v3278, %v3259
      %v3287 = vadd.f32 %v3279, %v3261
      %v3288 = vadd.f32 %v3280, %v3263
      %v3289 = vadd.f32 %v3281, %v3265
      %v3290 = vrcp.pop %v3282
      %v3291 = vrcp.pop %v3283
      %v3292 = vrcp.pop %v3284
      %v3293 = vrcp.pop %v3285
      %v3294 = vrcp.pop %v3286
      %v3295 = vrcp.pop %v3287
      %v3296 = vrcp.pop %v3288
      %v3297 = vrcp.pop %v3289
      %v3298 = vmul.f32 %v3179, %v3290
      %v3299 = vmul.f32 %v3181, %v3291
      %v3300 = vmul.f32 %v3183, %v3292
      %v3301 = vmul.f32 %v3185, %v3293
      %v3302 = vmul.f32 %v3187, %v3294
      %v3303 = vmul.f32 %v3189, %v3295
      %v3304 = vmul.f32 %v3191, %v3296
      %v3305 = vmul.f32 %v3193, %v3297
      %v3306 = vmul.f32 %v3298, %v812
      %v3307 = vmul.f32 %v3299, %v815
      %v3308 = vmul.f32 %v3300, %v818
      %v3309 = vmul.f32 %v3301, %v821
      %v3310 = vmul.f32 %v3302, %v824
      %v3311 = vmul.f32 %v3303, %v827
      %v3312 = vmul.f32 %v3304, %v830
      %v3313 = vmul.f32 %v3305, %v833
      %v3314 = vmul.f32 %v3203, %v3290
      %v3315 = vmul.f32 %v3205, %v3291
      %v3316 = vmul.f32 %v3207, %v3292
      %v3317 = vmul.f32 %v3209, %v3293
      %v3318 = vmul.f32 %v3211, %v3294
      %v3319 = vmul.f32 %v3213, %v3295
      %v3320 = vmul.f32 %v3215, %v3296
      %v3321 = vmul.f32 %v3217, %v3297
      %v3322 = vmul.f32 %v3314, %v836
      %v3323 = vmul.f32 %v3315, %v839
      %v3324 = vmul.f32 %v3316, %v842
      %v3325 = vmul.f32 %v3317, %v845
      %v3326 = vmul.f32 %v3318, %v848
      %v3327 = vmul.f32 %v3319, %v851
      %v3328 = vmul.f32 %v3320, %v854
      %v3329 = vmul.f32 %v3321, %v857
      %v3330 = vadd.f32 %v3306, %v3322
      %v3331 = vadd.f32 %v3307, %v3323
      %v3332 = vadd.f32 %v3308, %v3324
      %v3333 = vadd.f32 %v3309, %v3325
      %v3334 = vadd.f32 %v3310, %v3326
      %v3335 = vadd.f32 %v3311, %v3327
      %v3336 = vadd.f32 %v3312, %v3328
      %v3337 = vadd.f32 %v3313, %v3329
      %v3338 = vmul.f32 %v3227, %v3290
      %v3339 = vmul.f32 %v3229, %v3291
      %v3340 = vmul.f32 %v3231, %v3292
      %v3341 = vmul.f32 %v3233, %v3293
      %v3342 = vmul.f32 %v3235, %v3294
      %v3343 = vmul.f32 %v3237, %v3295
      %v3344 = vmul.f32 %v3239, %v3296
      %v3345 = vmul.f32 %v3241, %v3297
      %v3346 = vmul.f32 %v3338, %v860
      %v3347 = vmul.f32 %v3339, %v863
      %v3348 = vmul.f32 %v3340, %v866
      %v3349 = vmul.f32 %v3341, %v869
      %v3350 = vmul.f32 %v3342, %v872
      %v3351 = vmul.f32 %v3343, %v875
      %v3352 = vmul.f32 %v3344, %v878
      %v3353 = vmul.f32 %v3345, %v881
      %v3354 = vadd.f32 %v3330, %v3346
      %v3355 = vadd.f32 %v3331, %v3347
      %v3356 = vadd.f32 %v3332, %v3348
      %v3357 = vadd.f32 %v3333, %v3349
      %v3358 = vadd.f32 %v3334, %v3350
      %v3359 = vadd.f32 %v3335, %v3351
      %v3360 = vadd.f32 %v3336, %v3352
      %v3361 = vadd.f32 %v3337, %v3353
      %v3362 = vmul.f32 %v3251, %v3290
      %v3363 = vmul.f32 %v3253, %v3291
      %v3364 = vmul.f32 %v3255, %v3292
      %v3365 = vmul.f32 %v3257, %v3293
      %v3366 = vmul.f32 %v3259, %v3294
      %v3367 = vmul.f32 %v3261, %v3295
      %v3368 = vmul.f32 %v3263, %v3296
      %v3369 = vmul.f32 %v3265, %v3297
      %v3370 = vmul.f32 %v3362, %v884
      %v3371 = vmul.f32 %v3363, %v887
      %v3372 = vmul.f32 %v3364, %v890
      %v3373 = vmul.f32 %v3365, %v893
      %v3374 = vmul.f32 %v3366, %v896
      %v3375 = vmul.f32 %v3367, %v899
      %v3376 = vmul.f32 %v3368, %v902
      %v3377 = vmul.f32 %v3369, %v905
      %v3378 = vadd.f32 %v3354, %v3370
      %v3379 = vadd.f32 %v3355, %v3371
      %v3380 = vadd.f32 %v3356, %v3372
      %v3381 = vadd.f32 %v3357, %v3373
      %v3382 = vadd.f32 %v3358, %v3374
      %v3383 = vadd.f32 %v3359, %v3375
      %v3384 = vadd.f32 %v3360, %v3376
      %v3385 = vadd.f32 %v3361, %v3377
      %v3387 = vsel %vm335, %v3378, 0
      %v3390 = vsel %vm335, %v3379, 0
      %v3393 = vsel %vm335, %v3380, 0
      %v3396 = vsel %vm335, %v3381, 0
      %v3399 = vsel %vm335, %v3382, 0
      %v3402 = vsel %vm335, %v3383, 0
      %v3405 = vsel %vm335, %v3384, 0
      %v3408 = vsel %vm335, %v3385, 0
      %3410 = vmatpush.msra.mxu0 0.0
      %3411 = vmatpush.msra.mxu0 0.0
      %3412 = vmatpush.msra.mxu0 0.0
      %3413 = vmatpush.msra.mxu0 0.0
      %3414 = vmatpush.msra.mxu0 0.0
      %3415 = vmatpush.msra.mxu0 0.0
      %3416 = vmatpush.msra.mxu0 0.0
      %3417 = vmatpush.msra.mxu0 0.0
      %3418 = vmatpush.msra.mxu0 0.0
      %3419 = vmatpush.msra.mxu0 0.0
      %3420 = vmatpush.msra.mxu0 0.0
      %3421 = vmatpush.msra.mxu0 0.0
      %3422 = vmatpush.msra.mxu0 %v926
      %3423 = vmatpush.msra.mxu0 %v925
      %3424 = vmatpush.msra.mxu0 %v924
      %3425 = vmatpush.msra.mxu0 %v923
      %3426 = vmatmul.f32.gmra.mxu0 %v3387
      %v3427 = vpop.f32.mrf.mxu0
      %v3428 = vadd.f32 0.0, %v3427
      %3429 = vmatmul.f32.gmra.mxu0 %v3390
      %v3430 = vpop.f32.mrf.mxu0
      %v3431 = vadd.f32 0.0, %v3430
      %3432 = vmatmul.f32.gmra.mxu0 %v3393
      %v3433 = vpop.f32.mrf.mxu0
      %v3434 = vadd.f32 0.0, %v3433
      %3435 = vmatmul.f32.gmra.mxu0 %v3396
      %v3436 = vpop.f32.mrf.mxu0
      %v3437 = vadd.f32 0.0, %v3436
      %3438 = vmatmul.f32.gmra.mxu0 %v3399
      %v3439 = vpop.f32.mrf.mxu0
      %v3440 = vadd.f32 0.0, %v3439
      %3441 = vmatmul.f32.gmra.mxu0 %v3402
      %v3442 = vpop.f32.mrf.mxu0
      %v3443 = vadd.f32 0.0, %v3442
      %3444 = vmatmul.f32.gmra.mxu0 %v3405
      %v3445 = vpop.f32.mrf.mxu0
      %v3446 = vadd.f32 0.0, %v3445
      %3447 = vmatmul.f32.gmra.mxu0 %v3408
      %v3448 = vpop.f32.mrf.mxu0
      %v3449 = vadd.f32 0.0, %v3448
      %3450 = vdwg.mxu0
      %v3451 = vadd.f32 %v2814, %v3428
      %v3452 = vadd.f32 %v2815, %v3431
      %v3453 = vadd.f32 %v2816, %v3434
      %v3454 = vadd.f32 %v2817, %v3437
      %v3455 = vadd.f32 %v2818, %v3440
      %v3456 = vadd.f32 %v2819, %v3443
      %v3457 = vadd.f32 %v2820, %v3446
      %v3458 = vadd.f32 %v2821, %v3449
      %3459 = vst [vmem:[%s298] sm:$0xff] %v3451
      %3460 = vst [vmem:[%s298 + $0x8] sm:$0xff] %v3452
      %3461 = vst [vmem:[%s298 + $0x10] sm:$0xff] %v3453
      %3462 = vst [vmem:[%s298 + $0x18] sm:$0xff] %v3454
      %3463 = vst [vmem:[%s298 + $0x20] sm:$0xff] %v3455
      %3464 = vst [vmem:[%s298 + $0x28] sm:$0xff] %v3456
      %3465 = vst [vmem:[%s298 + $0x30] sm:$0xff] %v3457
      %3466 = vst [vmem:[%s298 + $0x38] sm:$0xff] %v3458
      %p3467 = scmp.lt.s32.totalorder %s18, 1
      %s3468 = scalar_select %p3467, %s18, 1
      %s3469 = smul.addr %s3468, 8
      %s3470 = smul.addr %s3469, 8
      %s3471 = scalar_lea.vmem %s7, %s3470
      // Predicated region
      $region49: #{window_attention_cross.1} parent=47 // pred_check
        %p3472 = pneg %p193
      $region50: #{window_attention_cross.1} parent=47 // pred_check_branch
        %3474 = sbr.rel (%p3472) target = $region52
      $region51: #{window_attention_cross.1} parent=47 // pred_region
        _
      $region52: #{window_attention_cross.1} parent=47 // pred_fallthru
        _
    $region48: #{window_attention_cross.1} parent=5 // pred_fallthru
      _
    %p3475 = scmp.le.s32.totalorder 2, %s13
    // Predicated region
    $region53: #{window_attention_cross.1} parent=5 // pred_check
      %p3476 = pneg %p3475
    $region54: #{window_attention_cross.1} parent=5 // pred_check_branch
      %3478 = sbr.rel (%p3476) target = $region56
    $region55: #{window_attention_cross.1} parent=5 // pred_region
      %s3479 = ssub.s32 %s13, 2
      // Predicated region
      $region57: #{window_attention_cross.1} parent=55 // pred_check
        %p3480 = pneg %p199
      $region58: #{window_attention_cross.1} parent=55 // pred_check_branch
        %3482 = sbr.rel (%p3480) target = $region60
      $region59: #{window_attention_cross.1} parent=55 // pred_region
        %p3483 = scmp.lt.s32.totalorder %s19, 1
        %s3484 = scalar_select %p3483, %s19, 1
        %s3485 = smul.addr %s3484, 8
        %s3486 = smul.addr %s3485, 8
        %s3487 = scalar_lea.vmem %s7, %s3486
      $region60: #{window_attention_cross.1} parent=55 // pred_fallthru
        _
    $region56: #{window_attention_cross.1} parent=5 // pred_fallthru
      _
  $region6: #{window_attention_cross.1} parent=0 // loop_footer
    %s17 = sadd.s32 1, %s13
  $region7: #{window_attention_cross.1} parent=0 // loop_footer_branch
    %12 = sbr.rel target = $region3
  $region8: #{window_attention_cross.1} parent=0 // loop_exit
    _

</llo_original>
